<compile_context>
chip_gen: v6e
topology: v6e:2x2x1
jax: 0.10.0
libtpu: 0.0.40
codegen_flags: <defaults>
</compile_context>

<pallas_src>
import functools

import jax
import jax.numpy as jnp
from jax import lax
from jax.experimental import pallas as pl
from jax.experimental.pallas import tpu as pltpu


_VMEM = pl.BlockSpec(memory_space=pltpu.MemorySpace.VMEM)


# ----------------------------------------------------------------------------
# Fused kernel
# ----------------------------------------------------------------------------
def _bilstm_layer(xp, whh_blk, hseq_ref, *, T, B_pad, H):
    """One bidirectional LSTM layer; writes (T*B_pad, 2H) hidden seq to hseq_ref.

    xp:      (T*B_pad, 8H) precomputed input projection + bias.
             Column layout: [i_f f_f g_f o_f | i_b f_b g_b o_b] (PyTorch gate
             order per direction); g columns pre-scaled by 2.
    whh_blk: (2H, 8H) block-diagonal recurrent weight (same column layout).
    """
    H4 = 4 * H
    h_both = jnp.zeros((B_pad, 2 * H), jnp.float32)
    c_f = jnp.zeros((B_pad, H), jnp.float32)
    c_b = jnp.zeros((B_pad, H), jnp.float32)
    for s in range(T):                      # static trip count -> fully unrolled
        r = T - 1 - s
        xf = xp[s * B_pad:(s + 1) * B_pad, 0:H4]        # fwd consumes time s
        xb = xp[r * B_pad:(r + 1) * B_pad, H4:2 * H4]   # bwd consumes time T-1-s
        gates = (jnp.concatenate([xf, xb], axis=-1)
                 + jnp.dot(h_both, whh_blk, preferred_element_type=jnp.float32))
        sg = jax.nn.sigmoid(gates)                      # one full-width EUP pass
        i_f, f_f = sg[:, 0 * H:1 * H], sg[:, 1 * H:2 * H]
        g_f, o_f = 2.0 * sg[:, 2 * H:3 * H] - 1.0, sg[:, 3 * H:4 * H]
        i_b, f_b = sg[:, 4 * H:5 * H], sg[:, 5 * H:6 * H]
        g_b, o_b = 2.0 * sg[:, 6 * H:7 * H] - 1.0, sg[:, 7 * H:8 * H]
        c_f = f_f * c_f + i_f * g_f
        c_b = f_b * c_b + i_b * g_b
        h_f = o_f * jnp.tanh(c_f)
        h_b = o_b * jnp.tanh(c_b)
        hseq_ref[s * B_pad:(s + 1) * B_pad, 0:H] = h_f          # fwd @ time s
        hseq_ref[r * B_pad:(r + 1) * B_pad, H:2 * H] = h_b      # bwd @ time T-1-s
        h_both = jnp.concatenate([h_f, h_b], axis=-1)


def _fused_forward_kernel(x_ref, wih1_ref, whh1_ref, b1_ref,
                          wih2_ref, whh2_ref, b2_ref,
                          w1_ref, fb1_ref, w2_ref, fb2_ref, w3_ref, fb3_ref,
                          out_ref, hseq1_ref, hseq2_ref, *, T, B_pad, H):
    # ---- LSTM layer 1: hoisted input projection, then recurrent loop --------
    xp1 = (jnp.dot(x_ref[...], wih1_ref[...], preferred_element_type=jnp.float32)
           + b1_ref[...])
    _bilstm_layer(xp1, whh1_ref[...], hseq1_ref, T=T, B_pad=B_pad, H=H)

    # ---- LSTM layer 2: consumes layer-1 hidden sequence straight from VMEM --
    xp2 = (jnp.dot(hseq1_ref[...], wih2_ref[...],
                   preferred_element_type=jnp.float32) + b2_ref[...])
    _bilstm_layer(xp2, whh2_ref[...], hseq2_ref, T=T, B_pad=B_pad, H=H)

    # ---- MLP head: fc1 accumulated per timestep (no transpose/reshape) ------
    acc1 = fb1_ref[...]                                   # (1, H), broadcasts
    for t in range(T):
        acc1 = acc1 + jnp.dot(hseq2_ref[t * B_pad:(t + 1) * B_pad, :],
                              w1_ref[t], preferred_element_type=jnp.float32)
    h1 = jnp.maximum(acc1, 0.0)
    h2 = jnp.maximum(
        jnp.dot(h1, w2_ref[...], preferred_element_type=jnp.float32) + fb2_ref[...],
        0.0)
    out_ref[...] = (jnp.dot(h2, w3_ref[...], preferred_element_type=jnp.float32)
                    + fb3_ref[...])


# ----------------------------------------------------------------------------
# Parameters (PyTorch-equivalent raw init) and kernel-side packing
# ----------------------------------------------------------------------------
def init_params(key, n_classes, hidden, sample_length):
    """PyTorch-equivalent random init in PyTorch layouts."""
    H = hidden
    hidden2 = H // 2      # == int(np.round(H) / 2) for positive integer H
    klstm = 1.0 / (H ** 0.5)
    lstm_layers = []
    d_in = 3
    for _layer in range(2):
        dirs = []
        for _d in range(2):                 # forward, backward
            key, k1, k2, k3, k4 = jax.random.split(key, 5)
            w_ih = jax.random.uniform(k1, (4 * H, d_in), jnp.float32, -klstm, klstm)
            w_hh = jax.random.uniform(k2, (4 * H, H), jnp.float32, -klstm, klstm)
            b_ih = jax.random.uniform(k3, (4 * H,), jnp.float32, -klstm, klstm)
            b_hh = jax.random.uniform(k4, (4 * H,), jnp.float32, -klstm, klstm)
            dirs.append((w_ih, w_hh, b_ih, b_hh))
        lstm_layers.append(tuple(dirs))
        d_in = 2 * H

    def linear(k, fan_in, fan_out):
        kk = 1.0 / (fan_in ** 0.5)
        k1, k2 = jax.random.split(k)
        w = jax.random.uniform(k1, (fan_out, fan_in), jnp.float32, -kk, kk)
        b = jax.random.uniform(k2, (fan_out,), jnp.float32, -kk, kk)
        return w, b

    key, kf1, kf2, kf3 = jax.random.split(key, 4)
    return {"lstm": lstm_layers,
            "fc1": linear(kf1, 2 * H * sample_length, H),
            "fc2": linear(kf2, H, hidden2),
            "fc3": linear(kf3, hidden2, n_classes)}


def _scale_g(w, H):
    """Scale the g-gate block (positions 2H:3H on the trailing 4H axis) by 2,
    so the kernel can use tanh(x) = 2*sigmoid(2x) - 1 with one wide sigmoid."""
    return w.at[..., 2 * H:3 * H].multiply(2.0)


def pack_params(params, hidden, sample_length):
    """Transpose / fuse weights into the layouts the fused kernel expects."""
    H, T = hidden, sample_length
    packed_lstm = []
    for (wih_f, whh_f, bih_f, bhh_f), (wih_b, whh_b, bih_b, bhh_b) in params["lstm"]:
        wih_blk = jnp.concatenate(
            [_scale_g(wih_f.T, H), _scale_g(wih_b.T, H)], axis=1)        # (Din, 8H)
        whh_blk = jnp.zeros((2 * H, 8 * H), jnp.float32)                 # block diag
        whh_blk = whh_blk.at[0:H, 0:4 * H].set(_scale_g(whh_f.T, H))
        whh_blk = whh_blk.at[H:2 * H, 4 * H:8 * H].set(_scale_g(whh_b.T, H))
        b_blk = jnp.concatenate([_scale_g(bih_f + bhh_f, H),
                                 _scale_g(bih_b + bhh_b, H)]).reshape(1, 8 * H)
        packed_lstm.append((wih_blk, whh_blk, b_blk))

    w1, fb1 = params["fc1"]
    w2, fb2 = params["fc2"]
    w3, fb3 = params["fc3"]
    return {"lstm": packed_lstm,
            "fc1": (w1.T.reshape(T, 2 * H, w1.shape[0]), fb1.reshape(1, -1)),
            "fc2": (w2.T, fb2.reshape(1, -1)),
            "fc3": (w3.T, fb3.reshape(1, -1))}


# ----------------------------------------------------------------------------
# Forward
# ----------------------------------------------------------------------------
def introspective_lstm_forward(x, packed):
    """x: (B, T, 3) batch_first, like the PyTorch module. Returns (B, n_classes)."""
    B, T, D_in = x.shape
    (wih1, whh1, b1), (wih2, whh2, b2) = packed["lstm"]
    w1_r, fb1 = packed["fc1"]
    w2, fb2 = packed["fc2"]
    w3, fb3 = packed["fc3"]
    H = whh1.shape[0] // 2
    C = w3.shape[1]
    B_pad = max(8, -(-B // 8) * 8)          # pad batch to the 8-sublane tile

    # Time-major, batch padded, flattened to (T*B_pad, D_in) for the kernel.
    x_tm = jnp.transpose(x, (1, 0, 2)).astype(jnp.float32)
    x_tm = jnp.pad(x_tm, ((0, 0), (0, B_pad - B), (0, 0)))
    x2d = x_tm.reshape(T * B_pad, D_in)

    kernel = functools.partial(_fused_forward_kernel, T=T, B_pad=B_pad, H=H)
    out_pad = pl.pallas_call(
        kernel,
        out_shape=jax.ShapeDtypeStruct((B_pad, C), jnp.float32),
        in_specs=[_VMEM] * 13,
        out_specs=_VMEM,
        scratch_shapes=[
            pltpu.VMEM((T * B_pad, 2 * H), jnp.float32),   # layer-1 hidden seq
            pltpu.VMEM((T * B_pad, 2 * H), jnp.float32),   # layer-2 hidden seq
        ],
    )(x2d, wih1, whh1, b1, wih2, whh2, b2, w1_r, fb1, w2, fb2, w3, fb3)
    # dropout (p=0.3) -> identity in eval mode
    return out_pad[:B]


# ----------------------------------------------------------------------------
# Pure-JAX reference (mirrors the PyTorch module) for a correctness check
# ----------------------------------------------------------------------------
def _reference_forward(x, params):
    B, T, _ = x.shape
    H = params["lstm"][0][0][1].shape[1]
    layer_in = jnp.transpose(x, (1, 0, 2)).astype(jnp.float32)   # (T, B, 3)

    def run_dir(seq, wih, whh, bih, bhh):
        def step(carry, x_t):
            h, c = carry
            g = x_t @ wih.T + h @ whh.T + bih + bhh
            i = jax.nn.sigmoid(g[:, 0 * H:1 * H])
            f = jax.nn.sigmoid(g[:, 1 * H:2 * H])
            gg = jnp.tanh(g[:, 2 * H:3 * H])
            o = jax.nn.sigmoid(g[:, 3 * H:4 * H])
            c = f * c + i * gg
            h = o * jnp.tanh(c)
            return (h, c), h
        init = (jnp.zeros((B, H), jnp.float32), jnp.zeros((B, H), jnp.float32))
        _, hs = lax.scan(step, init, seq)
        return hs

    for (wih_f, whh_f, bih_f, bhh_f), (wih_b, whh_b, bih_b, bhh_b) in params["lstm"]:
        h_f = run_dir(layer_in, wih_f, whh_f, bih_f, bhh_f)
        h_b = run_dir(layer_in[::-1], wih_b, whh_b, bih_b, bhh_b)[::-1]
        layer_in = jnp.concatenate([h_f, h_b], axis=-1)
    enc = jnp.transpose(layer_in, (1, 0, 2)).reshape(B, -1)
    w1, b1 = params["fc1"]
    w2, b2 = params["fc2"]
    w3, b3 = params["fc3"]
    out = jnp.maximum(enc @ w1.T + b1, 0.0)
    out = jnp.maximum(out @ w2.T + b2, 0.0)
    return out @ w3.T + b3


# ----------------------------------------------------------------------------
if __name__ == "__main__":
    n_classes = 2
    hidden = 32          # self.hidden_size
    sample_length = 8    # self.sample_length (sequence length T)
    batch = 2

    key = jax.random.PRNGKey(0)
    key, pkey, xkey = jax.random.split(key, 3)

    params = init_params(pkey, n_classes, hidden, sample_length)
    packed = pack_params(params, hidden, sample_length)
    x = jax.random.normal(xkey, (batch, sample_length, 3), dtype=jnp.float32)

    fwd = jax.jit(introspective_lstm_forward)
    out = fwd(x, packed)
    jax.block_until_ready(out)

    assert out.shape == (batch, n_classes), out.shape
    assert bool(jnp.all(jnp.isfinite(out)))

    ref = _reference_forward(x, params)
    assert jnp.allclose(out, ref, rtol=2e-2, atol=2e-2), (out, ref)

    print("KERNEL_OK")
</pallas_src>

<mosaic_0001>
module attributes {stable_mosaic.version = 11 : i64} {
  func.func @_fused_forward_kernel(%arg0: memref<64x3xf32, #tpu.memory_space<vmem>>, %arg1: memref<3x256xf32, #tpu.memory_space<vmem>>, %arg2: memref<64x256xf32, #tpu.memory_space<vmem>>, %arg3: memref<1x256xf32, #tpu.memory_space<vmem>>, %arg4: memref<64x256xf32, #tpu.memory_space<vmem>>, %arg5: memref<64x256xf32, #tpu.memory_space<vmem>>, %arg6: memref<1x256xf32, #tpu.memory_space<vmem>>, %arg7: memref<8x64x32xf32, #tpu.memory_space<vmem>>, %arg8: memref<1x32xf32, #tpu.memory_space<vmem>>, %arg9: memref<32x16xf32, #tpu.memory_space<vmem>>, %arg10: memref<1x16xf32, #tpu.memory_space<vmem>>, %arg11: memref<16x2xf32, #tpu.memory_space<vmem>>, %arg12: memref<1x2xf32, #tpu.memory_space<vmem>>, %arg13: memref<8x2xf32, #tpu.memory_space<vmem>>, %arg14: memref<64x64xf32, #tpu.memory_space<vmem>>, %arg15: memref<64x64xf32, #tpu.memory_space<vmem>>) attributes {dimension_semantics = [], scalar_prefetch = 0 : i64, scratch_operands = 2 : i64, tpu.core_type = #tpu.core_type<tc>} {
    %c0 = arith.constant 0 : index
    %c0_0 = arith.constant 0 : index
    %0 = vector.load %arg0[%c0, %c0_0] : memref<64x3xf32, #tpu.memory_space<vmem>>, vector<64x3xf32>
    %c0_1 = arith.constant 0 : index
    %c0_2 = arith.constant 0 : index
    %1 = vector.load %arg1[%c0_1, %c0_2] : memref<3x256xf32, #tpu.memory_space<vmem>>, vector<3x256xf32>
    %cst = arith.constant dense<0.000000e+00> : vector<64x256xf32>
    %2 = tpu.matmul %0, %1, %cst {dimension_numbers = #tpu.dot_dimension_numbers<[1], [0], [0], [1], [0, 0, 1, 1], [], []>} : vector<64x3xf32>, vector<3x256xf32>, vector<64x256xf32> -> vector<64x256xf32>
    %c0_3 = arith.constant 0 : index
    %c0_4 = arith.constant 0 : index
    %3 = vector.load %arg3[%c0_3, %c0_4] : memref<1x256xf32, #tpu.memory_space<vmem>>, vector<1x256xf32>
    %4 = vector.broadcast %3 : vector<1x256xf32> to vector<64x256xf32>
    %5 = arith.addf %2, %4 : vector<64x256xf32>
    %c0_5 = arith.constant 0 : index
    %c0_6 = arith.constant 0 : index
    %6 = vector.load %arg2[%c0_5, %c0_6] : memref<64x256xf32, #tpu.memory_space<vmem>>, vector<64x256xf32>
    %cst_7 = arith.constant 0.000000e+00 : f32
    %7 = vector.broadcast %cst_7 : f32 to vector<8x64xf32>
    %cst_8 = arith.constant 0.000000e+00 : f32
    %8 = vector.broadcast %cst_8 : f32 to vector<8x32xf32>
    %cst_9 = arith.constant 0.000000e+00 : f32
    %9 = vector.broadcast %cst_9 : f32 to vector<8x32xf32>
    %10 = vector.extract_strided_slice %5 {offsets = [0, 0], sizes = [8, 128], strides = [1, 1]} : vector<64x256xf32> to vector<8x128xf32>
    %11 = vector.extract_strided_slice %5 {offsets = [56, 128], sizes = [8, 128], strides = [1, 1]} : vector<64x256xf32> to vector<8x128xf32>
    %12 = tpu.concatenate %10, %11 in 1 : vector<8x128xf32>, vector<8x128xf32> -> vector<8x256xf32>
    %cst_10 = arith.constant dense<0.000000e+00> : vector<8x256xf32>
    %13 = tpu.matmul %7, %6, %cst_10 {dimension_numbers = #tpu.dot_dimension_numbers<[1], [0], [0], [1], [0, 0, 1, 1], [], []>} : vector<8x64xf32>, vector<64x256xf32>, vector<8x256xf32> -> vector<8x256xf32>
    %14 = arith.addf %12, %13 : vector<8x256xf32>
    %15 = arith.negf %14 : vector<8x256xf32>
    %16 = math.exp %15 : vector<8x256xf32>
    %cst_11 = arith.constant 1.000000e+00 : f32
    %17 = vector.broadcast %cst_11 : f32 to vector<8x256xf32>
    %18 = arith.addf %17, %16 : vector<8x256xf32>
    %19 = arith.divf %17, %18 : vector<8x256xf32>
    %20 = vector.extract_strided_slice %19 {offsets = [0, 0], sizes = [8, 32], strides = [1, 1]} : vector<8x256xf32> to vector<8x32xf32>
    %21 = vector.extract_strided_slice %19 {offsets = [0, 32], sizes = [8, 32], strides = [1, 1]} : vector<8x256xf32> to vector<8x32xf32>
    %22 = vector.extract_strided_slice %19 {offsets = [0, 64], sizes = [8, 32], strides = [1, 1]} : vector<8x256xf32> to vector<8x32xf32>
    %cst_12 = arith.constant 2.000000e+00 : f32
    %23 = vector.broadcast %cst_12 : f32 to vector<8x32xf32>
    %24 = arith.mulf %23, %22 : vector<8x32xf32>
    %cst_13 = arith.constant 1.000000e+00 : f32
    %25 = vector.broadcast %cst_13 : f32 to vector<8x32xf32>
    %26 = arith.subf %24, %25 : vector<8x32xf32>
    %27 = vector.extract_strided_slice %19 {offsets = [0, 96], sizes = [8, 32], strides = [1, 1]} : vector<8x256xf32> to vector<8x32xf32>
    %28 = vector.extract_strided_slice %19 {offsets = [0, 128], sizes = [8, 32], strides = [1, 1]} : vector<8x256xf32> to vector<8x32xf32>
    %29 = vector.extract_strided_slice %19 {offsets = [0, 160], sizes = [8, 32], strides = [1, 1]} : vector<8x256xf32> to vector<8x32xf32>
    %30 = vector.extract_strided_slice %19 {offsets = [0, 192], sizes = [8, 32], strides = [1, 1]} : vector<8x256xf32> to vector<8x32xf32>
    %cst_14 = arith.constant 2.000000e+00 : f32
    %31 = vector.broadcast %cst_14 : f32 to vector<8x32xf32>
    %32 = arith.mulf %31, %30 : vector<8x32xf32>
    %cst_15 = arith.constant 1.000000e+00 : f32
    %33 = vector.broadcast %cst_15 : f32 to vector<8x32xf32>
    %34 = arith.subf %32, %33 : vector<8x32xf32>
    %35 = vector.extract_strided_slice %19 {offsets = [0, 224], sizes = [8, 32], strides = [1, 1]} : vector<8x256xf32> to vector<8x32xf32>
    %36 = arith.mulf %21, %8 : vector<8x32xf32>
    %37 = arith.mulf %20, %26 : vector<8x32xf32>
    %38 = arith.addf %36, %37 : vector<8x32xf32>
    %39 = arith.mulf %29, %9 : vector<8x32xf32>
    %40 = arith.mulf %28, %34 : vector<8x32xf32>
    %41 = arith.addf %39, %40 : vector<8x32xf32>
    %42 = math.tanh %38 : vector<8x32xf32>
    %43 = arith.mulf %27, %42 : vector<8x32xf32>
    %44 = math.tanh %41 : vector<8x32xf32>
    %45 = arith.mulf %35, %44 : vector<8x32xf32>
    %c0_16 = arith.constant 0 : index
    %c0_17 = arith.constant 0 : index
    %46 = vector.load %arg14[%c0_16, %c0_17] : memref<64x64xf32, #tpu.memory_space<vmem>>, vector<8x32xf32>
    tpu.vector_store %arg14[%c0_16, %c0_17], %43 {strides = array<i32>} : memref<64x64xf32, #tpu.memory_space<vmem>>, vector<8x32xf32>,
    %c56 = arith.constant 56 : index
    %c32 = arith.constant 32 : index
    %47 = vector.load %arg14[%c56, %c32] : memref<64x64xf32, #tpu.memory_space<vmem>>, vector<8x32xf32>
    tpu.vector_store %arg14[%c56, %c32], %45 {strides = array<i32>} : memref<64x64xf32, #tpu.memory_space<vmem>>, vector<8x32xf32>,
    %48 = tpu.concatenate %43, %45 in 1 : vector<8x32xf32>, vector<8x32xf32> -> vector<8x64xf32>
    %49 = vector.extract_strided_slice %5 {offsets = [8, 0], sizes = [8, 128], strides = [1, 1]} : vector<64x256xf32> to vector<8x128xf32>
    %50 = vector.extract_strided_slice %5 {offsets = [48, 128], sizes = [8, 128], strides = [1, 1]} : vector<64x256xf32> to vector<8x128xf32>
    %51 = tpu.concatenate %49, %50 in 1 : vector<8x128xf32>, vector<8x128xf32> -> vector<8x256xf32>
    %cst_18 = arith.constant dense<0.000000e+00> : vector<8x256xf32>
    %52 = tpu.matmul %48, %6, %cst_18 {dimension_numbers = #tpu.dot_dimension_numbers<[1], [0], [0], [1], [0, 0, 1, 1], [], []>} : vector<8x64xf32>, vector<64x256xf32>, vector<8x256xf32> -> vector<8x256xf32>
    %53 = arith.addf %51, %52 : vector<8x256xf32>
    %54 = arith.negf %53 : vector<8x256xf32>
    %55 = math.exp %54 : vector<8x256xf32>
    %cst_19 = arith.constant 1.000000e+00 : f32
    %56 = vector.broadcast %cst_19 : f32 to vector<8x256xf32>
    %57 = arith.addf %56, %55 : vector<8x256xf32>
    %58 = arith.divf %56, %57 : vector<8x256xf32>
    %59 = vector.extract_strided_slice %58 {offsets = [0, 0], sizes = [8, 32], strides = [1, 1]} : vector<8x256xf32> to vector<8x32xf32>
    %60 = vector.extract_strided_slice %58 {offsets = [0, 32], sizes = [8, 32], strides = [1, 1]} : vector<8x256xf32> to vector<8x32xf32>
    %61 = vector.extract_strided_slice %58 {offsets = [0, 64], sizes = [8, 32], strides = [1, 1]} : vector<8x256xf32> to vector<8x32xf32>
    %cst_20 = arith.constant 2.000000e+00 : f32
    %62 = vector.broadcast %cst_20 : f32 to vector<8x32xf32>
    %63 = arith.mulf %62, %61 : vector<8x32xf32>
    %cst_21 = arith.constant 1.000000e+00 : f32
    %64 = vector.broadcast %cst_21 : f32 to vector<8x32xf32>
    %65 = arith.subf %63, %64 : vector<8x32xf32>
    %66 = vector.extract_strided_slice %58 {offsets = [0, 96], sizes = [8, 32], strides = [1, 1]} : vector<8x256xf32> to vector<8x32xf32>
    %67 = vector.extract_strided_slice %58 {offsets = [0, 128], sizes = [8, 32], strides = [1, 1]} : vector<8x256xf32> to vector<8x32xf32>
    %68 = vector.extract_strided_slice %58 {offsets = [0, 160], sizes = [8, 32], strides = [1, 1]} : vector<8x256xf32> to vector<8x32xf32>
    %69 = vector.extract_strided_slice %58 {offsets = [0, 192], sizes = [8, 32], strides = [1, 1]} : vector<8x256xf32> to vector<8x32xf32>
    %cst_22 = arith.constant 2.000000e+00 : f32
    %70 = vector.broadcast %cst_22 : f32 to vector<8x32xf32>
    %71 = arith.mulf %70, %69 : vector<8x32xf32>
    %cst_23 = arith.constant 1.000000e+00 : f32
    %72 = vector.broadcast %cst_23 : f32 to vector<8x32xf32>
    %73 = arith.subf %71, %72 : vector<8x32xf32>
    %74 = vector.extract_strided_slice %58 {offsets = [0, 224], sizes = [8, 32], strides = [1, 1]} : vector<8x256xf32> to vector<8x32xf32>
    %75 = arith.mulf %60, %38 : vector<8x32xf32>
    %76 = arith.mulf %59, %65 : vector<8x32xf32>
    %77 = arith.addf %75, %76 : vector<8x32xf32>
    %78 = arith.mulf %68, %41 : vector<8x32xf32>
    %79 = arith.mulf %67, %73 : vector<8x32xf32>
    %80 = arith.addf %78, %79 : vector<8x32xf32>
    %81 = math.tanh %77 : vector<8x32xf32>
    %82 = arith.mulf %66, %81 : vector<8x32xf32>
    %83 = math.tanh %80 : vector<8x32xf32>
    %84 = arith.mulf %74, %83 : vector<8x32xf32>
    %c8 = arith.constant 8 : index
    %c0_24 = arith.constant 0 : index
    %85 = vector.load %arg14[%c8, %c0_24] : memref<64x64xf32, #tpu.memory_space<vmem>>, vector<8x32xf32>
    tpu.vector_store %arg14[%c8, %c0_24], %82 {strides = array<i32>} : memref<64x64xf32, #tpu.memory_space<vmem>>, vector<8x32xf32>,
    %c48 = arith.constant 48 : index
    %c32_25 = arith.constant 32 : index
    %86 = vector.load %arg14[%c48, %c32_25] : memref<64x64xf32, #tpu.memory_space<vmem>>, vector<8x32xf32>
    tpu.vector_store %arg14[%c48, %c32_25], %84 {strides = array<i32>} : memref<64x64xf32, #tpu.memory_space<vmem>>, vector<8x32xf32>,
    %87 = tpu.concatenate %82, %84 in 1 : vector<8x32xf32>, vector<8x32xf32> -> vector<8x64xf32>
    %88 = vector.extract_strided_slice %5 {offsets = [16, 0], sizes = [8, 128], strides = [1, 1]} : vector<64x256xf32> to vector<8x128xf32>
    %89 = vector.extract_strided_slice %5 {offsets = [40, 128], sizes = [8, 128], strides = [1, 1]} : vector<64x256xf32> to vector<8x128xf32>
    %90 = tpu.concatenate %88, %89 in 1 : vector<8x128xf32>, vector<8x128xf32> -> vector<8x256xf32>
    %cst_26 = arith.constant dense<0.000000e+00> : vector<8x256xf32>
    %91 = tpu.matmul %87, %6, %cst_26 {dimension_numbers = #tpu.dot_dimension_numbers<[1], [0], [0], [1], [0, 0, 1, 1], [], []>} : vector<8x64xf32>, vector<64x256xf32>, vector<8x256xf32> -> vector<8x256xf32>
    %92 = arith.addf %90, %91 : vector<8x256xf32>
    %93 = arith.negf %92 : vector<8x256xf32>
    %94 = math.exp %93 : vector<8x256xf32>
    %cst_27 = arith.constant 1.000000e+00 : f32
    %95 = vector.broadcast %cst_27 : f32 to vector<8x256xf32>
    %96 = arith.addf %95, %94 : vector<8x256xf32>
    %97 = arith.divf %95, %96 : vector<8x256xf32>
    %98 = vector.extract_strided_slice %97 {offsets = [0, 0], sizes = [8, 32], strides = [1, 1]} : vector<8x256xf32> to vector<8x32xf32>
    %99 = vector.extract_strided_slice %97 {offsets = [0, 32], sizes = [8, 32], strides = [1, 1]} : vector<8x256xf32> to vector<8x32xf32>
    %100 = vector.extract_strided_slice %97 {offsets = [0, 64], sizes = [8, 32], strides = [1, 1]} : vector<8x256xf32> to vector<8x32xf32>
    %cst_28 = arith.constant 2.000000e+00 : f32
    %101 = vector.broadcast %cst_28 : f32 to vector<8x32xf32>
    %102 = arith.mulf %101, %100 : vector<8x32xf32>
    %cst_29 = arith.constant 1.000000e+00 : f32
    %103 = vector.broadcast %cst_29 : f32 to vector<8x32xf32>
    %104 = arith.subf %102, %103 : vector<8x32xf32>
    %105 = vector.extract_strided_slice %97 {offsets = [0, 96], sizes = [8, 32], strides = [1, 1]} : vector<8x256xf32> to vector<8x32xf32>
    %106 = vector.extract_strided_slice %97 {offsets = [0, 128], sizes = [8, 32], strides = [1, 1]} : vector<8x256xf32> to vector<8x32xf32>
    %107 = vector.extract_strided_slice %97 {offsets = [0, 160], sizes = [8, 32], strides = [1, 1]} : vector<8x256xf32> to vector<8x32xf32>
    %108 = vector.extract_strided_slice %97 {offsets = [0, 192], sizes = [8, 32], strides = [1, 1]} : vector<8x256xf32> to vector<8x32xf32>
    %cst_30 = arith.constant 2.000000e+00 : f32
    %109 = vector.broadcast %cst_30 : f32 to vector<8x32xf32>
    %110 = arith.mulf %109, %108 : vector<8x32xf32>
    %cst_31 = arith.constant 1.000000e+00 : f32
    %111 = vector.broadcast %cst_31 : f32 to vector<8x32xf32>
    %112 = arith.subf %110, %111 : vector<8x32xf32>
    %113 = vector.extract_strided_slice %97 {offsets = [0, 224], sizes = [8, 32], strides = [1, 1]} : vector<8x256xf32> to vector<8x32xf32>
    %114 = arith.mulf %99, %77 : vector<8x32xf32>
    %115 = arith.mulf %98, %104 : vector<8x32xf32>
    %116 = arith.addf %114, %115 : vector<8x32xf32>
    %117 = arith.mulf %107, %80 : vector<8x32xf32>
    %118 = arith.mulf %106, %112 : vector<8x32xf32>
    %119 = arith.addf %117, %118 : vector<8x32xf32>
    %120 = math.tanh %116 : vector<8x32xf32>
    %121 = arith.mulf %105, %120 : vector<8x32xf32>
    %122 = math.tanh %119 : vector<8x32xf32>
    %123 = arith.mulf %113, %122 : vector<8x32xf32>
    %c16 = arith.constant 16 : index
    %c0_32 = arith.constant 0 : index
    %124 = vector.load %arg14[%c16, %c0_32] : memref<64x64xf32, #tpu.memory_space<vmem>>, vector<8x32xf32>
    tpu.vector_store %arg14[%c16, %c0_32], %121 {strides = array<i32>} : memref<64x64xf32, #tpu.memory_space<vmem>>, vector<8x32xf32>,
    %c40 = arith.constant 40 : index
    %c32_33 = arith.constant 32 : index
    %125 = vector.load %arg14[%c40, %c32_33] : memref<64x64xf32, #tpu.memory_space<vmem>>, vector<8x32xf32>
    tpu.vector_store %arg14[%c40, %c32_33], %123 {strides = array<i32>} : memref<64x64xf32, #tpu.memory_space<vmem>>, vector<8x32xf32>,
    %126 = tpu.concatenate %121, %123 in 1 : vector<8x32xf32>, vector<8x32xf32> -> vector<8x64xf32>
    %127 = vector.extract_strided_slice %5 {offsets = [24, 0], sizes = [8, 128], strides = [1, 1]} : vector<64x256xf32> to vector<8x128xf32>
    %128 = vector.extract_strided_slice %5 {offsets = [32, 128], sizes = [8, 128], strides = [1, 1]} : vector<64x256xf32> to vector<8x128xf32>
    %129 = tpu.concatenate %127, %128 in 1 : vector<8x128xf32>, vector<8x128xf32> -> vector<8x256xf32>
    %cst_34 = arith.constant dense<0.000000e+00> : vector<8x256xf32>
    %130 = tpu.matmul %126, %6, %cst_34 {dimension_numbers = #tpu.dot_dimension_numbers<[1], [0], [0], [1], [0, 0, 1, 1], [], []>} : vector<8x64xf32>, vector<64x256xf32>, vector<8x256xf32> -> vector<8x256xf32>
    %131 = arith.addf %129, %130 : vector<8x256xf32>
    %132 = arith.negf %131 : vector<8x256xf32>
    %133 = math.exp %132 : vector<8x256xf32>
    %cst_35 = arith.constant 1.000000e+00 : f32
    %134 = vector.broadcast %cst_35 : f32 to vector<8x256xf32>
    %135 = arith.addf %134, %133 : vector<8x256xf32>
    %136 = arith.divf %134, %135 : vector<8x256xf32>
    %137 = vector.extract_strided_slice %136 {offsets = [0, 0], sizes = [8, 32], strides = [1, 1]} : vector<8x256xf32> to vector<8x32xf32>
    %138 = vector.extract_strided_slice %136 {offsets = [0, 32], sizes = [8, 32], strides = [1, 1]} : vector<8x256xf32> to vector<8x32xf32>
    %139 = vector.extract_strided_slice %136 {offsets = [0, 64], sizes = [8, 32], strides = [1, 1]} : vector<8x256xf32> to vector<8x32xf32>
    %cst_36 = arith.constant 2.000000e+00 : f32
    %140 = vector.broadcast %cst_36 : f32 to vector<8x32xf32>
    %141 = arith.mulf %140, %139 : vector<8x32xf32>
    %cst_37 = arith.constant 1.000000e+00 : f32
    %142 = vector.broadcast %cst_37 : f32 to vector<8x32xf32>
    %143 = arith.subf %141, %142 : vector<8x32xf32>
    %144 = vector.extract_strided_slice %136 {offsets = [0, 96], sizes = [8, 32], strides = [1, 1]} : vector<8x256xf32> to vector<8x32xf32>
    %145 = vector.extract_strided_slice %136 {offsets = [0, 128], sizes = [8, 32], strides = [1, 1]} : vector<8x256xf32> to vector<8x32xf32>
    %146 = vector.extract_strided_slice %136 {offsets = [0, 160], sizes = [8, 32], strides = [1, 1]} : vector<8x256xf32> to vector<8x32xf32>
    %147 = vector.extract_strided_slice %136 {offsets = [0, 192], sizes = [8, 32], strides = [1, 1]} : vector<8x256xf32> to vector<8x32xf32>
    %cst_38 = arith.constant 2.000000e+00 : f32
    %148 = vector.broadcast %cst_38 : f32 to vector<8x32xf32>
    %149 = arith.mulf %148, %147 : vector<8x32xf32>
    %cst_39 = arith.constant 1.000000e+00 : f32
    %150 = vector.broadcast %cst_39 : f32 to vector<8x32xf32>
    %151 = arith.subf %149, %150 : vector<8x32xf32>
    %152 = vector.extract_strided_slice %136 {offsets = [0, 224], sizes = [8, 32], strides = [1, 1]} : vector<8x256xf32> to vector<8x32xf32>
    %153 = arith.mulf %138, %116 : vector<8x32xf32>
    %154 = arith.mulf %137, %143 : vector<8x32xf32>
    %155 = arith.addf %153, %154 : vector<8x32xf32>
    %156 = arith.mulf %146, %119 : vector<8x32xf32>
    %157 = arith.mulf %145, %151 : vector<8x32xf32>
    %158 = arith.addf %156, %157 : vector<8x32xf32>
    %159 = math.tanh %155 : vector<8x32xf32>
    %160 = arith.mulf %144, %159 : vector<8x32xf32>
    %161 = math.tanh %158 : vector<8x32xf32>
    %162 = arith.mulf %152, %161 : vector<8x32xf32>
    %c24 = arith.constant 24 : index
    %c0_40 = arith.constant 0 : index
    %163 = vector.load %arg14[%c24, %c0_40] : memref<64x64xf32, #tpu.memory_space<vmem>>, vector<8x32xf32>
    tpu.vector_store %arg14[%c24, %c0_40], %160 {strides = array<i32>} : memref<64x64xf32, #tpu.memory_space<vmem>>, vector<8x32xf32>,
    %c32_41 = arith.constant 32 : index
    %c32_42 = arith.constant 32 : index
    %164 = vector.load %arg14[%c32_41, %c32_42] : memref<64x64xf32, #tpu.memory_space<vmem>>, vector<8x32xf32>
    tpu.vector_store %arg14[%c32_41, %c32_42], %162 {strides = array<i32>} : memref<64x64xf32, #tpu.memory_space<vmem>>, vector<8x32xf32>,
    %165 = tpu.concatenate %160, %162 in 1 : vector<8x32xf32>, vector<8x32xf32> -> vector<8x64xf32>
    %166 = vector.extract_strided_slice %5 {offsets = [32, 0], sizes = [8, 128], strides = [1, 1]} : vector<64x256xf32> to vector<8x128xf32>
    %167 = vector.extract_strided_slice %5 {offsets = [24, 128], sizes = [8, 128], strides = [1, 1]} : vector<64x256xf32> to vector<8x128xf32>
    %168 = tpu.concatenate %166, %167 in 1 : vector<8x128xf32>, vector<8x128xf32> -> vector<8x256xf32>
    %cst_43 = arith.constant dense<0.000000e+00> : vector<8x256xf32>
    %169 = tpu.matmul %165, %6, %cst_43 {dimension_numbers = #tpu.dot_dimension_numbers<[1], [0], [0], [1], [0, 0, 1, 1], [], []>} : vector<8x64xf32>, vector<64x256xf32>, vector<8x256xf32> -> vector<8x256xf32>
    %170 = arith.addf %168, %169 : vector<8x256xf32>
    %171 = arith.negf %170 : vector<8x256xf32>
    %172 = math.exp %171 : vector<8x256xf32>
    %cst_44 = arith.constant 1.000000e+00 : f32
    %173 = vector.broadcast %cst_44 : f32 to vector<8x256xf32>
    %174 = arith.addf %173, %172 : vector<8x256xf32>
    %175 = arith.divf %173, %174 : vector<8x256xf32>
    %176 = vector.extract_strided_slice %175 {offsets = [0, 0], sizes = [8, 32], strides = [1, 1]} : vector<8x256xf32> to vector<8x32xf32>
    %177 = vector.extract_strided_slice %175 {offsets = [0, 32], sizes = [8, 32], strides = [1, 1]} : vector<8x256xf32> to vector<8x32xf32>
    %178 = vector.extract_strided_slice %175 {offsets = [0, 64], sizes = [8, 32], strides = [1, 1]} : vector<8x256xf32> to vector<8x32xf32>
    %cst_45 = arith.constant 2.000000e+00 : f32
    %179 = vector.broadcast %cst_45 : f32 to vector<8x32xf32>
    %180 = arith.mulf %179, %178 : vector<8x32xf32>
    %cst_46 = arith.constant 1.000000e+00 : f32
    %181 = vector.broadcast %cst_46 : f32 to vector<8x32xf32>
    %182 = arith.subf %180, %181 : vector<8x32xf32>
    %183 = vector.extract_strided_slice %175 {offsets = [0, 96], sizes = [8, 32], strides = [1, 1]} : vector<8x256xf32> to vector<8x32xf32>
    %184 = vector.extract_strided_slice %175 {offsets = [0, 128], sizes = [8, 32], strides = [1, 1]} : vector<8x256xf32> to vector<8x32xf32>
    %185 = vector.extract_strided_slice %175 {offsets = [0, 160], sizes = [8, 32], strides = [1, 1]} : vector<8x256xf32> to vector<8x32xf32>
    %186 = vector.extract_strided_slice %175 {offsets = [0, 192], sizes = [8, 32], strides = [1, 1]} : vector<8x256xf32> to vector<8x32xf32>
    %cst_47 = arith.constant 2.000000e+00 : f32
    %187 = vector.broadcast %cst_47 : f32 to vector<8x32xf32>
    %188 = arith.mulf %187, %186 : vector<8x32xf32>
    %cst_48 = arith.constant 1.000000e+00 : f32
    %189 = vector.broadcast %cst_48 : f32 to vector<8x32xf32>
    %190 = arith.subf %188, %189 : vector<8x32xf32>
    %191 = vector.extract_strided_slice %175 {offsets = [0, 224], sizes = [8, 32], strides = [1, 1]} : vector<8x256xf32> to vector<8x32xf32>
    %192 = arith.mulf %177, %155 : vector<8x32xf32>
    %193 = arith.mulf %176, %182 : vector<8x32xf32>
    %194 = arith.addf %192, %193 : vector<8x32xf32>
    %195 = arith.mulf %185, %158 : vector<8x32xf32>
    %196 = arith.mulf %184, %190 : vector<8x32xf32>
    %197 = arith.addf %195, %196 : vector<8x32xf32>
    %198 = math.tanh %194 : vector<8x32xf32>
    %199 = arith.mulf %183, %198 : vector<8x32xf32>
    %200 = math.tanh %197 : vector<8x32xf32>
    %201 = arith.mulf %191, %200 : vector<8x32xf32>
    %c32_49 = arith.constant 32 : index
    %c0_50 = arith.constant 0 : index
    %202 = vector.load %arg14[%c32_49, %c0_50] : memref<64x64xf32, #tpu.memory_space<vmem>>, vector<8x32xf32>
    tpu.vector_store %arg14[%c32_49, %c0_50], %199 {strides = array<i32>} : memref<64x64xf32, #tpu.memory_space<vmem>>, vector<8x32xf32>,
    %c24_51 = arith.constant 24 : index
    %c32_52 = arith.constant 32 : index
    %203 = vector.load %arg14[%c24_51, %c32_52] : memref<64x64xf32, #tpu.memory_space<vmem>>, vector<8x32xf32>
    tpu.vector_store %arg14[%c24_51, %c32_52], %201 {strides = array<i32>} : memref<64x64xf32, #tpu.memory_space<vmem>>, vector<8x32xf32>,
    %204 = tpu.concatenate %199, %201 in 1 : vector<8x32xf32>, vector<8x32xf32> -> vector<8x64xf32>
    %205 = vector.extract_strided_slice %5 {offsets = [40, 0], sizes = [8, 128], strides = [1, 1]} : vector<64x256xf32> to vector<8x128xf32>
    %206 = vector.extract_strided_slice %5 {offsets = [16, 128], sizes = [8, 128], strides = [1, 1]} : vector<64x256xf32> to vector<8x128xf32>
    %207 = tpu.concatenate %205, %206 in 1 : vector<8x128xf32>, vector<8x128xf32> -> vector<8x256xf32>
    %cst_53 = arith.constant dense<0.000000e+00> : vector<8x256xf32>
    %208 = tpu.matmul %204, %6, %cst_53 {dimension_numbers = #tpu.dot_dimension_numbers<[1], [0], [0], [1], [0, 0, 1, 1], [], []>} : vector<8x64xf32>, vector<64x256xf32>, vector<8x256xf32> -> vector<8x256xf32>
    %209 = arith.addf %207, %208 : vector<8x256xf32>
    %210 = arith.negf %209 : vector<8x256xf32>
    %211 = math.exp %210 : vector<8x256xf32>
    %cst_54 = arith.constant 1.000000e+00 : f32
    %212 = vector.broadcast %cst_54 : f32 to vector<8x256xf32>
    %213 = arith.addf %212, %211 : vector<8x256xf32>
    %214 = arith.divf %212, %213 : vector<8x256xf32>
    %215 = vector.extract_strided_slice %214 {offsets = [0, 0], sizes = [8, 32], strides = [1, 1]} : vector<8x256xf32> to vector<8x32xf32>
    %216 = vector.extract_strided_slice %214 {offsets = [0, 32], sizes = [8, 32], strides = [1, 1]} : vector<8x256xf32> to vector<8x32xf32>
    %217 = vector.extract_strided_slice %214 {offsets = [0, 64], sizes = [8, 32], strides = [1, 1]} : vector<8x256xf32> to vector<8x32xf32>
    %cst_55 = arith.constant 2.000000e+00 : f32
    %218 = vector.broadcast %cst_55 : f32 to vector<8x32xf32>
    %219 = arith.mulf %218, %217 : vector<8x32xf32>
    %cst_56 = arith.constant 1.000000e+00 : f32
    %220 = vector.broadcast %cst_56 : f32 to vector<8x32xf32>
    %221 = arith.subf %219, %220 : vector<8x32xf32>
    %222 = vector.extract_strided_slice %214 {offsets = [0, 96], sizes = [8, 32], strides = [1, 1]} : vector<8x256xf32> to vector<8x32xf32>
    %223 = vector.extract_strided_slice %214 {offsets = [0, 128], sizes = [8, 32], strides = [1, 1]} : vector<8x256xf32> to vector<8x32xf32>
    %224 = vector.extract_strided_slice %214 {offsets = [0, 160], sizes = [8, 32], strides = [1, 1]} : vector<8x256xf32> to vector<8x32xf32>
    %225 = vector.extract_strided_slice %214 {offsets = [0, 192], sizes = [8, 32], strides = [1, 1]} : vector<8x256xf32> to vector<8x32xf32>
    %cst_57 = arith.constant 2.000000e+00 : f32
    %226 = vector.broadcast %cst_57 : f32 to vector<8x32xf32>
    %227 = arith.mulf %226, %225 : vector<8x32xf32>
    %cst_58 = arith.constant 1.000000e+00 : f32
    %228 = vector.broadcast %cst_58 : f32 to vector<8x32xf32>
    %229 = arith.subf %227, %228 : vector<8x32xf32>
    %230 = vector.extract_strided_slice %214 {offsets = [0, 224], sizes = [8, 32], strides = [1, 1]} : vector<8x256xf32> to vector<8x32xf32>
    %231 = arith.mulf %216, %194 : vector<8x32xf32>
    %232 = arith.mulf %215, %221 : vector<8x32xf32>
    %233 = arith.addf %231, %232 : vector<8x32xf32>
    %234 = arith.mulf %224, %197 : vector<8x32xf32>
    %235 = arith.mulf %223, %229 : vector<8x32xf32>
    %236 = arith.addf %234, %235 : vector<8x32xf32>
    %237 = math.tanh %233 : vector<8x32xf32>
    %238 = arith.mulf %222, %237 : vector<8x32xf32>
    %239 = math.tanh %236 : vector<8x32xf32>
    %240 = arith.mulf %230, %239 : vector<8x32xf32>
    %c40_59 = arith.constant 40 : index
    %c0_60 = arith.constant 0 : index
    %241 = vector.load %arg14[%c40_59, %c0_60] : memref<64x64xf32, #tpu.memory_space<vmem>>, vector<8x32xf32>
    tpu.vector_store %arg14[%c40_59, %c0_60], %238 {strides = array<i32>} : memref<64x64xf32, #tpu.memory_space<vmem>>, vector<8x32xf32>,
    %c16_61 = arith.constant 16 : index
    %c32_62 = arith.constant 32 : index
    %242 = vector.load %arg14[%c16_61, %c32_62] : memref<64x64xf32, #tpu.memory_space<vmem>>, vector<8x32xf32>
    tpu.vector_store %arg14[%c16_61, %c32_62], %240 {strides = array<i32>} : memref<64x64xf32, #tpu.memory_space<vmem>>, vector<8x32xf32>,
    %243 = tpu.concatenate %238, %240 in 1 : vector<8x32xf32>, vector<8x32xf32> -> vector<8x64xf32>
    %244 = vector.extract_strided_slice %5 {offsets = [48, 0], sizes = [8, 128], strides = [1, 1]} : vector<64x256xf32> to vector<8x128xf32>
    %245 = vector.extract_strided_slice %5 {offsets = [8, 128], sizes = [8, 128], strides = [1, 1]} : vector<64x256xf32> to vector<8x128xf32>
    %246 = tpu.concatenate %244, %245 in 1 : vector<8x128xf32>, vector<8x128xf32> -> vector<8x256xf32>
    %cst_63 = arith.constant dense<0.000000e+00> : vector<8x256xf32>
    %247 = tpu.matmul %243, %6, %cst_63 {dimension_numbers = #tpu.dot_dimension_numbers<[1], [0], [0], [1], [0, 0, 1, 1], [], []>} : vector<8x64xf32>, vector<64x256xf32>, vector<8x256xf32> -> vector<8x256xf32>
    %248 = arith.addf %246, %247 : vector<8x256xf32>
    %249 = arith.negf %248 : vector<8x256xf32>
    %250 = math.exp %249 : vector<8x256xf32>
    %cst_64 = arith.constant 1.000000e+00 : f32
    %251 = vector.broadcast %cst_64 : f32 to vector<8x256xf32>
    %252 = arith.addf %251, %250 : vector<8x256xf32>
    %253 = arith.divf %251, %252 : vector<8x256xf32>
    %254 = vector.extract_strided_slice %253 {offsets = [0, 0], sizes = [8, 32], strides = [1, 1]} : vector<8x256xf32> to vector<8x32xf32>
    %255 = vector.extract_strided_slice %253 {offsets = [0, 32], sizes = [8, 32], strides = [1, 1]} : vector<8x256xf32> to vector<8x32xf32>
    %256 = vector.extract_strided_slice %253 {offsets = [0, 64], sizes = [8, 32], strides = [1, 1]} : vector<8x256xf32> to vector<8x32xf32>
    %cst_65 = arith.constant 2.000000e+00 : f32
    %257 = vector.broadcast %cst_65 : f32 to vector<8x32xf32>
    %258 = arith.mulf %257, %256 : vector<8x32xf32>
    %cst_66 = arith.constant 1.000000e+00 : f32
    %259 = vector.broadcast %cst_66 : f32 to vector<8x32xf32>
    %260 = arith.subf %258, %259 : vector<8x32xf32>
    %261 = vector.extract_strided_slice %253 {offsets = [0, 96], sizes = [8, 32], strides = [1, 1]} : vector<8x256xf32> to vector<8x32xf32>
    %262 = vector.extract_strided_slice %253 {offsets = [0, 128], sizes = [8, 32], strides = [1, 1]} : vector<8x256xf32> to vector<8x32xf32>
    %263 = vector.extract_strided_slice %253 {offsets = [0, 160], sizes = [8, 32], strides = [1, 1]} : vector<8x256xf32> to vector<8x32xf32>
    %264 = vector.extract_strided_slice %253 {offsets = [0, 192], sizes = [8, 32], strides = [1, 1]} : vector<8x256xf32> to vector<8x32xf32>
    %cst_67 = arith.constant 2.000000e+00 : f32
    %265 = vector.broadcast %cst_67 : f32 to vector<8x32xf32>
    %266 = arith.mulf %265, %264 : vector<8x32xf32>
    %cst_68 = arith.constant 1.000000e+00 : f32
    %267 = vector.broadcast %cst_68 : f32 to vector<8x32xf32>
    %268 = arith.subf %266, %267 : vector<8x32xf32>
    %269 = vector.extract_strided_slice %253 {offsets = [0, 224], sizes = [8, 32], strides = [1, 1]} : vector<8x256xf32> to vector<8x32xf32>
    %270 = arith.mulf %255, %233 : vector<8x32xf32>
    %271 = arith.mulf %254, %260 : vector<8x32xf32>
    %272 = arith.addf %270, %271 : vector<8x32xf32>
    %273 = arith.mulf %263, %236 : vector<8x32xf32>
    %274 = arith.mulf %262, %268 : vector<8x32xf32>
    %275 = arith.addf %273, %274 : vector<8x32xf32>
    %276 = math.tanh %272 : vector<8x32xf32>
    %277 = arith.mulf %261, %276 : vector<8x32xf32>
    %278 = math.tanh %275 : vector<8x32xf32>
    %279 = arith.mulf %269, %278 : vector<8x32xf32>
    %c48_69 = arith.constant 48 : index
    %c0_70 = arith.constant 0 : index
    %280 = vector.load %arg14[%c48_69, %c0_70] : memref<64x64xf32, #tpu.memory_space<vmem>>, vector<8x32xf32>
    tpu.vector_store %arg14[%c48_69, %c0_70], %277 {strides = array<i32>} : memref<64x64xf32, #tpu.memory_space<vmem>>, vector<8x32xf32>,
    %c8_71 = arith.constant 8 : index
    %c32_72 = arith.constant 32 : index
    %281 = vector.load %arg14[%c8_71, %c32_72] : memref<64x64xf32, #tpu.memory_space<vmem>>, vector<8x32xf32>
    tpu.vector_store %arg14[%c8_71, %c32_72], %279 {strides = array<i32>} : memref<64x64xf32, #tpu.memory_space<vmem>>, vector<8x32xf32>,
    %282 = tpu.concatenate %277, %279 in 1 : vector<8x32xf32>, vector<8x32xf32> -> vector<8x64xf32>
    %283 = vector.extract_strided_slice %5 {offsets = [56, 0], sizes = [8, 128], strides = [1, 1]} : vector<64x256xf32> to vector<8x128xf32>
    %284 = vector.extract_strided_slice %5 {offsets = [0, 128], sizes = [8, 128], strides = [1, 1]} : vector<64x256xf32> to vector<8x128xf32>
    %285 = tpu.concatenate %283, %284 in 1 : vector<8x128xf32>, vector<8x128xf32> -> vector<8x256xf32>
    %cst_73 = arith.constant dense<0.000000e+00> : vector<8x256xf32>
    %286 = tpu.matmul %282, %6, %cst_73 {dimension_numbers = #tpu.dot_dimension_numbers<[1], [0], [0], [1], [0, 0, 1, 1], [], []>} : vector<8x64xf32>, vector<64x256xf32>, vector<8x256xf32> -> vector<8x256xf32>
    %287 = arith.addf %285, %286 : vector<8x256xf32>
    %288 = arith.negf %287 : vector<8x256xf32>
    %289 = math.exp %288 : vector<8x256xf32>
    %cst_74 = arith.constant 1.000000e+00 : f32
    %290 = vector.broadcast %cst_74 : f32 to vector<8x256xf32>
    %291 = arith.addf %290, %289 : vector<8x256xf32>
    %292 = arith.divf %290, %291 : vector<8x256xf32>
    %293 = vector.extract_strided_slice %292 {offsets = [0, 0], sizes = [8, 32], strides = [1, 1]} : vector<8x256xf32> to vector<8x32xf32>
    %294 = vector.extract_strided_slice %292 {offsets = [0, 32], sizes = [8, 32], strides = [1, 1]} : vector<8x256xf32> to vector<8x32xf32>
    %295 = vector.extract_strided_slice %292 {offsets = [0, 64], sizes = [8, 32], strides = [1, 1]} : vector<8x256xf32> to vector<8x32xf32>
    %cst_75 = arith.constant 2.000000e+00 : f32
    %296 = vector.broadcast %cst_75 : f32 to vector<8x32xf32>
    %297 = arith.mulf %296, %295 : vector<8x32xf32>
    %cst_76 = arith.constant 1.000000e+00 : f32
    %298 = vector.broadcast %cst_76 : f32 to vector<8x32xf32>
    %299 = arith.subf %297, %298 : vector<8x32xf32>
    %300 = vector.extract_strided_slice %292 {offsets = [0, 96], sizes = [8, 32], strides = [1, 1]} : vector<8x256xf32> to vector<8x32xf32>
    %301 = vector.extract_strided_slice %292 {offsets = [0, 128], sizes = [8, 32], strides = [1, 1]} : vector<8x256xf32> to vector<8x32xf32>
    %302 = vector.extract_strided_slice %292 {offsets = [0, 160], sizes = [8, 32], strides = [1, 1]} : vector<8x256xf32> to vector<8x32xf32>
    %303 = vector.extract_strided_slice %292 {offsets = [0, 192], sizes = [8, 32], strides = [1, 1]} : vector<8x256xf32> to vector<8x32xf32>
    %cst_77 = arith.constant 2.000000e+00 : f32
    %304 = vector.broadcast %cst_77 : f32 to vector<8x32xf32>
    %305 = arith.mulf %304, %303 : vector<8x32xf32>
    %cst_78 = arith.constant 1.000000e+00 : f32
    %306 = vector.broadcast %cst_78 : f32 to vector<8x32xf32>
    %307 = arith.subf %305, %306 : vector<8x32xf32>
    %308 = vector.extract_strided_slice %292 {offsets = [0, 224], sizes = [8, 32], strides = [1, 1]} : vector<8x256xf32> to vector<8x32xf32>
    %309 = arith.mulf %294, %272 : vector<8x32xf32>
    %310 = arith.mulf %293, %299 : vector<8x32xf32>
    %311 = arith.addf %309, %310 : vector<8x32xf32>
    %312 = arith.mulf %302, %275 : vector<8x32xf32>
    %313 = arith.mulf %301, %307 : vector<8x32xf32>
    %314 = arith.addf %312, %313 : vector<8x32xf32>
    %315 = math.tanh %311 : vector<8x32xf32>
    %316 = arith.mulf %300, %315 : vector<8x32xf32>
    %317 = math.tanh %314 : vector<8x32xf32>
    %318 = arith.mulf %308, %317 : vector<8x32xf32>
    %c56_79 = arith.constant 56 : index
    %c0_80 = arith.constant 0 : index
    %319 = vector.load %arg14[%c56_79, %c0_80] : memref<64x64xf32, #tpu.memory_space<vmem>>, vector<8x32xf32>
    tpu.vector_store %arg14[%c56_79, %c0_80], %316 {strides = array<i32>} : memref<64x64xf32, #tpu.memory_space<vmem>>, vector<8x32xf32>,
    %c0_81 = arith.constant 0 : index
    %c32_82 = arith.constant 32 : index
    %320 = vector.load %arg14[%c0_81, %c32_82] : memref<64x64xf32, #tpu.memory_space<vmem>>, vector<8x32xf32>
    tpu.vector_store %arg14[%c0_81, %c32_82], %318 {strides = array<i32>} : memref<64x64xf32, #tpu.memory_space<vmem>>, vector<8x32xf32>,
    %c0_83 = arith.constant 0 : index
    %c0_84 = arith.constant 0 : index
    %321 = vector.load %arg14[%c0_83, %c0_84] : memref<64x64xf32, #tpu.memory_space<vmem>>, vector<64x64xf32>
    %c0_85 = arith.constant 0 : index
    %c0_86 = arith.constant 0 : index
    %322 = vector.load %arg4[%c0_85, %c0_86] : memref<64x256xf32, #tpu.memory_space<vmem>>, vector<64x256xf32>
    %cst_87 = arith.constant dense<0.000000e+00> : vector<64x256xf32>
    %323 = tpu.matmul %321, %322, %cst_87 {dimension_numbers = #tpu.dot_dimension_numbers<[1], [0], [0], [1], [0, 0, 1, 1], [], []>} : vector<64x64xf32>, vector<64x256xf32>, vector<64x256xf32> -> vector<64x256xf32>
    %c0_88 = arith.constant 0 : index
    %c0_89 = arith.constant 0 : index
    %324 = vector.load %arg6[%c0_88, %c0_89] : memref<1x256xf32, #tpu.memory_space<vmem>>, vector<1x256xf32>
    %325 = vector.broadcast %324 : vector<1x256xf32> to vector<64x256xf32>
    %326 = arith.addf %323, %325 : vector<64x256xf32>
    %c0_90 = arith.constant 0 : index
    %c0_91 = arith.constant 0 : index
    %327 = vector.load %arg5[%c0_90, %c0_91] : memref<64x256xf32, #tpu.memory_space<vmem>>, vector<64x256xf32>
    %cst_92 = arith.constant 0.000000e+00 : f32
    %328 = vector.broadcast %cst_92 : f32 to vector<8x64xf32>
    %cst_93 = arith.constant 0.000000e+00 : f32
    %329 = vector.broadcast %cst_93 : f32 to vector<8x32xf32>
    %cst_94 = arith.constant 0.000000e+00 : f32
    %330 = vector.broadcast %cst_94 : f32 to vector<8x32xf32>
    %331 = vector.extract_strided_slice %326 {offsets = [0, 0], sizes = [8, 128], strides = [1, 1]} : vector<64x256xf32> to vector<8x128xf32>
    %332 = vector.extract_strided_slice %326 {offsets = [56, 128], sizes = [8, 128], strides = [1, 1]} : vector<64x256xf32> to vector<8x128xf32>
    %333 = tpu.concatenate %331, %332 in 1 : vector<8x128xf32>, vector<8x128xf32> -> vector<8x256xf32>
    %cst_95 = arith.constant dense<0.000000e+00> : vector<8x256xf32>
    %334 = tpu.matmul %328, %327, %cst_95 {dimension_numbers = #tpu.dot_dimension_numbers<[1], [0], [0], [1], [0, 0, 1, 1], [], []>} : vector<8x64xf32>, vector<64x256xf32>, vector<8x256xf32> -> vector<8x256xf32>
    %335 = arith.addf %333, %334 : vector<8x256xf32>
    %336 = arith.negf %335 : vector<8x256xf32>
    %337 = math.exp %336 : vector<8x256xf32>
    %cst_96 = arith.constant 1.000000e+00 : f32
    %338 = vector.broadcast %cst_96 : f32 to vector<8x256xf32>
    %339 = arith.addf %338, %337 : vector<8x256xf32>
    %340 = arith.divf %338, %339 : vector<8x256xf32>
    %341 = vector.extract_strided_slice %340 {offsets = [0, 0], sizes = [8, 32], strides = [1, 1]} : vector<8x256xf32> to vector<8x32xf32>
    %342 = vector.extract_strided_slice %340 {offsets = [0, 32], sizes = [8, 32], strides = [1, 1]} : vector<8x256xf32> to vector<8x32xf32>
    %343 = vector.extract_strided_slice %340 {offsets = [0, 64], sizes = [8, 32], strides = [1, 1]} : vector<8x256xf32> to vector<8x32xf32>
    %cst_97 = arith.constant 2.000000e+00 : f32
    %344 = vector.broadcast %cst_97 : f32 to vector<8x32xf32>
    %345 = arith.mulf %344, %343 : vector<8x32xf32>
    %cst_98 = arith.constant 1.000000e+00 : f32
    %346 = vector.broadcast %cst_98 : f32 to vector<8x32xf32>
    %347 = arith.subf %345, %346 : vector<8x32xf32>
    %348 = vector.extract_strided_slice %340 {offsets = [0, 96], sizes = [8, 32], strides = [1, 1]} : vector<8x256xf32> to vector<8x32xf32>
    %349 = vector.extract_strided_slice %340 {offsets = [0, 128], sizes = [8, 32], strides = [1, 1]} : vector<8x256xf32> to vector<8x32xf32>
    %350 = vector.extract_strided_slice %340 {offsets = [0, 160], sizes = [8, 32], strides = [1, 1]} : vector<8x256xf32> to vector<8x32xf32>
    %351 = vector.extract_strided_slice %340 {offsets = [0, 192], sizes = [8, 32], strides = [1, 1]} : vector<8x256xf32> to vector<8x32xf32>
    %cst_99 = arith.constant 2.000000e+00 : f32
    %352 = vector.broadcast %cst_99 : f32 to vector<8x32xf32>
    %353 = arith.mulf %352, %351 : vector<8x32xf32>
    %cst_100 = arith.constant 1.000000e+00 : f32
    %354 = vector.broadcast %cst_100 : f32 to vector<8x32xf32>
    %355 = arith.subf %353, %354 : vector<8x32xf32>
    %356 = vector.extract_strided_slice %340 {offsets = [0, 224], sizes = [8, 32], strides = [1, 1]} : vector<8x256xf32> to vector<8x32xf32>
    %357 = arith.mulf %342, %329 : vector<8x32xf32>
    %358 = arith.mulf %341, %347 : vector<8x32xf32>
    %359 = arith.addf %357, %358 : vector<8x32xf32>
    %360 = arith.mulf %350, %330 : vector<8x32xf32>
    %361 = arith.mulf %349, %355 : vector<8x32xf32>
    %362 = arith.addf %360, %361 : vector<8x32xf32>
    %363 = math.tanh %359 : vector<8x32xf32>
    %364 = arith.mulf %348, %363 : vector<8x32xf32>
    %365 = math.tanh %362 : vector<8x32xf32>
    %366 = arith.mulf %356, %365 : vector<8x32xf32>
    %c0_101 = arith.constant 0 : index
    %c0_102 = arith.constant 0 : index
    %367 = vector.load %arg15[%c0_101, %c0_102] : memref<64x64xf32, #tpu.memory_space<vmem>>, vector<8x32xf32>
    tpu.vector_store %arg15[%c0_101, %c0_102], %364 {strides = array<i32>} : memref<64x64xf32, #tpu.memory_space<vmem>>, vector<8x32xf32>,
    %c56_103 = arith.constant 56 : index
    %c32_104 = arith.constant 32 : index
    %368 = vector.load %arg15[%c56_103, %c32_104] : memref<64x64xf32, #tpu.memory_space<vmem>>, vector<8x32xf32>
    tpu.vector_store %arg15[%c56_103, %c32_104], %366 {strides = array<i32>} : memref<64x64xf32, #tpu.memory_space<vmem>>, vector<8x32xf32>,
    %369 = tpu.concatenate %364, %366 in 1 : vector<8x32xf32>, vector<8x32xf32> -> vector<8x64xf32>
    %370 = vector.extract_strided_slice %326 {offsets = [8, 0], sizes = [8, 128], strides = [1, 1]} : vector<64x256xf32> to vector<8x128xf32>
    %371 = vector.extract_strided_slice %326 {offsets = [48, 128], sizes = [8, 128], strides = [1, 1]} : vector<64x256xf32> to vector<8x128xf32>
    %372 = tpu.concatenate %370, %371 in 1 : vector<8x128xf32>, vector<8x128xf32> -> vector<8x256xf32>
    %cst_105 = arith.constant dense<0.000000e+00> : vector<8x256xf32>
    %373 = tpu.matmul %369, %327, %cst_105 {dimension_numbers = #tpu.dot_dimension_numbers<[1], [0], [0], [1], [0, 0, 1, 1], [], []>} : vector<8x64xf32>, vector<64x256xf32>, vector<8x256xf32> -> vector<8x256xf32>
    %374 = arith.addf %372, %373 : vector<8x256xf32>
    %375 = arith.negf %374 : vector<8x256xf32>
    %376 = math.exp %375 : vector<8x256xf32>
    %cst_106 = arith.constant 1.000000e+00 : f32
    %377 = vector.broadcast %cst_106 : f32 to vector<8x256xf32>
    %378 = arith.addf %377, %376 : vector<8x256xf32>
    %379 = arith.divf %377, %378 : vector<8x256xf32>
    %380 = vector.extract_strided_slice %379 {offsets = [0, 0], sizes = [8, 32], strides = [1, 1]} : vector<8x256xf32> to vector<8x32xf32>
    %381 = vector.extract_strided_slice %379 {offsets = [0, 32], sizes = [8, 32], strides = [1, 1]} : vector<8x256xf32> to vector<8x32xf32>
    %382 = vector.extract_strided_slice %379 {offsets = [0, 64], sizes = [8, 32], strides = [1, 1]} : vector<8x256xf32> to vector<8x32xf32>
    %cst_107 = arith.constant 2.000000e+00 : f32
    %383 = vector.broadcast %cst_107 : f32 to vector<8x32xf32>
    %384 = arith.mulf %383, %382 : vector<8x32xf32>
    %cst_108 = arith.constant 1.000000e+00 : f32
    %385 = vector.broadcast %cst_108 : f32 to vector<8x32xf32>
    %386 = arith.subf %384, %385 : vector<8x32xf32>
    %387 = vector.extract_strided_slice %379 {offsets = [0, 96], sizes = [8, 32], strides = [1, 1]} : vector<8x256xf32> to vector<8x32xf32>
    %388 = vector.extract_strided_slice %379 {offsets = [0, 128], sizes = [8, 32], strides = [1, 1]} : vector<8x256xf32> to vector<8x32xf32>
    %389 = vector.extract_strided_slice %379 {offsets = [0, 160], sizes = [8, 32], strides = [1, 1]} : vector<8x256xf32> to vector<8x32xf32>
    %390 = vector.extract_strided_slice %379 {offsets = [0, 192], sizes = [8, 32], strides = [1, 1]} : vector<8x256xf32> to vector<8x32xf32>
    %cst_109 = arith.constant 2.000000e+00 : f32
    %391 = vector.broadcast %cst_109 : f32 to vector<8x32xf32>
    %392 = arith.mulf %391, %390 : vector<8x32xf32>
    %cst_110 = arith.constant 1.000000e+00 : f32
    %393 = vector.broadcast %cst_110 : f32 to vector<8x32xf32>
    %394 = arith.subf %392, %393 : vector<8x32xf32>
    %395 = vector.extract_strided_slice %379 {offsets = [0, 224], sizes = [8, 32], strides = [1, 1]} : vector<8x256xf32> to vector<8x32xf32>
    %396 = arith.mulf %381, %359 : vector<8x32xf32>
    %397 = arith.mulf %380, %386 : vector<8x32xf32>
    %398 = arith.addf %396, %397 : vector<8x32xf32>
    %399 = arith.mulf %389, %362 : vector<8x32xf32>
    %400 = arith.mulf %388, %394 : vector<8x32xf32>
    %401 = arith.addf %399, %400 : vector<8x32xf32>
    %402 = math.tanh %398 : vector<8x32xf32>
    %403 = arith.mulf %387, %402 : vector<8x32xf32>
    %404 = math.tanh %401 : vector<8x32xf32>
    %405 = arith.mulf %395, %404 : vector<8x32xf32>
    %c8_111 = arith.constant 8 : index
    %c0_112 = arith.constant 0 : index
    %406 = vector.load %arg15[%c8_111, %c0_112] : memref<64x64xf32, #tpu.memory_space<vmem>>, vector<8x32xf32>
    tpu.vector_store %arg15[%c8_111, %c0_112], %403 {strides = array<i32>} : memref<64x64xf32, #tpu.memory_space<vmem>>, vector<8x32xf32>,
    %c48_113 = arith.constant 48 : index
    %c32_114 = arith.constant 32 : index
    %407 = vector.load %arg15[%c48_113, %c32_114] : memref<64x64xf32, #tpu.memory_space<vmem>>, vector<8x32xf32>
    tpu.vector_store %arg15[%c48_113, %c32_114], %405 {strides = array<i32>} : memref<64x64xf32, #tpu.memory_space<vmem>>, vector<8x32xf32>,
    %408 = tpu.concatenate %403, %405 in 1 : vector<8x32xf32>, vector<8x32xf32> -> vector<8x64xf32>
    %409 = vector.extract_strided_slice %326 {offsets = [16, 0], sizes = [8, 128], strides = [1, 1]} : vector<64x256xf32> to vector<8x128xf32>
    %410 = vector.extract_strided_slice %326 {offsets = [40, 128], sizes = [8, 128], strides = [1, 1]} : vector<64x256xf32> to vector<8x128xf32>
    %411 = tpu.concatenate %409, %410 in 1 : vector<8x128xf32>, vector<8x128xf32> -> vector<8x256xf32>
    %cst_115 = arith.constant dense<0.000000e+00> : vector<8x256xf32>
    %412 = tpu.matmul %408, %327, %cst_115 {dimension_numbers = #tpu.dot_dimension_numbers<[1], [0], [0], [1], [0, 0, 1, 1], [], []>} : vector<8x64xf32>, vector<64x256xf32>, vector<8x256xf32> -> vector<8x256xf32>
    %413 = arith.addf %411, %412 : vector<8x256xf32>
    %414 = arith.negf %413 : vector<8x256xf32>
    %415 = math.exp %414 : vector<8x256xf32>
    %cst_116 = arith.constant 1.000000e+00 : f32
    %416 = vector.broadcast %cst_116 : f32 to vector<8x256xf32>
    %417 = arith.addf %416, %415 : vector<8x256xf32>
    %418 = arith.divf %416, %417 : vector<8x256xf32>
    %419 = vector.extract_strided_slice %418 {offsets = [0, 0], sizes = [8, 32], strides = [1, 1]} : vector<8x256xf32> to vector<8x32xf32>
    %420 = vector.extract_strided_slice %418 {offsets = [0, 32], sizes = [8, 32], strides = [1, 1]} : vector<8x256xf32> to vector<8x32xf32>
    %421 = vector.extract_strided_slice %418 {offsets = [0, 64], sizes = [8, 32], strides = [1, 1]} : vector<8x256xf32> to vector<8x32xf32>
    %cst_117 = arith.constant 2.000000e+00 : f32
    %422 = vector.broadcast %cst_117 : f32 to vector<8x32xf32>
    %423 = arith.mulf %422, %421 : vector<8x32xf32>
    %cst_118 = arith.constant 1.000000e+00 : f32
    %424 = vector.broadcast %cst_118 : f32 to vector<8x32xf32>
    %425 = arith.subf %423, %424 : vector<8x32xf32>
    %426 = vector.extract_strided_slice %418 {offsets = [0, 96], sizes = [8, 32], strides = [1, 1]} : vector<8x256xf32> to vector<8x32xf32>
    %427 = vector.extract_strided_slice %418 {offsets = [0, 128], sizes = [8, 32], strides = [1, 1]} : vector<8x256xf32> to vector<8x32xf32>
    %428 = vector.extract_strided_slice %418 {offsets = [0, 160], sizes = [8, 32], strides = [1, 1]} : vector<8x256xf32> to vector<8x32xf32>
    %429 = vector.extract_strided_slice %418 {offsets = [0, 192], sizes = [8, 32], strides = [1, 1]} : vector<8x256xf32> to vector<8x32xf32>
    %cst_119 = arith.constant 2.000000e+00 : f32
    %430 = vector.broadcast %cst_119 : f32 to vector<8x32xf32>
    %431 = arith.mulf %430, %429 : vector<8x32xf32>
    %cst_120 = arith.constant 1.000000e+00 : f32
    %432 = vector.broadcast %cst_120 : f32 to vector<8x32xf32>
    %433 = arith.subf %431, %432 : vector<8x32xf32>
    %434 = vector.extract_strided_slice %418 {offsets = [0, 224], sizes = [8, 32], strides = [1, 1]} : vector<8x256xf32> to vector<8x32xf32>
    %435 = arith.mulf %420, %398 : vector<8x32xf32>
    %436 = arith.mulf %419, %425 : vector<8x32xf32>
    %437 = arith.addf %435, %436 : vector<8x32xf32>
    %438 = arith.mulf %428, %401 : vector<8x32xf32>
    %439 = arith.mulf %427, %433 : vector<8x32xf32>
    %440 = arith.addf %438, %439 : vector<8x32xf32>
    %441 = math.tanh %437 : vector<8x32xf32>
    %442 = arith.mulf %426, %441 : vector<8x32xf32>
    %443 = math.tanh %440 : vector<8x32xf32>
    %444 = arith.mulf %434, %443 : vector<8x32xf32>
    %c16_121 = arith.constant 16 : index
    %c0_122 = arith.constant 0 : index
    %445 = vector.load %arg15[%c16_121, %c0_122] : memref<64x64xf32, #tpu.memory_space<vmem>>, vector<8x32xf32>
    tpu.vector_store %arg15[%c16_121, %c0_122], %442 {strides = array<i32>} : memref<64x64xf32, #tpu.memory_space<vmem>>, vector<8x32xf32>,
    %c40_123 = arith.constant 40 : index
    %c32_124 = arith.constant 32 : index
    %446 = vector.load %arg15[%c40_123, %c32_124] : memref<64x64xf32, #tpu.memory_space<vmem>>, vector<8x32xf32>
    tpu.vector_store %arg15[%c40_123, %c32_124], %444 {strides = array<i32>} : memref<64x64xf32, #tpu.memory_space<vmem>>, vector<8x32xf32>,
    %447 = tpu.concatenate %442, %444 in 1 : vector<8x32xf32>, vector<8x32xf32> -> vector<8x64xf32>
    %448 = vector.extract_strided_slice %326 {offsets = [24, 0], sizes = [8, 128], strides = [1, 1]} : vector<64x256xf32> to vector<8x128xf32>
    %449 = vector.extract_strided_slice %326 {offsets = [32, 128], sizes = [8, 128], strides = [1, 1]} : vector<64x256xf32> to vector<8x128xf32>
    %450 = tpu.concatenate %448, %449 in 1 : vector<8x128xf32>, vector<8x128xf32> -> vector<8x256xf32>
    %cst_125 = arith.constant dense<0.000000e+00> : vector<8x256xf32>
    %451 = tpu.matmul %447, %327, %cst_125 {dimension_numbers = #tpu.dot_dimension_numbers<[1], [0], [0], [1], [0, 0, 1, 1], [], []>} : vector<8x64xf32>, vector<64x256xf32>, vector<8x256xf32> -> vector<8x256xf32>
    %452 = arith.addf %450, %451 : vector<8x256xf32>
    %453 = arith.negf %452 : vector<8x256xf32>
    %454 = math.exp %453 : vector<8x256xf32>
    %cst_126 = arith.constant 1.000000e+00 : f32
    %455 = vector.broadcast %cst_126 : f32 to vector<8x256xf32>
    %456 = arith.addf %455, %454 : vector<8x256xf32>
    %457 = arith.divf %455, %456 : vector<8x256xf32>
    %458 = vector.extract_strided_slice %457 {offsets = [0, 0], sizes = [8, 32], strides = [1, 1]} : vector<8x256xf32> to vector<8x32xf32>
    %459 = vector.extract_strided_slice %457 {offsets = [0, 32], sizes = [8, 32], strides = [1, 1]} : vector<8x256xf32> to vector<8x32xf32>
    %460 = vector.extract_strided_slice %457 {offsets = [0, 64], sizes = [8, 32], strides = [1, 1]} : vector<8x256xf32> to vector<8x32xf32>
    %cst_127 = arith.constant 2.000000e+00 : f32
    %461 = vector.broadcast %cst_127 : f32 to vector<8x32xf32>
    %462 = arith.mulf %461, %460 : vector<8x32xf32>
    %cst_128 = arith.constant 1.000000e+00 : f32
    %463 = vector.broadcast %cst_128 : f32 to vector<8x32xf32>
    %464 = arith.subf %462, %463 : vector<8x32xf32>
    %465 = vector.extract_strided_slice %457 {offsets = [0, 96], sizes = [8, 32], strides = [1, 1]} : vector<8x256xf32> to vector<8x32xf32>
    %466 = vector.extract_strided_slice %457 {offsets = [0, 128], sizes = [8, 32], strides = [1, 1]} : vector<8x256xf32> to vector<8x32xf32>
    %467 = vector.extract_strided_slice %457 {offsets = [0, 160], sizes = [8, 32], strides = [1, 1]} : vector<8x256xf32> to vector<8x32xf32>
    %468 = vector.extract_strided_slice %457 {offsets = [0, 192], sizes = [8, 32], strides = [1, 1]} : vector<8x256xf32> to vector<8x32xf32>
    %cst_129 = arith.constant 2.000000e+00 : f32
    %469 = vector.broadcast %cst_129 : f32 to vector<8x32xf32>
    %470 = arith.mulf %469, %468 : vector<8x32xf32>
    %cst_130 = arith.constant 1.000000e+00 : f32
    %471 = vector.broadcast %cst_130 : f32 to vector<8x32xf32>
    %472 = arith.subf %470, %471 : vector<8x32xf32>
    %473 = vector.extract_strided_slice %457 {offsets = [0, 224], sizes = [8, 32], strides = [1, 1]} : vector<8x256xf32> to vector<8x32xf32>
    %474 = arith.mulf %459, %437 : vector<8x32xf32>
    %475 = arith.mulf %458, %464 : vector<8x32xf32>
    %476 = arith.addf %474, %475 : vector<8x32xf32>
    %477 = arith.mulf %467, %440 : vector<8x32xf32>
    %478 = arith.mulf %466, %472 : vector<8x32xf32>
    %479 = arith.addf %477, %478 : vector<8x32xf32>
    %480 = math.tanh %476 : vector<8x32xf32>
    %481 = arith.mulf %465, %480 : vector<8x32xf32>
    %482 = math.tanh %479 : vector<8x32xf32>
    %483 = arith.mulf %473, %482 : vector<8x32xf32>
    %c24_131 = arith.constant 24 : index
    %c0_132 = arith.constant 0 : index
    %484 = vector.load %arg15[%c24_131, %c0_132] : memref<64x64xf32, #tpu.memory_space<vmem>>, vector<8x32xf32>
    tpu.vector_store %arg15[%c24_131, %c0_132], %481 {strides = array<i32>} : memref<64x64xf32, #tpu.memory_space<vmem>>, vector<8x32xf32>,
    %c32_133 = arith.constant 32 : index
    %c32_134 = arith.constant 32 : index
    %485 = vector.load %arg15[%c32_133, %c32_134] : memref<64x64xf32, #tpu.memory_space<vmem>>, vector<8x32xf32>
    tpu.vector_store %arg15[%c32_133, %c32_134], %483 {strides = array<i32>} : memref<64x64xf32, #tpu.memory_space<vmem>>, vector<8x32xf32>,
    %486 = tpu.concatenate %481, %483 in 1 : vector<8x32xf32>, vector<8x32xf32> -> vector<8x64xf32>
    %487 = vector.extract_strided_slice %326 {offsets = [32, 0], sizes = [8, 128], strides = [1, 1]} : vector<64x256xf32> to vector<8x128xf32>
    %488 = vector.extract_strided_slice %326 {offsets = [24, 128], sizes = [8, 128], strides = [1, 1]} : vector<64x256xf32> to vector<8x128xf32>
    %489 = tpu.concatenate %487, %488 in 1 : vector<8x128xf32>, vector<8x128xf32> -> vector<8x256xf32>
    %cst_135 = arith.constant dense<0.000000e+00> : vector<8x256xf32>
    %490 = tpu.matmul %486, %327, %cst_135 {dimension_numbers = #tpu.dot_dimension_numbers<[1], [0], [0], [1], [0, 0, 1, 1], [], []>} : vector<8x64xf32>, vector<64x256xf32>, vector<8x256xf32> -> vector<8x256xf32>
    %491 = arith.addf %489, %490 : vector<8x256xf32>
    %492 = arith.negf %491 : vector<8x256xf32>
    %493 = math.exp %492 : vector<8x256xf32>
    %cst_136 = arith.constant 1.000000e+00 : f32
    %494 = vector.broadcast %cst_136 : f32 to vector<8x256xf32>
    %495 = arith.addf %494, %493 : vector<8x256xf32>
    %496 = arith.divf %494, %495 : vector<8x256xf32>
    %497 = vector.extract_strided_slice %496 {offsets = [0, 0], sizes = [8, 32], strides = [1, 1]} : vector<8x256xf32> to vector<8x32xf32>
    %498 = vector.extract_strided_slice %496 {offsets = [0, 32], sizes = [8, 32], strides = [1, 1]} : vector<8x256xf32> to vector<8x32xf32>
    %499 = vector.extract_strided_slice %496 {offsets = [0, 64], sizes = [8, 32], strides = [1, 1]} : vector<8x256xf32> to vector<8x32xf32>
    %cst_137 = arith.constant 2.000000e+00 : f32
    %500 = vector.broadcast %cst_137 : f32 to vector<8x32xf32>
    %501 = arith.mulf %500, %499 : vector<8x32xf32>
    %cst_138 = arith.constant 1.000000e+00 : f32
    %502 = vector.broadcast %cst_138 : f32 to vector<8x32xf32>
    %503 = arith.subf %501, %502 : vector<8x32xf32>
    %504 = vector.extract_strided_slice %496 {offsets = [0, 96], sizes = [8, 32], strides = [1, 1]} : vector<8x256xf32> to vector<8x32xf32>
    %505 = vector.extract_strided_slice %496 {offsets = [0, 128], sizes = [8, 32], strides = [1, 1]} : vector<8x256xf32> to vector<8x32xf32>
    %506 = vector.extract_strided_slice %496 {offsets = [0, 160], sizes = [8, 32], strides = [1, 1]} : vector<8x256xf32> to vector<8x32xf32>
    %507 = vector.extract_strided_slice %496 {offsets = [0, 192], sizes = [8, 32], strides = [1, 1]} : vector<8x256xf32> to vector<8x32xf32>
    %cst_139 = arith.constant 2.000000e+00 : f32
    %508 = vector.broadcast %cst_139 : f32 to vector<8x32xf32>
    %509 = arith.mulf %508, %507 : vector<8x32xf32>
    %cst_140 = arith.constant 1.000000e+00 : f32
    %510 = vector.broadcast %cst_140 : f32 to vector<8x32xf32>
    %511 = arith.subf %509, %510 : vector<8x32xf32>
    %512 = vector.extract_strided_slice %496 {offsets = [0, 224], sizes = [8, 32], strides = [1, 1]} : vector<8x256xf32> to vector<8x32xf32>
    %513 = arith.mulf %498, %476 : vector<8x32xf32>
    %514 = arith.mulf %497, %503 : vector<8x32xf32>
    %515 = arith.addf %513, %514 : vector<8x32xf32>
    %516 = arith.mulf %506, %479 : vector<8x32xf32>
    %517 = arith.mulf %505, %511 : vector<8x32xf32>
    %518 = arith.addf %516, %517 : vector<8x32xf32>
    %519 = math.tanh %515 : vector<8x32xf32>
    %520 = arith.mulf %504, %519 : vector<8x32xf32>
    %521 = math.tanh %518 : vector<8x32xf32>
    %522 = arith.mulf %512, %521 : vector<8x32xf32>
    %c32_141 = arith.constant 32 : index
    %c0_142 = arith.constant 0 : index
    %523 = vector.load %arg15[%c32_141, %c0_142] : memref<64x64xf32, #tpu.memory_space<vmem>>, vector<8x32xf32>
    tpu.vector_store %arg15[%c32_141, %c0_142], %520 {strides = array<i32>} : memref<64x64xf32, #tpu.memory_space<vmem>>, vector<8x32xf32>,
    %c24_143 = arith.constant 24 : index
    %c32_144 = arith.constant 32 : index
    %524 = vector.load %arg15[%c24_143, %c32_144] : memref<64x64xf32, #tpu.memory_space<vmem>>, vector<8x32xf32>
    tpu.vector_store %arg15[%c24_143, %c32_144], %522 {strides = array<i32>} : memref<64x64xf32, #tpu.memory_space<vmem>>, vector<8x32xf32>,
    %525 = tpu.concatenate %520, %522 in 1 : vector<8x32xf32>, vector<8x32xf32> -> vector<8x64xf32>
    %526 = vector.extract_strided_slice %326 {offsets = [40, 0], sizes = [8, 128], strides = [1, 1]} : vector<64x256xf32> to vector<8x128xf32>
    %527 = vector.extract_strided_slice %326 {offsets = [16, 128], sizes = [8, 128], strides = [1, 1]} : vector<64x256xf32> to vector<8x128xf32>
    %528 = tpu.concatenate %526, %527 in 1 : vector<8x128xf32>, vector<8x128xf32> -> vector<8x256xf32>
    %cst_145 = arith.constant dense<0.000000e+00> : vector<8x256xf32>
    %529 = tpu.matmul %525, %327, %cst_145 {dimension_numbers = #tpu.dot_dimension_numbers<[1], [0], [0], [1], [0, 0, 1, 1], [], []>} : vector<8x64xf32>, vector<64x256xf32>, vector<8x256xf32> -> vector<8x256xf32>
    %530 = arith.addf %528, %529 : vector<8x256xf32>
    %531 = arith.negf %530 : vector<8x256xf32>
    %532 = math.exp %531 : vector<8x256xf32>
    %cst_146 = arith.constant 1.000000e+00 : f32
    %533 = vector.broadcast %cst_146 : f32 to vector<8x256xf32>
    %534 = arith.addf %533, %532 : vector<8x256xf32>
    %535 = arith.divf %533, %534 : vector<8x256xf32>
    %536 = vector.extract_strided_slice %535 {offsets = [0, 0], sizes = [8, 32], strides = [1, 1]} : vector<8x256xf32> to vector<8x32xf32>
    %537 = vector.extract_strided_slice %535 {offsets = [0, 32], sizes = [8, 32], strides = [1, 1]} : vector<8x256xf32> to vector<8x32xf32>
    %538 = vector.extract_strided_slice %535 {offsets = [0, 64], sizes = [8, 32], strides = [1, 1]} : vector<8x256xf32> to vector<8x32xf32>
    %cst_147 = arith.constant 2.000000e+00 : f32
    %539 = vector.broadcast %cst_147 : f32 to vector<8x32xf32>
    %540 = arith.mulf %539, %538 : vector<8x32xf32>
    %cst_148 = arith.constant 1.000000e+00 : f32
    %541 = vector.broadcast %cst_148 : f32 to vector<8x32xf32>
    %542 = arith.subf %540, %541 : vector<8x32xf32>
    %543 = vector.extract_strided_slice %535 {offsets = [0, 96], sizes = [8, 32], strides = [1, 1]} : vector<8x256xf32> to vector<8x32xf32>
    %544 = vector.extract_strided_slice %535 {offsets = [0, 128], sizes = [8, 32], strides = [1, 1]} : vector<8x256xf32> to vector<8x32xf32>
    %545 = vector.extract_strided_slice %535 {offsets = [0, 160], sizes = [8, 32], strides = [1, 1]} : vector<8x256xf32> to vector<8x32xf32>
    %546 = vector.extract_strided_slice %535 {offsets = [0, 192], sizes = [8, 32], strides = [1, 1]} : vector<8x256xf32> to vector<8x32xf32>
    %cst_149 = arith.constant 2.000000e+00 : f32
    %547 = vector.broadcast %cst_149 : f32 to vector<8x32xf32>
    %548 = arith.mulf %547, %546 : vector<8x32xf32>
    %cst_150 = arith.constant 1.000000e+00 : f32
    %549 = vector.broadcast %cst_150 : f32 to vector<8x32xf32>
    %550 = arith.subf %548, %549 : vector<8x32xf32>
    %551 = vector.extract_strided_slice %535 {offsets = [0, 224], sizes = [8, 32], strides = [1, 1]} : vector<8x256xf32> to vector<8x32xf32>
    %552 = arith.mulf %537, %515 : vector<8x32xf32>
    %553 = arith.mulf %536, %542 : vector<8x32xf32>
    %554 = arith.addf %552, %553 : vector<8x32xf32>
    %555 = arith.mulf %545, %518 : vector<8x32xf32>
    %556 = arith.mulf %544, %550 : vector<8x32xf32>
    %557 = arith.addf %555, %556 : vector<8x32xf32>
    %558 = math.tanh %554 : vector<8x32xf32>
    %559 = arith.mulf %543, %558 : vector<8x32xf32>
    %560 = math.tanh %557 : vector<8x32xf32>
    %561 = arith.mulf %551, %560 : vector<8x32xf32>
    %c40_151 = arith.constant 40 : index
    %c0_152 = arith.constant 0 : index
    %562 = vector.load %arg15[%c40_151, %c0_152] : memref<64x64xf32, #tpu.memory_space<vmem>>, vector<8x32xf32>
    tpu.vector_store %arg15[%c40_151, %c0_152], %559 {strides = array<i32>} : memref<64x64xf32, #tpu.memory_space<vmem>>, vector<8x32xf32>,
    %c16_153 = arith.constant 16 : index
    %c32_154 = arith.constant 32 : index
    %563 = vector.load %arg15[%c16_153, %c32_154] : memref<64x64xf32, #tpu.memory_space<vmem>>, vector<8x32xf32>
    tpu.vector_store %arg15[%c16_153, %c32_154], %561 {strides = array<i32>} : memref<64x64xf32, #tpu.memory_space<vmem>>, vector<8x32xf32>,
    %564 = tpu.concatenate %559, %561 in 1 : vector<8x32xf32>, vector<8x32xf32> -> vector<8x64xf32>
    %565 = vector.extract_strided_slice %326 {offsets = [48, 0], sizes = [8, 128], strides = [1, 1]} : vector<64x256xf32> to vector<8x128xf32>
    %566 = vector.extract_strided_slice %326 {offsets = [8, 128], sizes = [8, 128], strides = [1, 1]} : vector<64x256xf32> to vector<8x128xf32>
    %567 = tpu.concatenate %565, %566 in 1 : vector<8x128xf32>, vector<8x128xf32> -> vector<8x256xf32>
    %cst_155 = arith.constant dense<0.000000e+00> : vector<8x256xf32>
    %568 = tpu.matmul %564, %327, %cst_155 {dimension_numbers = #tpu.dot_dimension_numbers<[1], [0], [0], [1], [0, 0, 1, 1], [], []>} : vector<8x64xf32>, vector<64x256xf32>, vector<8x256xf32> -> vector<8x256xf32>
    %569 = arith.addf %567, %568 : vector<8x256xf32>
    %570 = arith.negf %569 : vector<8x256xf32>
    %571 = math.exp %570 : vector<8x256xf32>
    %cst_156 = arith.constant 1.000000e+00 : f32
    %572 = vector.broadcast %cst_156 : f32 to vector<8x256xf32>
    %573 = arith.addf %572, %571 : vector<8x256xf32>
    %574 = arith.divf %572, %573 : vector<8x256xf32>
    %575 = vector.extract_strided_slice %574 {offsets = [0, 0], sizes = [8, 32], strides = [1, 1]} : vector<8x256xf32> to vector<8x32xf32>
    %576 = vector.extract_strided_slice %574 {offsets = [0, 32], sizes = [8, 32], strides = [1, 1]} : vector<8x256xf32> to vector<8x32xf32>
    %577 = vector.extract_strided_slice %574 {offsets = [0, 64], sizes = [8, 32], strides = [1, 1]} : vector<8x256xf32> to vector<8x32xf32>
    %cst_157 = arith.constant 2.000000e+00 : f32
    %578 = vector.broadcast %cst_157 : f32 to vector<8x32xf32>
    %579 = arith.mulf %578, %577 : vector<8x32xf32>
    %cst_158 = arith.constant 1.000000e+00 : f32
    %580 = vector.broadcast %cst_158 : f32 to vector<8x32xf32>
    %581 = arith.subf %579, %580 : vector<8x32xf32>
    %582 = vector.extract_strided_slice %574 {offsets = [0, 96], sizes = [8, 32], strides = [1, 1]} : vector<8x256xf32> to vector<8x32xf32>
    %583 = vector.extract_strided_slice %574 {offsets = [0, 128], sizes = [8, 32], strides = [1, 1]} : vector<8x256xf32> to vector<8x32xf32>
    %584 = vector.extract_strided_slice %574 {offsets = [0, 160], sizes = [8, 32], strides = [1, 1]} : vector<8x256xf32> to vector<8x32xf32>
    %585 = vector.extract_strided_slice %574 {offsets = [0, 192], sizes = [8, 32], strides = [1, 1]} : vector<8x256xf32> to vector<8x32xf32>
    %cst_159 = arith.constant 2.000000e+00 : f32
    %586 = vector.broadcast %cst_159 : f32 to vector<8x32xf32>
    %587 = arith.mulf %586, %585 : vector<8x32xf32>
    %cst_160 = arith.constant 1.000000e+00 : f32
    %588 = vector.broadcast %cst_160 : f32 to vector<8x32xf32>
    %589 = arith.subf %587, %588 : vector<8x32xf32>
    %590 = vector.extract_strided_slice %574 {offsets = [0, 224], sizes = [8, 32], strides = [1, 1]} : vector<8x256xf32> to vector<8x32xf32>
    %591 = arith.mulf %576, %554 : vector<8x32xf32>
    %592 = arith.mulf %575, %581 : vector<8x32xf32>
    %593 = arith.addf %591, %592 : vector<8x32xf32>
    %594 = arith.mulf %584, %557 : vector<8x32xf32>
    %595 = arith.mulf %583, %589 : vector<8x32xf32>
    %596 = arith.addf %594, %595 : vector<8x32xf32>
    %597 = math.tanh %593 : vector<8x32xf32>
    %598 = arith.mulf %582, %597 : vector<8x32xf32>
    %599 = math.tanh %596 : vector<8x32xf32>
    %600 = arith.mulf %590, %599 : vector<8x32xf32>
    %c48_161 = arith.constant 48 : index
    %c0_162 = arith.constant 0 : index
    %601 = vector.load %arg15[%c48_161, %c0_162] : memref<64x64xf32, #tpu.memory_space<vmem>>, vector<8x32xf32>
    tpu.vector_store %arg15[%c48_161, %c0_162], %598 {strides = array<i32>} : memref<64x64xf32, #tpu.memory_space<vmem>>, vector<8x32xf32>,
    %c8_163 = arith.constant 8 : index
    %c32_164 = arith.constant 32 : index
    %602 = vector.load %arg15[%c8_163, %c32_164] : memref<64x64xf32, #tpu.memory_space<vmem>>, vector<8x32xf32>
    tpu.vector_store %arg15[%c8_163, %c32_164], %600 {strides = array<i32>} : memref<64x64xf32, #tpu.memory_space<vmem>>, vector<8x32xf32>,
    %603 = tpu.concatenate %598, %600 in 1 : vector<8x32xf32>, vector<8x32xf32> -> vector<8x64xf32>
    %604 = vector.extract_strided_slice %326 {offsets = [56, 0], sizes = [8, 128], strides = [1, 1]} : vector<64x256xf32> to vector<8x128xf32>
    %605 = vector.extract_strided_slice %326 {offsets = [0, 128], sizes = [8, 128], strides = [1, 1]} : vector<64x256xf32> to vector<8x128xf32>
    %606 = tpu.concatenate %604, %605 in 1 : vector<8x128xf32>, vector<8x128xf32> -> vector<8x256xf32>
    %cst_165 = arith.constant dense<0.000000e+00> : vector<8x256xf32>
    %607 = tpu.matmul %603, %327, %cst_165 {dimension_numbers = #tpu.dot_dimension_numbers<[1], [0], [0], [1], [0, 0, 1, 1], [], []>} : vector<8x64xf32>, vector<64x256xf32>, vector<8x256xf32> -> vector<8x256xf32>
    %608 = arith.addf %606, %607 : vector<8x256xf32>
    %609 = arith.negf %608 : vector<8x256xf32>
    %610 = math.exp %609 : vector<8x256xf32>
    %cst_166 = arith.constant 1.000000e+00 : f32
    %611 = vector.broadcast %cst_166 : f32 to vector<8x256xf32>
    %612 = arith.addf %611, %610 : vector<8x256xf32>
    %613 = arith.divf %611, %612 : vector<8x256xf32>
    %614 = vector.extract_strided_slice %613 {offsets = [0, 0], sizes = [8, 32], strides = [1, 1]} : vector<8x256xf32> to vector<8x32xf32>
    %615 = vector.extract_strided_slice %613 {offsets = [0, 32], sizes = [8, 32], strides = [1, 1]} : vector<8x256xf32> to vector<8x32xf32>
    %616 = vector.extract_strided_slice %613 {offsets = [0, 64], sizes = [8, 32], strides = [1, 1]} : vector<8x256xf32> to vector<8x32xf32>
    %cst_167 = arith.constant 2.000000e+00 : f32
    %617 = vector.broadcast %cst_167 : f32 to vector<8x32xf32>
    %618 = arith.mulf %617, %616 : vector<8x32xf32>
    %cst_168 = arith.constant 1.000000e+00 : f32
    %619 = vector.broadcast %cst_168 : f32 to vector<8x32xf32>
    %620 = arith.subf %618, %619 : vector<8x32xf32>
    %621 = vector.extract_strided_slice %613 {offsets = [0, 96], sizes = [8, 32], strides = [1, 1]} : vector<8x256xf32> to vector<8x32xf32>
    %622 = vector.extract_strided_slice %613 {offsets = [0, 128], sizes = [8, 32], strides = [1, 1]} : vector<8x256xf32> to vector<8x32xf32>
    %623 = vector.extract_strided_slice %613 {offsets = [0, 160], sizes = [8, 32], strides = [1, 1]} : vector<8x256xf32> to vector<8x32xf32>
    %624 = vector.extract_strided_slice %613 {offsets = [0, 192], sizes = [8, 32], strides = [1, 1]} : vector<8x256xf32> to vector<8x32xf32>
    %cst_169 = arith.constant 2.000000e+00 : f32
    %625 = vector.broadcast %cst_169 : f32 to vector<8x32xf32>
    %626 = arith.mulf %625, %624 : vector<8x32xf32>
    %cst_170 = arith.constant 1.000000e+00 : f32
    %627 = vector.broadcast %cst_170 : f32 to vector<8x32xf32>
    %628 = arith.subf %626, %627 : vector<8x32xf32>
    %629 = vector.extract_strided_slice %613 {offsets = [0, 224], sizes = [8, 32], strides = [1, 1]} : vector<8x256xf32> to vector<8x32xf32>
    %630 = arith.mulf %615, %593 : vector<8x32xf32>
    %631 = arith.mulf %614, %620 : vector<8x32xf32>
    %632 = arith.addf %630, %631 : vector<8x32xf32>
    %633 = arith.mulf %623, %596 : vector<8x32xf32>
    %634 = arith.mulf %622, %628 : vector<8x32xf32>
    %635 = arith.addf %633, %634 : vector<8x32xf32>
    %636 = math.tanh %632 : vector<8x32xf32>
    %637 = arith.mulf %621, %636 : vector<8x32xf32>
    %638 = math.tanh %635 : vector<8x32xf32>
    %639 = arith.mulf %629, %638 : vector<8x32xf32>
    %c56_171 = arith.constant 56 : index
    %c0_172 = arith.constant 0 : index
    %640 = vector.load %arg15[%c56_171, %c0_172] : memref<64x64xf32, #tpu.memory_space<vmem>>, vector<8x32xf32>
    tpu.vector_store %arg15[%c56_171, %c0_172], %637 {strides = array<i32>} : memref<64x64xf32, #tpu.memory_space<vmem>>, vector<8x32xf32>,
    %c0_173 = arith.constant 0 : index
    %c32_174 = arith.constant 32 : index
    %641 = vector.load %arg15[%c0_173, %c32_174] : memref<64x64xf32, #tpu.memory_space<vmem>>, vector<8x32xf32>
    tpu.vector_store %arg15[%c0_173, %c32_174], %639 {strides = array<i32>} : memref<64x64xf32, #tpu.memory_space<vmem>>, vector<8x32xf32>,
    %c0_175 = arith.constant 0 : index
    %c0_176 = arith.constant 0 : index
    %642 = vector.load %arg8[%c0_175, %c0_176] : memref<1x32xf32, #tpu.memory_space<vmem>>, vector<1x32xf32>
    %c0_177 = arith.constant 0 : index
    %c0_178 = arith.constant 0 : index
    %643 = vector.load %arg15[%c0_177, %c0_178] : memref<64x64xf32, #tpu.memory_space<vmem>>, vector<8x64xf32>
    %c0_179 = arith.constant 0 : index
    %c0_180 = arith.constant 0 : index
    %c0_181 = arith.constant 0 : index
    %644 = vector.load %arg7[%c0_179, %c0_180, %c0_181] : memref<8x64x32xf32, #tpu.memory_space<vmem>>, vector<1x64x32xf32>
    %645 = vector.shape_cast %644 : vector<1x64x32xf32> to vector<64x32xf32>
    %cst_182 = arith.constant dense<0.000000e+00> : vector<8x32xf32>
    %646 = tpu.matmul %643, %645, %cst_182 {dimension_numbers = #tpu.dot_dimension_numbers<[1], [0], [0], [1], [0, 0, 1, 1], [], []>} : vector<8x64xf32>, vector<64x32xf32>, vector<8x32xf32> -> vector<8x32xf32>
    %647 = vector.broadcast %642 : vector<1x32xf32> to vector<8x32xf32>
    %648 = arith.addf %647, %646 : vector<8x32xf32>
    %c8_183 = arith.constant 8 : index
    %c0_184 = arith.constant 0 : index
    %649 = vector.load %arg15[%c8_183, %c0_184] : memref<64x64xf32, #tpu.memory_space<vmem>>, vector<8x64xf32>
    %c1 = arith.constant 1 : index
    %c0_185 = arith.constant 0 : index
    %c0_186 = arith.constant 0 : index
    %650 = vector.load %arg7[%c1, %c0_185, %c0_186] : memref<8x64x32xf32, #tpu.memory_space<vmem>>, vector<1x64x32xf32>
    %651 = vector.shape_cast %650 : vector<1x64x32xf32> to vector<64x32xf32>
    %cst_187 = arith.constant dense<0.000000e+00> : vector<8x32xf32>
    %652 = tpu.matmul %649, %651, %cst_187 {dimension_numbers = #tpu.dot_dimension_numbers<[1], [0], [0], [1], [0, 0, 1, 1], [], []>} : vector<8x64xf32>, vector<64x32xf32>, vector<8x32xf32> -> vector<8x32xf32>
    %653 = arith.addf %648, %652 : vector<8x32xf32>
    %c16_188 = arith.constant 16 : index
    %c0_189 = arith.constant 0 : index
    %654 = vector.load %arg15[%c16_188, %c0_189] : memref<64x64xf32, #tpu.memory_space<vmem>>, vector<8x64xf32>
    %c2 = arith.constant 2 : index
    %c0_190 = arith.constant 0 : index
    %c0_191 = arith.constant 0 : index
    %655 = vector.load %arg7[%c2, %c0_190, %c0_191] : memref<8x64x32xf32, #tpu.memory_space<vmem>>, vector<1x64x32xf32>
    %656 = vector.shape_cast %655 : vector<1x64x32xf32> to vector<64x32xf32>
    %cst_192 = arith.constant dense<0.000000e+00> : vector<8x32xf32>
    %657 = tpu.matmul %654, %656, %cst_192 {dimension_numbers = #tpu.dot_dimension_numbers<[1], [0], [0], [1], [0, 0, 1, 1], [], []>} : vector<8x64xf32>, vector<64x32xf32>, vector<8x32xf32> -> vector<8x32xf32>
    %658 = arith.addf %653, %657 : vector<8x32xf32>
    %c24_193 = arith.constant 24 : index
    %c0_194 = arith.constant 0 : index
    %659 = vector.load %arg15[%c24_193, %c0_194] : memref<64x64xf32, #tpu.memory_space<vmem>>, vector<8x64xf32>
    %c3 = arith.constant 3 : index
    %c0_195 = arith.constant 0 : index
    %c0_196 = arith.constant 0 : index
    %660 = vector.load %arg7[%c3, %c0_195, %c0_196] : memref<8x64x32xf32, #tpu.memory_space<vmem>>, vector<1x64x32xf32>
    %661 = vector.shape_cast %660 : vector<1x64x32xf32> to vector<64x32xf32>
    %cst_197 = arith.constant dense<0.000000e+00> : vector<8x32xf32>
    %662 = tpu.matmul %659, %661, %cst_197 {dimension_numbers = #tpu.dot_dimension_numbers<[1], [0], [0], [1], [0, 0, 1, 1], [], []>} : vector<8x64xf32>, vector<64x32xf32>, vector<8x32xf32> -> vector<8x32xf32>
    %663 = arith.addf %658, %662 : vector<8x32xf32>
    %c32_198 = arith.constant 32 : index
    %c0_199 = arith.constant 0 : index
    %664 = vector.load %arg15[%c32_198, %c0_199] : memref<64x64xf32, #tpu.memory_space<vmem>>, vector<8x64xf32>
    %c4 = arith.constant 4 : index
    %c0_200 = arith.constant 0 : index
    %c0_201 = arith.constant 0 : index
    %665 = vector.load %arg7[%c4, %c0_200, %c0_201] : memref<8x64x32xf32, #tpu.memory_space<vmem>>, vector<1x64x32xf32>
    %666 = vector.shape_cast %665 : vector<1x64x32xf32> to vector<64x32xf32>
    %cst_202 = arith.constant dense<0.000000e+00> : vector<8x32xf32>
    %667 = tpu.matmul %664, %666, %cst_202 {dimension_numbers = #tpu.dot_dimension_numbers<[1], [0], [0], [1], [0, 0, 1, 1], [], []>} : vector<8x64xf32>, vector<64x32xf32>, vector<8x32xf32> -> vector<8x32xf32>
    %668 = arith.addf %663, %667 : vector<8x32xf32>
    %c40_203 = arith.constant 40 : index
    %c0_204 = arith.constant 0 : index
    %669 = vector.load %arg15[%c40_203, %c0_204] : memref<64x64xf32, #tpu.memory_space<vmem>>, vector<8x64xf32>
    %c5 = arith.constant 5 : index
    %c0_205 = arith.constant 0 : index
    %c0_206 = arith.constant 0 : index
    %670 = vector.load %arg7[%c5, %c0_205, %c0_206] : memref<8x64x32xf32, #tpu.memory_space<vmem>>, vector<1x64x32xf32>
    %671 = vector.shape_cast %670 : vector<1x64x32xf32> to vector<64x32xf32>
    %cst_207 = arith.constant dense<0.000000e+00> : vector<8x32xf32>
    %672 = tpu.matmul %669, %671, %cst_207 {dimension_numbers = #tpu.dot_dimension_numbers<[1], [0], [0], [1], [0, 0, 1, 1], [], []>} : vector<8x64xf32>, vector<64x32xf32>, vector<8x32xf32> -> vector<8x32xf32>
    %673 = arith.addf %668, %672 : vector<8x32xf32>
    %c48_208 = arith.constant 48 : index
    %c0_209 = arith.constant 0 : index
    %674 = vector.load %arg15[%c48_208, %c0_209] : memref<64x64xf32, #tpu.memory_space<vmem>>, vector<8x64xf32>
    %c6 = arith.constant 6 : index
    %c0_210 = arith.constant 0 : index
    %c0_211 = arith.constant 0 : index
    %675 = vector.load %arg7[%c6, %c0_210, %c0_211] : memref<8x64x32xf32, #tpu.memory_space<vmem>>, vector<1x64x32xf32>
    %676 = vector.shape_cast %675 : vector<1x64x32xf32> to vector<64x32xf32>
    %cst_212 = arith.constant dense<0.000000e+00> : vector<8x32xf32>
    %677 = tpu.matmul %674, %676, %cst_212 {dimension_numbers = #tpu.dot_dimension_numbers<[1], [0], [0], [1], [0, 0, 1, 1], [], []>} : vector<8x64xf32>, vector<64x32xf32>, vector<8x32xf32> -> vector<8x32xf32>
    %678 = arith.addf %673, %677 : vector<8x32xf32>
    %c56_213 = arith.constant 56 : index
    %c0_214 = arith.constant 0 : index
    %679 = vector.load %arg15[%c56_213, %c0_214] : memref<64x64xf32, #tpu.memory_space<vmem>>, vector<8x64xf32>
    %c7 = arith.constant 7 : index
    %c0_215 = arith.constant 0 : index
    %c0_216 = arith.constant 0 : index
    %680 = vector.load %arg7[%c7, %c0_215, %c0_216] : memref<8x64x32xf32, #tpu.memory_space<vmem>>, vector<1x64x32xf32>
    %681 = vector.shape_cast %680 : vector<1x64x32xf32> to vector<64x32xf32>
    %cst_217 = arith.constant dense<0.000000e+00> : vector<8x32xf32>
    %682 = tpu.matmul %679, %681, %cst_217 {dimension_numbers = #tpu.dot_dimension_numbers<[1], [0], [0], [1], [0, 0, 1, 1], [], []>} : vector<8x64xf32>, vector<64x32xf32>, vector<8x32xf32> -> vector<8x32xf32>
    %683 = arith.addf %678, %682 : vector<8x32xf32>
    %cst_218 = arith.constant 0.000000e+00 : f32
    %684 = vector.broadcast %cst_218 : f32 to vector<8x32xf32>
    %685 = arith.maximumf %683, %684 : vector<8x32xf32>
    %c0_219 = arith.constant 0 : index
    %c0_220 = arith.constant 0 : index
    %686 = vector.load %arg9[%c0_219, %c0_220] : memref<32x16xf32, #tpu.memory_space<vmem>>, vector<32x16xf32>
    %cst_221 = arith.constant dense<0.000000e+00> : vector<8x16xf32>
    %687 = tpu.matmul %685, %686, %cst_221 {dimension_numbers = #tpu.dot_dimension_numbers<[1], [0], [0], [1], [0, 0, 1, 1], [], []>} : vector<8x32xf32>, vector<32x16xf32>, vector<8x16xf32> -> vector<8x16xf32>
    %c0_222 = arith.constant 0 : index
    %c0_223 = arith.constant 0 : index
    %688 = vector.load %arg10[%c0_222, %c0_223] : memref<1x16xf32, #tpu.memory_space<vmem>>, vector<1x16xf32>
    %689 = vector.broadcast %688 : vector<1x16xf32> to vector<8x16xf32>
    %690 = arith.addf %687, %689 : vector<8x16xf32>
    %cst_224 = arith.constant 0.000000e+00 : f32
    %691 = vector.broadcast %cst_224 : f32 to vector<8x16xf32>
    %692 = arith.maximumf %690, %691 : vector<8x16xf32>
    %c0_225 = arith.constant 0 : index
    %c0_226 = arith.constant 0 : index
    %693 = vector.load %arg11[%c0_225, %c0_226] : memref<16x2xf32, #tpu.memory_space<vmem>>, vector<16x2xf32>
    %cst_227 = arith.constant dense<0.000000e+00> : vector<8x2xf32>
    %694 = tpu.matmul %692, %693, %cst_227 {dimension_numbers = #tpu.dot_dimension_numbers<[1], [0], [0], [1], [0, 0, 1, 1], [], []>} : vector<8x16xf32>, vector<16x2xf32>, vector<8x2xf32> -> vector<8x2xf32>
    %c0_228 = arith.constant 0 : index
    %c0_229 = arith.constant 0 : index
    %695 = vector.load %arg12[%c0_228, %c0_229] : memref<1x2xf32, #tpu.memory_space<vmem>>, vector<1x2xf32>
    %696 = vector.broadcast %695 : vector<1x2xf32> to vector<8x2xf32>
    %697 = arith.addf %694, %696 : vector<8x2xf32>
    %c0_230 = arith.constant 0 : index
    %c0_231 = arith.constant 0 : index
    %698 = vector.load %arg13[%c0_230, %c0_231] : memref<8x2xf32, #tpu.memory_space<vmem>>, vector<8x2xf32>
    tpu.vector_store %arg13[%c0_230, %c0_231], %697 {strides = array<i32>} : memref<8x2xf32, #tpu.memory_space<vmem>>, vector<8x2xf32>,
    return
  }
}

</mosaic_0001>

<llo_original>
// kernel: introspective_lstm_forward.1
$region0: #{introspective_lstm_forward.1}
  #allocation0 [shape = 'u32[]', space=smem, size = 0x4, offset = 0x4, fixed_abs, tag = 'smem constant byte address 0x4 - core index']
  #allocation1 [shape = 'u32[144,128]{1,0:T(1,128)}', space=vmem, size = 0x12000, scoped, tag = 'internal scratch']
  #allocation2 [shape = 'f32[64,64]{1,0:T(8,128)}', space=vmem, size = 0x8000, scoped, tag = 'scratch operand']
  #allocation3 [shape = 'f32[64,64]{1,0:T(8,128)}', space=vmem, size = 0x8000, scoped, tag = 'scratch operand']
  %s0 = inlined_call_operand.vmem [shape: f32[64,3], index: 0, kind: input, shape index: {}]
  %s1 = inlined_call_operand.vmem [shape: f32[3,256], index: 1, kind: input, shape index: {}]
  %s2 = inlined_call_operand.vmem [shape: f32[64,256], index: 2, kind: input, shape index: {}]
  %s3 = inlined_call_operand.vmem [shape: f32[1,256], index: 3, kind: input, shape index: {}]
  %s4 = inlined_call_operand.vmem [shape: f32[64,256], index: 4, kind: input, shape index: {}]
  %s5 = inlined_call_operand.vmem [shape: f32[64,256], index: 5, kind: input, shape index: {}]
  %s6 = inlined_call_operand.vmem [shape: f32[1,256], index: 6, kind: input, shape index: {}]
  %s7 = inlined_call_operand.vmem [shape: f32[8,64,32], index: 7, kind: input, shape index: {}]
  %s8 = inlined_call_operand.vmem [shape: f32[1,32], index: 8, kind: input, shape index: {}]
  %s9 = inlined_call_operand.vmem [shape: f32[32,16], index: 9, kind: input, shape index: {}]
  %s10 = inlined_call_operand.vmem [shape: f32[1,16], index: 10, kind: input, shape index: {}]
  %s11 = inlined_call_operand.vmem [shape: f32[16,2], index: 11, kind: input, shape index: {}]
  %s12 = inlined_call_operand.vmem [shape: f32[1,2], index: 12, kind: input, shape index: {}]
  %s13 = inlined_call_operand.vmem [shape: f32[8,2], index: 13, kind: output, shape index: {}]
  %s14 = sld [smem:[#allocation0]]
  $region62: #{introspective_lstm_forward.1} parent=0
    _
  %s16 = ssub.s32 1, %s14
  %s17 = scalar_select 0, %s16, %s14
  // Predicated region
  $region2: #{introspective_lstm_forward.1} parent=0 // pred_check
    _
  $region3: #{introspective_lstm_forward.1} parent=0 // pred_check_branch
    %19 = sbr.rel (0) target = $region5
  $region4: #{introspective_lstm_forward.1} parent=0 // pred_region
    _
  $region5: #{introspective_lstm_forward.1} parent=0 // pred_fallthru
    _
  // Predicated region
  $region6: #{introspective_lstm_forward.1} parent=0 // pred_check
    _
  $region7: #{introspective_lstm_forward.1} parent=0 // pred_check_branch
    %21 = sbr.rel (0) target = $region9
  $region8: #{introspective_lstm_forward.1} parent=0 // pred_region
    _
  $region9: #{introspective_lstm_forward.1} parent=0 // pred_fallthru
    _
  // Predicated region
  $region10: #{introspective_lstm_forward.1} parent=0 // pred_check
    _
  $region11: #{introspective_lstm_forward.1} parent=0 // pred_check_branch
    %23 = sbr.rel (0) target = $region13
  $region12: #{introspective_lstm_forward.1} parent=0 // pred_region
    _
  $region13: #{introspective_lstm_forward.1} parent=0 // pred_fallthru
    _
  // Predicated region
  $region14: #{introspective_lstm_forward.1} parent=0 // pred_check
    _
  $region15: #{introspective_lstm_forward.1} parent=0 // pred_check_branch
    %25 = sbr.rel (0) target = $region17
  $region16: #{introspective_lstm_forward.1} parent=0 // pred_region
    _
  $region17: #{introspective_lstm_forward.1} parent=0 // pred_fallthru
    _
  // Predicated region
  $region18: #{introspective_lstm_forward.1} parent=0 // pred_check
    _
  $region19: #{introspective_lstm_forward.1} parent=0 // pred_check_branch
    %27 = sbr.rel (0) target = $region21
  $region20: #{introspective_lstm_forward.1} parent=0 // pred_region
    _
  $region21: #{introspective_lstm_forward.1} parent=0 // pred_fallthru
    _
  // Predicated region
  $region22: #{introspective_lstm_forward.1} parent=0 // pred_check
    _
  $region23: #{introspective_lstm_forward.1} parent=0 // pred_check_branch
    %29 = sbr.rel (0) target = $region25
  $region24: #{introspective_lstm_forward.1} parent=0 // pred_region
    _
  $region25: #{introspective_lstm_forward.1} parent=0 // pred_fallthru
    _
  // Predicated region
  $region26: #{introspective_lstm_forward.1} parent=0 // pred_check
    _
  $region27: #{introspective_lstm_forward.1} parent=0 // pred_check_branch
    %31 = sbr.rel (0) target = $region29
  $region28: #{introspective_lstm_forward.1} parent=0 // pred_region
    _
  $region29: #{introspective_lstm_forward.1} parent=0 // pred_fallthru
    _
  // Predicated region
  $region30: #{introspective_lstm_forward.1} parent=0 // pred_check
    _
  $region31: #{introspective_lstm_forward.1} parent=0 // pred_check_branch
    %33 = sbr.rel (0) target = $region33
  $region32: #{introspective_lstm_forward.1} parent=0 // pred_region
    _
  $region33: #{introspective_lstm_forward.1} parent=0 // pred_fallthru
    _
  // Predicated region
  $region34: #{introspective_lstm_forward.1} parent=0 // pred_check
    _
  $region35: #{introspective_lstm_forward.1} parent=0 // pred_check_branch
    %35 = sbr.rel (0) target = $region37
  $region36: #{introspective_lstm_forward.1} parent=0 // pred_region
    _
  $region37: #{introspective_lstm_forward.1} parent=0 // pred_fallthru
    _
  // Predicated region
  $region38: #{introspective_lstm_forward.1} parent=0 // pred_check
    _
  $region39: #{introspective_lstm_forward.1} parent=0 // pred_check_branch
    %37 = sbr.rel (0) target = $region41
  $region40: #{introspective_lstm_forward.1} parent=0 // pred_region
    _
  $region41: #{introspective_lstm_forward.1} parent=0 // pred_fallthru
    _
  // Predicated region
  $region42: #{introspective_lstm_forward.1} parent=0 // pred_check
    _
  $region43: #{introspective_lstm_forward.1} parent=0 // pred_check_branch
    %39 = sbr.rel (0) target = $region45
  $region44: #{introspective_lstm_forward.1} parent=0 // pred_region
    _
  $region45: #{introspective_lstm_forward.1} parent=0 // pred_fallthru
    _
  // Predicated region
  $region46: #{introspective_lstm_forward.1} parent=0 // pred_check
    _
  $region47: #{introspective_lstm_forward.1} parent=0 // pred_check_branch
    %41 = sbr.rel (0) target = $region49
  $region48: #{introspective_lstm_forward.1} parent=0 // pred_region
    _
  $region49: #{introspective_lstm_forward.1} parent=0 // pred_fallthru
    _
  // Predicated region
  $region50: #{introspective_lstm_forward.1} parent=0 // pred_check
    _
  $region51: #{introspective_lstm_forward.1} parent=0 // pred_check_branch
    %43 = sbr.rel (0) target = $region53
  $region52: #{introspective_lstm_forward.1} parent=0 // pred_region
    _
  $region53: #{introspective_lstm_forward.1} parent=0 // pred_fallthru
    _
  %v44 = vld [vmem:[%s0] sm:$0xff]
  %v45 = vld [vmem:[%s0 + $0x8] sm:$0xff]
  %v46 = vld [vmem:[%s0 + $0x10] sm:$0xff]
  %v47 = vld [vmem:[%s0 + $0x18] sm:$0xff]
  %v48 = vld [vmem:[%s0 + $0x20] sm:$0xff]
  %v49 = vld [vmem:[%s0 + $0x28] sm:$0xff]
  %v50 = vld [vmem:[%s0 + $0x30] sm:$0xff]
  %v51 = vld [vmem:[%s0 + $0x38] sm:$0xff]
  %v52 = vld [vmem:[%s1] sm:$0x77]
  %v53 = vld [vmem:[%s3] sm:$0x3]
  %v55 = vlaneseq
  %v56 = vshrl.u32 %v55, 7
  %v57 = vsub.s32 0, %v56
  %v58 = vrot.slane %v53, %v57
  %v59 = vlaneseq
  %v60 = vshrl.u32 %v59, 7
  %v61 = vsub.s32 1, %v60
  %v62 = vrot.slane %v53, %v61
  %v66 = vcombine.high %v52, %v52
  %vm67 = vcmask 23552
  %v69 = vsel %vm67, %v44, 0
  %v72 = vsel %vm67, %v45, 0
  %v75 = vsel %vm67, %v46, 0
  %v78 = vsel %vm67, %v47, 0
  %v81 = vsel %vm67, %v48, 0
  %v84 = vsel %vm67, %v49, 0
  %v87 = vsel %vm67, %v50, 0
  %v90 = vsel %vm67, %v51, 0
  %vm92 = vcmask 1042432
  %v93 = vsel %vm92, %v52, 0
  %v95 = vsel %vm92, %v66, 0
  %97 = vmatprep.subr.mxu0 0.0
  %98 = vmatpush1.msra.mxu0 0.0
  %99 = vmatprep.subr.mxu0 0.0
  %100 = vmatpush1.msra.mxu0 0.0
  %101 = vmatprep.subr.mxu0 0.0
  %102 = vmatpush1.msra.mxu0 0.0
  %103 = vmatprep.subr.mxu0 0.0
  %104 = vmatpush1.msra.mxu0 0.0
  %105 = vmatprep.subr.mxu0 0.0
  %106 = vmatpush1.msra.mxu0 0.0
  %107 = vmatprep.subr.mxu0 0.0
  %108 = vmatpush1.msra.mxu0 0.0
  %109 = vmatprep.subr.mxu0 0.0
  %110 = vmatpush1.msra.mxu0 0.0
  %111 = vmatprep.subr.mxu0 0.0
  %112 = vmatpush1.msra.mxu0 0.0
  %113 = vmatprep.subr.mxu0 0.0
  %114 = vmatpush1.msra.mxu0 0.0
  %115 = vmatprep.subr.mxu0 0.0
  %116 = vmatpush1.msra.mxu0 0.0
  %117 = vmatprep.subr.mxu0 0.0
  %118 = vmatpush1.msra.mxu0 0.0
  %119 = vmatprep.subr.mxu0 0.0
  %120 = vmatpush1.msra.mxu0 0.0
  %121 = vmatprep.subr.mxu0 0.0
  %122 = vmatpush1.msra.mxu0 0.0
  %123 = vmatprep.subr.mxu0 0.0
  %124 = vmatpush1.msra.mxu0 0.0
  %125 = vmatprep.subr.mxu0 0.0
  %126 = vmatpush1.msra.mxu0 0.0
  %127 = vmatprep.subr.mxu0 %v95
  %128 = vmatpush1.msra.mxu0 %v93
  %129 = vmatprep.subr.mxu0 0.0
  %130 = vmatpush2.msra.mxu0 0.0
  %131 = vmatprep.subr.mxu0 0.0
  %132 = vmatpush2.msra.mxu0 0.0
  %133 = vmatprep.subr.mxu0 0.0
  %134 = vmatpush2.msra.mxu0 0.0
  %135 = vmatprep.subr.mxu0 0.0
  %136 = vmatpush2.msra.mxu0 0.0
  %137 = vmatprep.subr.mxu0 0.0
  %138 = vmatpush2.msra.mxu0 0.0
  %139 = vmatprep.subr.mxu0 0.0
  %140 = vmatpush2.msra.mxu0 0.0
  %141 = vmatprep.subr.mxu0 0.0
  %142 = vmatpush2.msra.mxu0 0.0
  %143 = vmatprep.subr.mxu0 0.0
  %144 = vmatpush2.msra.mxu0 0.0
  %145 = vmatprep.subr.mxu0 0.0
  %146 = vmatpush2.msra.mxu0 0.0
  %147 = vmatprep.subr.mxu0 0.0
  %148 = vmatpush2.msra.mxu0 0.0
  %149 = vmatprep.subr.mxu0 0.0
  %150 = vmatpush2.msra.mxu0 0.0
  %151 = vmatprep.subr.mxu0 0.0
  %152 = vmatpush2.msra.mxu0 0.0
  %153 = vmatprep.subr.mxu0 0.0
  %154 = vmatpush2.msra.mxu0 0.0
  %155 = vmatprep.subr.mxu0 0.0
  %156 = vmatpush2.msra.mxu0 0.0
  %157 = vmatprep.subr.mxu0 0.0
  %158 = vmatpush2.msra.mxu0 0.0
  %159 = vmatprep.subr.mxu0 0.0
  %160 = vmatpush2.msra.mxu0 0.0
  %161 = vmatprep.mubr.f32.mxu0 0.0
  %162 = vmatmul.mubr.f32.gmra.mxu0 %v69
  %v163 = vpop.f32.mrf.mxu0
  %v164 = vadd.f32 %v58, %v163
  %v165 = vpop.f32.mrf.mxu0
  %v166 = vadd.f32 %v62, %v165
  %167 = vmatprep.mubr.f32.mxu0 0.0
  %168 = vmatmul.mubr.f32.gmra.mxu0 %v72
  %v169 = vpop.f32.mrf.mxu0
  %v170 = vadd.f32 %v58, %v169
  %v171 = vpop.f32.mrf.mxu0
  %v172 = vadd.f32 %v62, %v171
  %173 = vmatprep.mubr.f32.mxu0 0.0
  %174 = vmatmul.mubr.f32.gmra.mxu0 %v75
  %v175 = vpop.f32.mrf.mxu0
  %v176 = vadd.f32 %v58, %v175
  %v177 = vpop.f32.mrf.mxu0
  %v178 = vadd.f32 %v62, %v177
  %179 = vmatprep.mubr.f32.mxu0 0.0
  %180 = vmatmul.mubr.f32.gmra.mxu0 %v78
  %v181 = vpop.f32.mrf.mxu0
  %v182 = vadd.f32 %v58, %v181
  %v183 = vpop.f32.mrf.mxu0
  %v184 = vadd.f32 %v62, %v183
  %185 = vmatprep.mubr.f32.mxu0 0.0
  %186 = vmatmul.mubr.f32.gmra.mxu0 %v81
  %v187 = vpop.f32.mrf.mxu0
  %v188 = vadd.f32 %v58, %v187
  %v189 = vpop.f32.mrf.mxu0
  %v190 = vadd.f32 %v62, %v189
  %191 = vmatprep.mubr.f32.mxu0 0.0
  %192 = vmatmul.mubr.f32.gmra.mxu0 %v84
  %v193 = vpop.f32.mrf.mxu0
  %v194 = vadd.f32 %v58, %v193
  %v195 = vpop.f32.mrf.mxu0
  %v196 = vadd.f32 %v62, %v195
  %197 = vmatprep.mubr.f32.mxu0 0.0
  %198 = vmatmul.mubr.f32.gmra.mxu0 %v87
  %v199 = vpop.f32.mrf.mxu0
  %v200 = vadd.f32 %v58, %v199
  %v201 = vpop.f32.mrf.mxu0
  %v202 = vadd.f32 %v62, %v201
  %203 = vmatprep.mubr.f32.mxu0 0.0
  %204 = vmatmul.mubr.f32.gmra.mxu0 %v90
  %v205 = vpop.f32.mrf.mxu0
  %v206 = vadd.f32 %v58, %v205
  %v207 = vpop.f32.mrf.mxu0
  %v208 = vadd.f32 %v62, %v207
  %209 = vdwg.mxu0
  %v210 = vld [vmem:[%s2] sm:$0xff]
  %v211 = vld [vmem:[%s2 + $0x8] sm:$0xff]
  %v212 = vld [vmem:[%s2 + $0x10] sm:$0xff]
  %v213 = vld [vmem:[%s2 + $0x18] sm:$0xff]
  %v214 = vld [vmem:[%s2 + $0x20] sm:$0xff]
  %v215 = vld [vmem:[%s2 + $0x28] sm:$0xff]
  %v216 = vld [vmem:[%s2 + $0x30] sm:$0xff]
  %v217 = vld [vmem:[%s2 + $0x38] sm:$0xff]
  %v218 = vld [vmem:[%s2 + $0x40] sm:$0xff]
  %v219 = vld [vmem:[%s2 + $0x48] sm:$0xff]
  %v220 = vld [vmem:[%s2 + $0x50] sm:$0xff]
  %v221 = vld [vmem:[%s2 + $0x58] sm:$0xff]
  %v222 = vld [vmem:[%s2 + $0x60] sm:$0xff]
  %v223 = vld [vmem:[%s2 + $0x68] sm:$0xff]
  %v224 = vld [vmem:[%s2 + $0x70] sm:$0xff]
  %v225 = vld [vmem:[%s2 + $0x78] sm:$0xff]
  %vm226 = vcmask 523264
  %v228 = vsel %vm226, 0.0, 0
  %230 = vmatprep.subr.mxu0 0.0
  %231 = vmatpush1.msra.mxu0 0.0
  %232 = vmatprep.subr.mxu0 0.0
  %233 = vmatpush1.msra.mxu0 0.0
  %234 = vmatprep.subr.mxu0 0.0
  %235 = vmatpush1.msra.mxu0 0.0
  %236 = vmatprep.subr.mxu0 0.0
  %237 = vmatpush1.msra.mxu0 0.0
  %238 = vmatprep.subr.mxu0 0.0
  %239 = vmatpush1.msra.mxu0 0.0
  %240 = vmatprep.subr.mxu0 0.0
  %241 = vmatpush1.msra.mxu0 0.0
  %242 = vmatprep.subr.mxu0 0.0
  %243 = vmatpush1.msra.mxu0 0.0
  %244 = vmatprep.subr.mxu0 0.0
  %245 = vmatpush1.msra.mxu0 0.0
  %246 = vmatprep.subr.mxu0 %v225
  %247 = vmatpush1.msra.mxu0 %v224
  %248 = vmatprep.subr.mxu0 %v223
  %249 = vmatpush1.msra.mxu0 %v222
  %250 = vmatprep.subr.mxu0 %v221
  %251 = vmatpush1.msra.mxu0 %v220
  %252 = vmatprep.subr.mxu0 %v219
  %253 = vmatpush1.msra.mxu0 %v218
  %254 = vmatprep.subr.mxu0 %v217
  %255 = vmatpush1.msra.mxu0 %v216
  %256 = vmatprep.subr.mxu0 %v215
  %257 = vmatpush1.msra.mxu0 %v214
  %258 = vmatprep.subr.mxu0 %v213
  %259 = vmatpush1.msra.mxu0 %v212
  %260 = vmatprep.subr.mxu0 %v211
  %261 = vmatpush1.msra.mxu0 %v210
  %262 = vmatprep.subr.mxu0 0.0
  %263 = vmatpush2.msra.mxu0 0.0
  %264 = vmatprep.subr.mxu0 0.0
  %265 = vmatpush2.msra.mxu0 0.0
  %266 = vmatprep.subr.mxu0 0.0
  %267 = vmatpush2.msra.mxu0 0.0
  %268 = vmatprep.subr.mxu0 0.0
  %269 = vmatpush2.msra.mxu0 0.0
  %270 = vmatprep.subr.mxu0 0.0
  %271 = vmatpush2.msra.mxu0 0.0
  %272 = vmatprep.subr.mxu0 0.0
  %273 = vmatpush2.msra.mxu0 0.0
  %274 = vmatprep.subr.mxu0 0.0
  %275 = vmatpush2.msra.mxu0 0.0
  %276 = vmatprep.subr.mxu0 0.0
  %277 = vmatpush2.msra.mxu0 0.0
  %278 = vmatprep.subr.mxu0 0.0
  %279 = vmatpush2.msra.mxu0 0.0
  %280 = vmatprep.subr.mxu0 0.0
  %281 = vmatpush2.msra.mxu0 0.0
  %282 = vmatprep.subr.mxu0 0.0
  %283 = vmatpush2.msra.mxu0 0.0
  %284 = vmatprep.subr.mxu0 0.0
  %285 = vmatpush2.msra.mxu0 0.0
  %286 = vmatprep.subr.mxu0 0.0
  %287 = vmatpush2.msra.mxu0 0.0
  %288 = vmatprep.subr.mxu0 0.0
  %289 = vmatpush2.msra.mxu0 0.0
  %290 = vmatprep.subr.mxu0 0.0
  %291 = vmatpush2.msra.mxu0 0.0
  %292 = vmatprep.subr.mxu0 0.0
  %293 = vmatpush2.msra.mxu0 0.0
  %294 = vmatprep.mubr.f32.mxu0 0.0
  %295 = vmatmul.mubr.f32.gmra.mxu0 %v228
  %v296 = vpop.f32.mrf.mxu0
  %v297 = vadd.f32 0.0, %v296
  %v298 = vpop.f32.mrf.mxu0
  %v299 = vadd.f32 0.0, %v298
  %300 = vdwg.mxu0
  %v301 = vadd.f32 %v164, %v297
  %v302 = vadd.f32 %v208, %v299
  %v303 = vxor.u32 %v301, 2147483648
  %v304 = vxor.u32 %v302, 2147483648
  %v305 = vmul.f32 %v303, 1.442695
  %v306 = vpow.pop %v305
  %v307 = vmul.f32 %v304, 1.442695
  %v308 = vpow.pop %v307
  %v309 = vadd.f32 %v306, 1.0
  %v310 = vadd.f32 %v308, 1.0
  %v311 = vrcp.pop %v309
  %v312 = vmul.f32 1.0, %v311
  %v313 = vrcp.pop %v310
  %v314 = vmul.f32 1.0, %v313
  %v315 = vmul.f32 %v312, 2.0
  %v316 = vsub.f32 %v315, 1.0
  %v317 = vmul.f32 %v314, 2.0
  %v318 = vsub.f32 %v317, 1.0
  %v319 = vmul.f32 %v312, 0.0
  %321 = vrot.lane.b32.xlu0 %v316, 64
  %v322 = vpop.permute.xlu0 %321
  %v324 = vmul.f32 %v312, %v322
  %326 = vrot.lane.b32.xlu0 %v324, 32
  %v327 = vpop.permute.xlu0 %326
  %v329 = vadd.f32 %v319, %v327
  %v330 = vmul.f32 %v314, 0.0
  %332 = vrot.lane.b32.xlu0 %v318, 64
  %v333 = vpop.permute.xlu0 %332
  %v335 = vmul.f32 %v314, %v333
  %337 = vrot.lane.b32.xlu0 %v335, 32
  %v338 = vpop.permute.xlu0 %337
  %v340 = vadd.f32 %v330, %v338
  %v341 = vtanh.pop %v329
  %343 = vrot.lane.b32.xlu0 %v341, 64
  %v344 = vpop.permute.xlu0 %343
  %v346 = vmul.f32 %v312, %v344
  %v347 = vtanh.pop %v340
  %349 = vrot.lane.b32.xlu0 %v347, 64
  %v350 = vpop.permute.xlu0 %349
  %v352 = vmul.f32 %v314, %v350
  %354 = vrot.lane.b32.xlu0 %v346, 32
  %v355 = vpop.permute.xlu0 %354
  %vm357 = vcmask 261120
  %358 = vst.msk [vmem:[#allocation2] sm:$0xff] %vm357, %v355
  %360 = vrot.lane.b32.xlu0 %v352, 64
  %v361 = vpop.permute.xlu0 %360
  %vm363 = vcmask 523520
  %364 = vst.msk [vmem:[#allocation2 + $0x38] sm:$0xff] %vm363, %v361
  %v365 = vsel %vm357, %v355, %v361
  %v367 = vsel %vm226, %v365, 0
  %369 = vmatprep.subr.mxu0 0.0
  %370 = vmatpush1.msra.mxu0 0.0
  %371 = vmatprep.subr.mxu0 0.0
  %372 = vmatpush1.msra.mxu0 0.0
  %373 = vmatprep.subr.mxu0 0.0
  %374 = vmatpush1.msra.mxu0 0.0
  %375 = vmatprep.subr.mxu0 0.0
  %376 = vmatpush1.msra.mxu0 0.0
  %377 = vmatprep.subr.mxu0 0.0
  %378 = vmatpush1.msra.mxu0 0.0
  %379 = vmatprep.subr.mxu0 0.0
  %380 = vmatpush1.msra.mxu0 0.0
  %381 = vmatprep.subr.mxu0 0.0
  %382 = vmatpush1.msra.mxu0 0.0
  %383 = vmatprep.subr.mxu0 0.0
  %384 = vmatpush1.msra.mxu0 0.0
  %385 = vmatprep.subr.mxu0 %v225
  %386 = vmatpush1.msra.mxu0 %v224
  %387 = vmatprep.subr.mxu0 %v223
  %388 = vmatpush1.msra.mxu0 %v222
  %389 = vmatprep.subr.mxu0 %v221
  %390 = vmatpush1.msra.mxu0 %v220
  %391 = vmatprep.subr.mxu0 %v219
  %392 = vmatpush1.msra.mxu0 %v218
  %393 = vmatprep.subr.mxu0 %v217
  %394 = vmatpush1.msra.mxu0 %v216
  %395 = vmatprep.subr.mxu0 %v215
  %396 = vmatpush1.msra.mxu0 %v214
  %397 = vmatprep.subr.mxu0 %v213
  %398 = vmatpush1.msra.mxu0 %v212
  %399 = vmatprep.subr.mxu0 %v211
  %400 = vmatpush1.msra.mxu0 %v210
  %401 = vmatprep.subr.mxu0 0.0
  %402 = vmatpush2.msra.mxu0 0.0
  %403 = vmatprep.subr.mxu0 0.0
  %404 = vmatpush2.msra.mxu0 0.0
  %405 = vmatprep.subr.mxu0 0.0
  %406 = vmatpush2.msra.mxu0 0.0
  %407 = vmatprep.subr.mxu0 0.0
  %408 = vmatpush2.msra.mxu0 0.0
  %409 = vmatprep.subr.mxu0 0.0
  %410 = vmatpush2.msra.mxu0 0.0
  %411 = vmatprep.subr.mxu0 0.0
  %412 = vmatpush2.msra.mxu0 0.0
  %413 = vmatprep.subr.mxu0 0.0
  %414 = vmatpush2.msra.mxu0 0.0
  %415 = vmatprep.subr.mxu0 0.0
  %416 = vmatpush2.msra.mxu0 0.0
  %417 = vmatprep.subr.mxu0 0.0
  %418 = vmatpush2.msra.mxu0 0.0
  %419 = vmatprep.subr.mxu0 0.0
  %420 = vmatpush2.msra.mxu0 0.0
  %421 = vmatprep.subr.mxu0 0.0
  %422 = vmatpush2.msra.mxu0 0.0
  %423 = vmatprep.subr.mxu0 0.0
  %424 = vmatpush2.msra.mxu0 0.0
  %425 = vmatprep.subr.mxu0 0.0
  %426 = vmatpush2.msra.mxu0 0.0
  %427 = vmatprep.subr.mxu0 0.0
  %428 = vmatpush2.msra.mxu0 0.0
  %429 = vmatprep.subr.mxu0 0.0
  %430 = vmatpush2.msra.mxu0 0.0
  %431 = vmatprep.subr.mxu0 0.0
  %432 = vmatpush2.msra.mxu0 0.0
  %433 = vmatprep.mubr.f32.mxu0 0.0
  %434 = vmatmul.mubr.f32.gmra.mxu0 %v367
  %v435 = vpop.f32.mrf.mxu0
  %v436 = vadd.f32 0.0, %v435
  %v437 = vpop.f32.mrf.mxu0
  %v438 = vadd.f32 0.0, %v437
  %439 = vdwg.mxu0
  %v440 = vadd.f32 %v170, %v436
  %v441 = vadd.f32 %v202, %v438
  %v442 = vxor.u32 %v440, 2147483648
  %v443 = vxor.u32 %v441, 2147483648
  %v444 = vmul.f32 %v442, 1.442695
  %v445 = vpow.pop %v444
  %v446 = vmul.f32 %v443, 1.442695
  %v447 = vpow.pop %v446
  %v448 = vadd.f32 %v445, 1.0
  %v449 = vadd.f32 %v447, 1.0
  %v450 = vrcp.pop %v448
  %v451 = vmul.f32 1.0, %v450
  %v452 = vrcp.pop %v449
  %v453 = vmul.f32 1.0, %v452
  %v454 = vmul.f32 %v451, 2.0
  %v455 = vsub.f32 %v454, 1.0
  %v456 = vmul.f32 %v453, 2.0
  %v457 = vsub.f32 %v456, 1.0
  %v458 = vmul.f32 %v451, %v329
  %460 = vrot.lane.b32.xlu0 %v455, 64
  %v461 = vpop.permute.xlu0 %460
  %v463 = vmul.f32 %v451, %v461
  %465 = vrot.lane.b32.xlu0 %v463, 32
  %v466 = vpop.permute.xlu0 %465
  %v468 = vadd.f32 %v458, %v466
  %v469 = vmul.f32 %v453, %v340
  %471 = vrot.lane.b32.xlu0 %v457, 64
  %v472 = vpop.permute.xlu0 %471
  %v474 = vmul.f32 %v453, %v472
  %476 = vrot.lane.b32.xlu0 %v474, 32
  %v477 = vpop.permute.xlu0 %476
  %v479 = vadd.f32 %v469, %v477
  %v480 = vtanh.pop %v468
  %482 = vrot.lane.b32.xlu0 %v480, 64
  %v483 = vpop.permute.xlu0 %482
  %v485 = vmul.f32 %v451, %v483
  %v486 = vtanh.pop %v479
  %488 = vrot.lane.b32.xlu0 %v486, 64
  %v489 = vpop.permute.xlu0 %488
  %v491 = vmul.f32 %v453, %v489
  %493 = vrot.lane.b32.xlu0 %v485, 32
  %v494 = vpop.permute.xlu0 %493
  %496 = vst.msk [vmem:[#allocation2 + $0x8] sm:$0xff] %vm357, %v494
  %498 = vrot.lane.b32.xlu0 %v491, 64
  %v499 = vpop.permute.xlu0 %498
  %501 = vst.msk [vmem:[#allocation2 + $0x30] sm:$0xff] %vm363, %v499
  %v502 = vsel %vm357, %v494, %v499
  %v504 = vsel %vm226, %v502, 0
  %506 = vmatprep.subr.mxu0 0.0
  %507 = vmatpush1.msra.mxu0 0.0
  %508 = vmatprep.subr.mxu0 0.0
  %509 = vmatpush1.msra.mxu0 0.0
  %510 = vmatprep.subr.mxu0 0.0
  %511 = vmatpush1.msra.mxu0 0.0
  %512 = vmatprep.subr.mxu0 0.0
  %513 = vmatpush1.msra.mxu0 0.0
  %514 = vmatprep.subr.mxu0 0.0
  %515 = vmatpush1.msra.mxu0 0.0
  %516 = vmatprep.subr.mxu0 0.0
  %517 = vmatpush1.msra.mxu0 0.0
  %518 = vmatprep.subr.mxu0 0.0
  %519 = vmatpush1.msra.mxu0 0.0
  %520 = vmatprep.subr.mxu0 0.0
  %521 = vmatpush1.msra.mxu0 0.0
  %522 = vmatprep.subr.mxu0 %v225
  %523 = vmatpush1.msra.mxu0 %v224
  %524 = vmatprep.subr.mxu0 %v223
  %525 = vmatpush1.msra.mxu0 %v222
  %526 = vmatprep.subr.mxu0 %v221
  %527 = vmatpush1.msra.mxu0 %v220
  %528 = vmatprep.subr.mxu0 %v219
  %529 = vmatpush1.msra.mxu0 %v218
  %530 = vmatprep.subr.mxu0 %v217
  %531 = vmatpush1.msra.mxu0 %v216
  %532 = vmatprep.subr.mxu0 %v215
  %533 = vmatpush1.msra.mxu0 %v214
  %534 = vmatprep.subr.mxu0 %v213
  %535 = vmatpush1.msra.mxu0 %v212
  %536 = vmatprep.subr.mxu0 %v211
  %537 = vmatpush1.msra.mxu0 %v210
  %538 = vmatprep.subr.mxu0 0.0
  %539 = vmatpush2.msra.mxu0 0.0
  %540 = vmatprep.subr.mxu0 0.0
  %541 = vmatpush2.msra.mxu0 0.0
  %542 = vmatprep.subr.mxu0 0.0
  %543 = vmatpush2.msra.mxu0 0.0
  %544 = vmatprep.subr.mxu0 0.0
  %545 = vmatpush2.msra.mxu0 0.0
  %546 = vmatprep.subr.mxu0 0.0
  %547 = vmatpush2.msra.mxu0 0.0
  %548 = vmatprep.subr.mxu0 0.0
  %549 = vmatpush2.msra.mxu0 0.0
  %550 = vmatprep.subr.mxu0 0.0
  %551 = vmatpush2.msra.mxu0 0.0
  %552 = vmatprep.subr.mxu0 0.0
  %553 = vmatpush2.msra.mxu0 0.0
  %554 = vmatprep.subr.mxu0 0.0
  %555 = vmatpush2.msra.mxu0 0.0
  %556 = vmatprep.subr.mxu0 0.0
  %557 = vmatpush2.msra.mxu0 0.0
  %558 = vmatprep.subr.mxu0 0.0
  %559 = vmatpush2.msra.mxu0 0.0
  %560 = vmatprep.subr.mxu0 0.0
  %561 = vmatpush2.msra.mxu0 0.0
  %562 = vmatprep.subr.mxu0 0.0
  %563 = vmatpush2.msra.mxu0 0.0
  %564 = vmatprep.subr.mxu0 0.0
  %565 = vmatpush2.msra.mxu0 0.0
  %566 = vmatprep.subr.mxu0 0.0
  %567 = vmatpush2.msra.mxu0 0.0
  %568 = vmatprep.subr.mxu0 0.0
  %569 = vmatpush2.msra.mxu0 0.0
  %570 = vmatprep.mubr.f32.mxu0 0.0
  %571 = vmatmul.mubr.f32.gmra.mxu0 %v504
  %v572 = vpop.f32.mrf.mxu0
  %v573 = vadd.f32 0.0, %v572
  %v574 = vpop.f32.mrf.mxu0
  %v575 = vadd.f32 0.0, %v574
  %576 = vdwg.mxu0
  %v577 = vadd.f32 %v176, %v573
  %v578 = vadd.f32 %v196, %v575
  %v579 = vxor.u32 %v577, 2147483648
  %v580 = vxor.u32 %v578, 2147483648
  %v581 = vmul.f32 %v579, 1.442695
  %v582 = vpow.pop %v581
  %v583 = vmul.f32 %v580, 1.442695
  %v584 = vpow.pop %v583
  %v585 = vadd.f32 %v582, 1.0
  %v586 = vadd.f32 %v584, 1.0
  %v587 = vrcp.pop %v585
  %v588 = vmul.f32 1.0, %v587
  %v589 = vrcp.pop %v586
  %v590 = vmul.f32 1.0, %v589
  %v591 = vmul.f32 %v588, 2.0
  %v592 = vsub.f32 %v591, 1.0
  %v593 = vmul.f32 %v590, 2.0
  %v594 = vsub.f32 %v593, 1.0
  %v595 = vmul.f32 %v588, %v468
  %597 = vrot.lane.b32.xlu0 %v592, 64
  %v598 = vpop.permute.xlu0 %597
  %v600 = vmul.f32 %v588, %v598
  %602 = vrot.lane.b32.xlu0 %v600, 32
  %v603 = vpop.permute.xlu0 %602
  %v605 = vadd.f32 %v595, %v603
  %v606 = vmul.f32 %v590, %v479
  %608 = vrot.lane.b32.xlu0 %v594, 64
  %v609 = vpop.permute.xlu0 %608
  %v611 = vmul.f32 %v590, %v609
  %613 = vrot.lane.b32.xlu0 %v611, 32
  %v614 = vpop.permute.xlu0 %613
  %v616 = vadd.f32 %v606, %v614
  %v617 = vtanh.pop %v605
  %619 = vrot.lane.b32.xlu0 %v617, 64
  %v620 = vpop.permute.xlu0 %619
  %v622 = vmul.f32 %v588, %v620
  %v623 = vtanh.pop %v616
  %625 = vrot.lane.b32.xlu0 %v623, 64
  %v626 = vpop.permute.xlu0 %625
  %v628 = vmul.f32 %v590, %v626
  %630 = vrot.lane.b32.xlu0 %v622, 32
  %v631 = vpop.permute.xlu0 %630
  %633 = vst.msk [vmem:[#allocation2 + $0x10] sm:$0xff] %vm357, %v631
  %635 = vrot.lane.b32.xlu0 %v628, 64
  %v636 = vpop.permute.xlu0 %635
  %638 = vst.msk [vmem:[#allocation2 + $0x28] sm:$0xff] %vm363, %v636
  %v639 = vsel %vm357, %v631, %v636
  %v641 = vsel %vm226, %v639, 0
  %643 = vmatprep.subr.mxu0 0.0
  %644 = vmatpush1.msra.mxu0 0.0
  %645 = vmatprep.subr.mxu0 0.0
  %646 = vmatpush1.msra.mxu0 0.0
  %647 = vmatprep.subr.mxu0 0.0
  %648 = vmatpush1.msra.mxu0 0.0
  %649 = vmatprep.subr.mxu0 0.0
  %650 = vmatpush1.msra.mxu0 0.0
  %651 = vmatprep.subr.mxu0 0.0
  %652 = vmatpush1.msra.mxu0 0.0
  %653 = vmatprep.subr.mxu0 0.0
  %654 = vmatpush1.msra.mxu0 0.0
  %655 = vmatprep.subr.mxu0 0.0
  %656 = vmatpush1.msra.mxu0 0.0
  %657 = vmatprep.subr.mxu0 0.0
  %658 = vmatpush1.msra.mxu0 0.0
  %659 = vmatprep.subr.mxu0 %v225
  %660 = vmatpush1.msra.mxu0 %v224
  %661 = vmatprep.subr.mxu0 %v223
  %662 = vmatpush1.msra.mxu0 %v222
  %663 = vmatprep.subr.mxu0 %v221
  %664 = vmatpush1.msra.mxu0 %v220
  %665 = vmatprep.subr.mxu0 %v219
  %666 = vmatpush1.msra.mxu0 %v218
  %667 = vmatprep.subr.mxu0 %v217
  %668 = vmatpush1.msra.mxu0 %v216
  %669 = vmatprep.subr.mxu0 %v215
  %670 = vmatpush1.msra.mxu0 %v214
  %671 = vmatprep.subr.mxu0 %v213
  %672 = vmatpush1.msra.mxu0 %v212
  %673 = vmatprep.subr.mxu0 %v211
  %674 = vmatpush1.msra.mxu0 %v210
  %675 = vmatprep.subr.mxu0 0.0
  %676 = vmatpush2.msra.mxu0 0.0
  %677 = vmatprep.subr.mxu0 0.0
  %678 = vmatpush2.msra.mxu0 0.0
  %679 = vmatprep.subr.mxu0 0.0
  %680 = vmatpush2.msra.mxu0 0.0
  %681 = vmatprep.subr.mxu0 0.0
  %682 = vmatpush2.msra.mxu0 0.0
  %683 = vmatprep.subr.mxu0 0.0
  %684 = vmatpush2.msra.mxu0 0.0
  %685 = vmatprep.subr.mxu0 0.0
  %686 = vmatpush2.msra.mxu0 0.0
  %687 = vmatprep.subr.mxu0 0.0
  %688 = vmatpush2.msra.mxu0 0.0
  %689 = vmatprep.subr.mxu0 0.0
  %690 = vmatpush2.msra.mxu0 0.0
  %691 = vmatprep.subr.mxu0 0.0
  %692 = vmatpush2.msra.mxu0 0.0
  %693 = vmatprep.subr.mxu0 0.0
  %694 = vmatpush2.msra.mxu0 0.0
  %695 = vmatprep.subr.mxu0 0.0
  %696 = vmatpush2.msra.mxu0 0.0
  %697 = vmatprep.subr.mxu0 0.0
  %698 = vmatpush2.msra.mxu0 0.0
  %699 = vmatprep.subr.mxu0 0.0
  %700 = vmatpush2.msra.mxu0 0.0
  %701 = vmatprep.subr.mxu0 0.0
  %702 = vmatpush2.msra.mxu0 0.0
  %703 = vmatprep.subr.mxu0 0.0
  %704 = vmatpush2.msra.mxu0 0.0
  %705 = vmatprep.subr.mxu0 0.0
  %706 = vmatpush2.msra.mxu0 0.0
  %707 = vmatprep.mubr.f32.mxu0 0.0
  %708 = vmatmul.mubr.f32.gmra.mxu0 %v641
  %v709 = vpop.f32.mrf.mxu0
  %v710 = vadd.f32 0.0, %v709
  %v711 = vpop.f32.mrf.mxu0
  %v712 = vadd.f32 0.0, %v711
  %713 = vdwg.mxu0
  %v714 = vadd.f32 %v182, %v710
  %v715 = vadd.f32 %v190, %v712
  %v716 = vxor.u32 %v714, 2147483648
  %v717 = vxor.u32 %v715, 2147483648
  %v718 = vmul.f32 %v716, 1.442695
  %v719 = vpow.pop %v718
  %v720 = vmul.f32 %v717, 1.442695
  %v721 = vpow.pop %v720
  %v722 = vadd.f32 %v719, 1.0
  %v723 = vadd.f32 %v721, 1.0
  %v724 = vrcp.pop %v722
  %v725 = vmul.f32 1.0, %v724
  %v726 = vrcp.pop %v723
  %v727 = vmul.f32 1.0, %v726
  %v728 = vmul.f32 %v725, 2.0
  %v729 = vsub.f32 %v728, 1.0
  %v730 = vmul.f32 %v727, 2.0
  %v731 = vsub.f32 %v730, 1.0
  %v732 = vmul.f32 %v725, %v605
  %734 = vrot.lane.b32.xlu0 %v729, 64
  %v735 = vpop.permute.xlu0 %734
  %v737 = vmul.f32 %v725, %v735
  %739 = vrot.lane.b32.xlu0 %v737, 32
  %v740 = vpop.permute.xlu0 %739
  %v742 = vadd.f32 %v732, %v740
  %v743 = vmul.f32 %v727, %v616
  %745 = vrot.lane.b32.xlu0 %v731, 64
  %v746 = vpop.permute.xlu0 %745
  %v748 = vmul.f32 %v727, %v746
  %750 = vrot.lane.b32.xlu0 %v748, 32
  %v751 = vpop.permute.xlu0 %750
  %v753 = vadd.f32 %v743, %v751
  %v754 = vtanh.pop %v742
  %756 = vrot.lane.b32.xlu0 %v754, 64
  %v757 = vpop.permute.xlu0 %756
  %v759 = vmul.f32 %v725, %v757
  %v760 = vtanh.pop %v753
  %762 = vrot.lane.b32.xlu0 %v760, 64
  %v763 = vpop.permute.xlu0 %762
  %v765 = vmul.f32 %v727, %v763
  %767 = vrot.lane.b32.xlu0 %v759, 32
  %v768 = vpop.permute.xlu0 %767
  %770 = vst.msk [vmem:[#allocation2 + $0x18] sm:$0xff] %vm357, %v768
  %772 = vrot.lane.b32.xlu0 %v765, 64
  %v773 = vpop.permute.xlu0 %772
  %775 = vst.msk [vmem:[#allocation2 + $0x20] sm:$0xff] %vm363, %v773
  %v776 = vsel %vm357, %v768, %v773
  %v778 = vsel %vm226, %v776, 0
  %780 = vmatprep.subr.mxu0 0.0
  %781 = vmatpush1.msra.mxu0 0.0
  %782 = vmatprep.subr.mxu0 0.0
  %783 = vmatpush1.msra.mxu0 0.0
  %784 = vmatprep.subr.mxu0 0.0
  %785 = vmatpush1.msra.mxu0 0.0
  %786 = vmatprep.subr.mxu0 0.0
  %787 = vmatpush1.msra.mxu0 0.0
  %788 = vmatprep.subr.mxu0 0.0
  %789 = vmatpush1.msra.mxu0 0.0
  %790 = vmatprep.subr.mxu0 0.0
  %791 = vmatpush1.msra.mxu0 0.0
  %792 = vmatprep.subr.mxu0 0.0
  %793 = vmatpush1.msra.mxu0 0.0
  %794 = vmatprep.subr.mxu0 0.0
  %795 = vmatpush1.msra.mxu0 0.0
  %796 = vmatprep.subr.mxu0 %v225
  %797 = vmatpush1.msra.mxu0 %v224
  %798 = vmatprep.subr.mxu0 %v223
  %799 = vmatpush1.msra.mxu0 %v222
  %800 = vmatprep.subr.mxu0 %v221
  %801 = vmatpush1.msra.mxu0 %v220
  %802 = vmatprep.subr.mxu0 %v219
  %803 = vmatpush1.msra.mxu0 %v218
  %804 = vmatprep.subr.mxu0 %v217
  %805 = vmatpush1.msra.mxu0 %v216
  %806 = vmatprep.subr.mxu0 %v215
  %807 = vmatpush1.msra.mxu0 %v214
  %808 = vmatprep.subr.mxu0 %v213
  %809 = vmatpush1.msra.mxu0 %v212
  %810 = vmatprep.subr.mxu0 %v211
  %811 = vmatpush1.msra.mxu0 %v210
  %812 = vmatprep.subr.mxu0 0.0
  %813 = vmatpush2.msra.mxu0 0.0
  %814 = vmatprep.subr.mxu0 0.0
  %815 = vmatpush2.msra.mxu0 0.0
  %816 = vmatprep.subr.mxu0 0.0
  %817 = vmatpush2.msra.mxu0 0.0
  %818 = vmatprep.subr.mxu0 0.0
  %819 = vmatpush2.msra.mxu0 0.0
  %820 = vmatprep.subr.mxu0 0.0
  %821 = vmatpush2.msra.mxu0 0.0
  %822 = vmatprep.subr.mxu0 0.0
  %823 = vmatpush2.msra.mxu0 0.0
  %824 = vmatprep.subr.mxu0 0.0
  %825 = vmatpush2.msra.mxu0 0.0
  %826 = vmatprep.subr.mxu0 0.0
  %827 = vmatpush2.msra.mxu0 0.0
  %828 = vmatprep.subr.mxu0 0.0
  %829 = vmatpush2.msra.mxu0 0.0
  %830 = vmatprep.subr.mxu0 0.0
  %831 = vmatpush2.msra.mxu0 0.0
  %832 = vmatprep.subr.mxu0 0.0
  %833 = vmatpush2.msra.mxu0 0.0
  %834 = vmatprep.subr.mxu0 0.0
  %835 = vmatpush2.msra.mxu0 0.0
  %836 = vmatprep.subr.mxu0 0.0
  %837 = vmatpush2.msra.mxu0 0.0
  %838 = vmatprep.subr.mxu0 0.0
  %839 = vmatpush2.msra.mxu0 0.0
  %840 = vmatprep.subr.mxu0 0.0
  %841 = vmatpush2.msra.mxu0 0.0
  %842 = vmatprep.subr.mxu0 0.0
  %843 = vmatpush2.msra.mxu0 0.0
  %844 = vmatprep.mubr.f32.mxu0 0.0
  %845 = vmatmul.mubr.f32.gmra.mxu0 %v778
  %v846 = vpop.f32.mrf.mxu0
  %v847 = vadd.f32 0.0, %v846
  %v848 = vpop.f32.mrf.mxu0
  %v849 = vadd.f32 0.0, %v848
  %850 = vdwg.mxu0
  %v851 = vadd.f32 %v188, %v847
  %v852 = vadd.f32 %v184, %v849
  %v853 = vxor.u32 %v851, 2147483648
  %v854 = vxor.u32 %v852, 2147483648
  %v855 = vmul.f32 %v853, 1.442695
  %v856 = vpow.pop %v855
  %v857 = vmul.f32 %v854, 1.442695
  %v858 = vpow.pop %v857
  %v859 = vadd.f32 %v856, 1.0
  %v860 = vadd.f32 %v858, 1.0
  %v861 = vrcp.pop %v859
  %v862 = vmul.f32 1.0, %v861
  %v863 = vrcp.pop %v860
  %v864 = vmul.f32 1.0, %v863
  %v865 = vmul.f32 %v862, 2.0
  %v866 = vsub.f32 %v865, 1.0
  %v867 = vmul.f32 %v864, 2.0
  %v868 = vsub.f32 %v867, 1.0
  %v869 = vmul.f32 %v862, %v742
  %871 = vrot.lane.b32.xlu0 %v866, 64
  %v872 = vpop.permute.xlu0 %871
  %v874 = vmul.f32 %v862, %v872
  %876 = vrot.lane.b32.xlu0 %v874, 32
  %v877 = vpop.permute.xlu0 %876
  %v879 = vadd.f32 %v869, %v877
  %v880 = vmul.f32 %v864, %v753
  %882 = vrot.lane.b32.xlu0 %v868, 64
  %v883 = vpop.permute.xlu0 %882
  %v885 = vmul.f32 %v864, %v883
  %887 = vrot.lane.b32.xlu0 %v885, 32
  %v888 = vpop.permute.xlu0 %887
  %v890 = vadd.f32 %v880, %v888
  %v891 = vtanh.pop %v879
  %893 = vrot.lane.b32.xlu0 %v891, 64
  %v894 = vpop.permute.xlu0 %893
  %v896 = vmul.f32 %v862, %v894
  %v897 = vtanh.pop %v890
  %899 = vrot.lane.b32.xlu0 %v897, 64
  %v900 = vpop.permute.xlu0 %899
  %v902 = vmul.f32 %v864, %v900
  %904 = vrot.lane.b32.xlu0 %v896, 32
  %v905 = vpop.permute.xlu0 %904
  %907 = vst.msk [vmem:[#allocation2 + $0x20] sm:$0xff] %vm357, %v905
  %909 = vrot.lane.b32.xlu0 %v902, 64
  %v910 = vpop.permute.xlu0 %909
  %912 = vst.msk [vmem:[#allocation2 + $0x18] sm:$0xff] %vm363, %v910
  %v913 = vsel %vm357, %v905, %v910
  %v915 = vsel %vm226, %v913, 0
  %917 = vmatprep.subr.mxu0 0.0
  %918 = vmatpush1.msra.mxu0 0.0
  %919 = vmatprep.subr.mxu0 0.0
  %920 = vmatpush1.msra.mxu0 0.0
  %921 = vmatprep.subr.mxu0 0.0
  %922 = vmatpush1.msra.mxu0 0.0
  %923 = vmatprep.subr.mxu0 0.0
  %924 = vmatpush1.msra.mxu0 0.0
  %925 = vmatprep.subr.mxu0 0.0
  %926 = vmatpush1.msra.mxu0 0.0
  %927 = vmatprep.subr.mxu0 0.0
  %928 = vmatpush1.msra.mxu0 0.0
  %929 = vmatprep.subr.mxu0 0.0
  %930 = vmatpush1.msra.mxu0 0.0
  %931 = vmatprep.subr.mxu0 0.0
  %932 = vmatpush1.msra.mxu0 0.0
  %933 = vmatprep.subr.mxu0 %v225
  %934 = vmatpush1.msra.mxu0 %v224
  %935 = vmatprep.subr.mxu0 %v223
  %936 = vmatpush1.msra.mxu0 %v222
  %937 = vmatprep.subr.mxu0 %v221
  %938 = vmatpush1.msra.mxu0 %v220
  %939 = vmatprep.subr.mxu0 %v219
  %940 = vmatpush1.msra.mxu0 %v218
  %941 = vmatprep.subr.mxu0 %v217
  %942 = vmatpush1.msra.mxu0 %v216
  %943 = vmatprep.subr.mxu0 %v215
  %944 = vmatpush1.msra.mxu0 %v214
  %945 = vmatprep.subr.mxu0 %v213
  %946 = vmatpush1.msra.mxu0 %v212
  %947 = vmatprep.subr.mxu0 %v211
  %948 = vmatpush1.msra.mxu0 %v210
  %949 = vmatprep.subr.mxu0 0.0
  %950 = vmatpush2.msra.mxu0 0.0
  %951 = vmatprep.subr.mxu0 0.0
  %952 = vmatpush2.msra.mxu0 0.0
  %953 = vmatprep.subr.mxu0 0.0
  %954 = vmatpush2.msra.mxu0 0.0
  %955 = vmatprep.subr.mxu0 0.0
  %956 = vmatpush2.msra.mxu0 0.0
  %957 = vmatprep.subr.mxu0 0.0
  %958 = vmatpush2.msra.mxu0 0.0
  %959 = vmatprep.subr.mxu0 0.0
  %960 = vmatpush2.msra.mxu0 0.0
  %961 = vmatprep.subr.mxu0 0.0
  %962 = vmatpush2.msra.mxu0 0.0
  %963 = vmatprep.subr.mxu0 0.0
  %964 = vmatpush2.msra.mxu0 0.0
  %965 = vmatprep.subr.mxu0 0.0
  %966 = vmatpush2.msra.mxu0 0.0
  %967 = vmatprep.subr.mxu0 0.0
  %968 = vmatpush2.msra.mxu0 0.0
  %969 = vmatprep.subr.mxu0 0.0
  %970 = vmatpush2.msra.mxu0 0.0
  %971 = vmatprep.subr.mxu0 0.0
  %972 = vmatpush2.msra.mxu0 0.0
  %973 = vmatprep.subr.mxu0 0.0
  %974 = vmatpush2.msra.mxu0 0.0
  %975 = vmatprep.subr.mxu0 0.0
  %976 = vmatpush2.msra.mxu0 0.0
  %977 = vmatprep.subr.mxu0 0.0
  %978 = vmatpush2.msra.mxu0 0.0
  %979 = vmatprep.subr.mxu0 0.0
  %980 = vmatpush2.msra.mxu0 0.0
  %981 = vmatprep.mubr.f32.mxu0 0.0
  %982 = vmatmul.mubr.f32.gmra.mxu0 %v915
  %v983 = vpop.f32.mrf.mxu0
  %v984 = vadd.f32 0.0, %v983
  %v985 = vpop.f32.mrf.mxu0
  %v986 = vadd.f32 0.0, %v985
  %987 = vdwg.mxu0
  %v988 = vadd.f32 %v194, %v984
  %v989 = vadd.f32 %v178, %v986
  %v990 = vxor.u32 %v988, 2147483648
  %v991 = vxor.u32 %v989, 2147483648
  %v992 = vmul.f32 %v990, 1.442695
  %v993 = vpow.pop %v992
  %v994 = vmul.f32 %v991, 1.442695
  %v995 = vpow.pop %v994
  %v996 = vadd.f32 %v993, 1.0
  %v997 = vadd.f32 %v995, 1.0
  %v998 = vrcp.pop %v996
  %v999 = vmul.f32 1.0, %v998
  %v1000 = vrcp.pop %v997
  %v1001 = vmul.f32 1.0, %v1000
  %v1002 = vmul.f32 %v999, 2.0
  %v1003 = vsub.f32 %v1002, 1.0
  %v1004 = vmul.f32 %v1001, 2.0
  %v1005 = vsub.f32 %v1004, 1.0
  %v1006 = vmul.f32 %v999, %v879
  %1008 = vrot.lane.b32.xlu0 %v1003, 64
  %v1009 = vpop.permute.xlu0 %1008
  %v1011 = vmul.f32 %v999, %v1009
  %1013 = vrot.lane.b32.xlu0 %v1011, 32
  %v1014 = vpop.permute.xlu0 %1013
  %v1016 = vadd.f32 %v1006, %v1014
  %v1017 = vmul.f32 %v1001, %v890
  %1019 = vrot.lane.b32.xlu0 %v1005, 64
  %v1020 = vpop.permute.xlu0 %1019
  %v1022 = vmul.f32 %v1001, %v1020
  %1024 = vrot.lane.b32.xlu0 %v1022, 32
  %v1025 = vpop.permute.xlu0 %1024
  %v1027 = vadd.f32 %v1017, %v1025
  %v1028 = vtanh.pop %v1016
  %1030 = vrot.lane.b32.xlu0 %v1028, 64
  %v1031 = vpop.permute.xlu0 %1030
  %v1033 = vmul.f32 %v999, %v1031
  %v1034 = vtanh.pop %v1027
  %1036 = vrot.lane.b32.xlu0 %v1034, 64
  %v1037 = vpop.permute.xlu0 %1036
  %v1039 = vmul.f32 %v1001, %v1037
  %1041 = vrot.lane.b32.xlu0 %v1033, 32
  %v1042 = vpop.permute.xlu0 %1041
  %1044 = vst.msk [vmem:[#allocation2 + $0x28] sm:$0xff] %vm357, %v1042
  %1046 = vrot.lane.b32.xlu0 %v1039, 64
  %v1047 = vpop.permute.xlu0 %1046
  %1049 = vst.msk [vmem:[#allocation2 + $0x10] sm:$0xff] %vm363, %v1047
  %v1050 = vsel %vm357, %v1042, %v1047
  %v1052 = vsel %vm226, %v1050, 0
  %1054 = vmatprep.subr.mxu0 0.0
  %1055 = vmatpush1.msra.mxu0 0.0
  %1056 = vmatprep.subr.mxu0 0.0
  %1057 = vmatpush1.msra.mxu0 0.0
  %1058 = vmatprep.subr.mxu0 0.0
  %1059 = vmatpush1.msra.mxu0 0.0
  %1060 = vmatprep.subr.mxu0 0.0
  %1061 = vmatpush1.msra.mxu0 0.0
  %1062 = vmatprep.subr.mxu0 0.0
  %1063 = vmatpush1.msra.mxu0 0.0
  %1064 = vmatprep.subr.mxu0 0.0
  %1065 = vmatpush1.msra.mxu0 0.0
  %1066 = vmatprep.subr.mxu0 0.0
  %1067 = vmatpush1.msra.mxu0 0.0
  %1068 = vmatprep.subr.mxu0 0.0
  %1069 = vmatpush1.msra.mxu0 0.0
  %1070 = vmatprep.subr.mxu0 %v225
  %1071 = vmatpush1.msra.mxu0 %v224
  %1072 = vmatprep.subr.mxu0 %v223
  %1073 = vmatpush1.msra.mxu0 %v222
  %1074 = vmatprep.subr.mxu0 %v221
  %1075 = vmatpush1.msra.mxu0 %v220
  %1076 = vmatprep.subr.mxu0 %v219
  %1077 = vmatpush1.msra.mxu0 %v218
  %1078 = vmatprep.subr.mxu0 %v217
  %1079 = vmatpush1.msra.mxu0 %v216
  %1080 = vmatprep.subr.mxu0 %v215
  %1081 = vmatpush1.msra.mxu0 %v214
  %1082 = vmatprep.subr.mxu0 %v213
  %1083 = vmatpush1.msra.mxu0 %v212
  %1084 = vmatprep.subr.mxu0 %v211
  %1085 = vmatpush1.msra.mxu0 %v210
  %1086 = vmatprep.subr.mxu0 0.0
  %1087 = vmatpush2.msra.mxu0 0.0
  %1088 = vmatprep.subr.mxu0 0.0
  %1089 = vmatpush2.msra.mxu0 0.0
  %1090 = vmatprep.subr.mxu0 0.0
  %1091 = vmatpush2.msra.mxu0 0.0
  %1092 = vmatprep.subr.mxu0 0.0
  %1093 = vmatpush2.msra.mxu0 0.0
  %1094 = vmatprep.subr.mxu0 0.0
  %1095 = vmatpush2.msra.mxu0 0.0
  %1096 = vmatprep.subr.mxu0 0.0
  %1097 = vmatpush2.msra.mxu0 0.0
  %1098 = vmatprep.subr.mxu0 0.0
  %1099 = vmatpush2.msra.mxu0 0.0
  %1100 = vmatprep.subr.mxu0 0.0
  %1101 = vmatpush2.msra.mxu0 0.0
  %1102 = vmatprep.subr.mxu0 0.0
  %1103 = vmatpush2.msra.mxu0 0.0
  %1104 = vmatprep.subr.mxu0 0.0
  %1105 = vmatpush2.msra.mxu0 0.0
  %1106 = vmatprep.subr.mxu0 0.0
  %1107 = vmatpush2.msra.mxu0 0.0
  %1108 = vmatprep.subr.mxu0 0.0
  %1109 = vmatpush2.msra.mxu0 0.0
  %1110 = vmatprep.subr.mxu0 0.0
  %1111 = vmatpush2.msra.mxu0 0.0
  %1112 = vmatprep.subr.mxu0 0.0
  %1113 = vmatpush2.msra.mxu0 0.0
  %1114 = vmatprep.subr.mxu0 0.0
  %1115 = vmatpush2.msra.mxu0 0.0
  %1116 = vmatprep.subr.mxu0 0.0
  %1117 = vmatpush2.msra.mxu0 0.0
  %1118 = vmatprep.mubr.f32.mxu0 0.0
  %1119 = vmatmul.mubr.f32.gmra.mxu0 %v1052
  %v1120 = vpop.f32.mrf.mxu0
  %v1121 = vadd.f32 0.0, %v1120
  %v1122 = vpop.f32.mrf.mxu0
  %v1123 = vadd.f32 0.0, %v1122
  %1124 = vdwg.mxu0
  %v1125 = vadd.f32 %v200, %v1121
  %v1126 = vadd.f32 %v172, %v1123
  %v1127 = vxor.u32 %v1125, 2147483648
  %v1128 = vxor.u32 %v1126, 2147483648
  %v1129 = vmul.f32 %v1127, 1.442695
  %v1130 = vpow.pop %v1129
  %v1131 = vmul.f32 %v1128, 1.442695
  %v1132 = vpow.pop %v1131
  %v1133 = vadd.f32 %v1130, 1.0
  %v1134 = vadd.f32 %v1132, 1.0
  %v1135 = vrcp.pop %v1133
  %v1136 = vmul.f32 1.0, %v1135
  %v1137 = vrcp.pop %v1134
  %v1138 = vmul.f32 1.0, %v1137
  %v1139 = vmul.f32 %v1136, 2.0
  %v1140 = vsub.f32 %v1139, 1.0
  %v1141 = vmul.f32 %v1138, 2.0
  %v1142 = vsub.f32 %v1141, 1.0
  %v1143 = vmul.f32 %v1136, %v1016
  %1145 = vrot.lane.b32.xlu0 %v1140, 64
  %v1146 = vpop.permute.xlu0 %1145
  %v1148 = vmul.f32 %v1136, %v1146
  %1150 = vrot.lane.b32.xlu0 %v1148, 32
  %v1151 = vpop.permute.xlu0 %1150
  %v1153 = vadd.f32 %v1143, %v1151
  %v1154 = vmul.f32 %v1138, %v1027
  %1156 = vrot.lane.b32.xlu0 %v1142, 64
  %v1157 = vpop.permute.xlu0 %1156
  %v1159 = vmul.f32 %v1138, %v1157
  %1161 = vrot.lane.b32.xlu0 %v1159, 32
  %v1162 = vpop.permute.xlu0 %1161
  %v1164 = vadd.f32 %v1154, %v1162
  %v1165 = vtanh.pop %v1153
  %1167 = vrot.lane.b32.xlu0 %v1165, 64
  %v1168 = vpop.permute.xlu0 %1167
  %v1170 = vmul.f32 %v1136, %v1168
  %v1171 = vtanh.pop %v1164
  %1173 = vrot.lane.b32.xlu0 %v1171, 64
  %v1174 = vpop.permute.xlu0 %1173
  %v1176 = vmul.f32 %v1138, %v1174
  %1178 = vrot.lane.b32.xlu0 %v1170, 32
  %v1179 = vpop.permute.xlu0 %1178
  %1181 = vst.msk [vmem:[#allocation2 + $0x30] sm:$0xff] %vm357, %v1179
  %1183 = vrot.lane.b32.xlu0 %v1176, 64
  %v1184 = vpop.permute.xlu0 %1183
  %1186 = vst.msk [vmem:[#allocation2 + $0x8] sm:$0xff] %vm363, %v1184
  %v1187 = vsel %vm357, %v1179, %v1184
  %v1189 = vsel %vm226, %v1187, 0
  %1191 = vmatprep.subr.mxu0 0.0
  %1192 = vmatpush1.msra.mxu0 0.0
  %1193 = vmatprep.subr.mxu0 0.0
  %1194 = vmatpush1.msra.mxu0 0.0
  %1195 = vmatprep.subr.mxu0 0.0
  %1196 = vmatpush1.msra.mxu0 0.0
  %1197 = vmatprep.subr.mxu0 0.0
  %1198 = vmatpush1.msra.mxu0 0.0
  %1199 = vmatprep.subr.mxu0 0.0
  %1200 = vmatpush1.msra.mxu0 0.0
  %1201 = vmatprep.subr.mxu0 0.0
  %1202 = vmatpush1.msra.mxu0 0.0
  %1203 = vmatprep.subr.mxu0 0.0
  %1204 = vmatpush1.msra.mxu0 0.0
  %1205 = vmatprep.subr.mxu0 0.0
  %1206 = vmatpush1.msra.mxu0 0.0
  %1207 = vmatprep.subr.mxu0 %v225
  %1208 = vmatpush1.msra.mxu0 %v224
  %1209 = vmatprep.subr.mxu0 %v223
  %1210 = vmatpush1.msra.mxu0 %v222
  %1211 = vmatprep.subr.mxu0 %v221
  %1212 = vmatpush1.msra.mxu0 %v220
  %1213 = vmatprep.subr.mxu0 %v219
  %1214 = vmatpush1.msra.mxu0 %v218
  %1215 = vmatprep.subr.mxu0 %v217
  %1216 = vmatpush1.msra.mxu0 %v216
  %1217 = vmatprep.subr.mxu0 %v215
  %1218 = vmatpush1.msra.mxu0 %v214
  %1219 = vmatprep.subr.mxu0 %v213
  %1220 = vmatpush1.msra.mxu0 %v212
  %1221 = vmatprep.subr.mxu0 %v211
  %1222 = vmatpush1.msra.mxu0 %v210
  %1223 = vmatprep.subr.mxu0 0.0
  %1224 = vmatpush2.msra.mxu0 0.0
  %1225 = vmatprep.subr.mxu0 0.0
  %1226 = vmatpush2.msra.mxu0 0.0
  %1227 = vmatprep.subr.mxu0 0.0
  %1228 = vmatpush2.msra.mxu0 0.0
  %1229 = vmatprep.subr.mxu0 0.0
  %1230 = vmatpush2.msra.mxu0 0.0
  %1231 = vmatprep.subr.mxu0 0.0
  %1232 = vmatpush2.msra.mxu0 0.0
  %1233 = vmatprep.subr.mxu0 0.0
  %1234 = vmatpush2.msra.mxu0 0.0
  %1235 = vmatprep.subr.mxu0 0.0
  %1236 = vmatpush2.msra.mxu0 0.0
  %1237 = vmatprep.subr.mxu0 0.0
  %1238 = vmatpush2.msra.mxu0 0.0
  %1239 = vmatprep.subr.mxu0 0.0
  %1240 = vmatpush2.msra.mxu0 0.0
  %1241 = vmatprep.subr.mxu0 0.0
  %1242 = vmatpush2.msra.mxu0 0.0
  %1243 = vmatprep.subr.mxu0 0.0
  %1244 = vmatpush2.msra.mxu0 0.0
  %1245 = vmatprep.subr.mxu0 0.0
  %1246 = vmatpush2.msra.mxu0 0.0
  %1247 = vmatprep.subr.mxu0 0.0
  %1248 = vmatpush2.msra.mxu0 0.0
  %1249 = vmatprep.subr.mxu0 0.0
  %1250 = vmatpush2.msra.mxu0 0.0
  %1251 = vmatprep.subr.mxu0 0.0
  %1252 = vmatpush2.msra.mxu0 0.0
  %1253 = vmatprep.subr.mxu0 0.0
  %1254 = vmatpush2.msra.mxu0 0.0
  %1255 = vmatprep.mubr.f32.mxu0 0.0
  %1256 = vmatmul.mubr.f32.gmra.mxu0 %v1189
  %v1257 = vpop.f32.mrf.mxu0
  %v1258 = vadd.f32 0.0, %v1257
  %v1259 = vpop.f32.mrf.mxu0
  %v1260 = vadd.f32 0.0, %v1259
  %1261 = vdwg.mxu0
  %v1262 = vadd.f32 %v206, %v1258
  %v1263 = vadd.f32 %v166, %v1260
  %v1264 = vxor.u32 %v1262, 2147483648
  %v1265 = vxor.u32 %v1263, 2147483648
  %v1266 = vmul.f32 %v1264, 1.442695
  %v1267 = vpow.pop %v1266
  %v1268 = vmul.f32 %v1265, 1.442695
  %v1269 = vpow.pop %v1268
  %v1270 = vadd.f32 %v1267, 1.0
  %v1271 = vadd.f32 %v1269, 1.0
  %v1272 = vrcp.pop %v1270
  %v1273 = vmul.f32 1.0, %v1272
  %v1274 = vrcp.pop %v1271
  %v1275 = vmul.f32 1.0, %v1274
  %v1276 = vmul.f32 %v1273, 2.0
  %v1277 = vsub.f32 %v1276, 1.0
  %v1278 = vmul.f32 %v1275, 2.0
  %v1279 = vsub.f32 %v1278, 1.0
  %v1280 = vmul.f32 %v1273, %v1153
  %1282 = vrot.lane.b32.xlu0 %v1277, 64
  %v1283 = vpop.permute.xlu0 %1282
  %v1285 = vmul.f32 %v1273, %v1283
  %1287 = vrot.lane.b32.xlu0 %v1285, 32
  %v1288 = vpop.permute.xlu0 %1287
  %v1290 = vadd.f32 %v1280, %v1288
  %v1291 = vmul.f32 %v1275, %v1164
  %1293 = vrot.lane.b32.xlu0 %v1279, 64
  %v1294 = vpop.permute.xlu0 %1293
  %v1296 = vmul.f32 %v1275, %v1294
  %1298 = vrot.lane.b32.xlu0 %v1296, 32
  %v1299 = vpop.permute.xlu0 %1298
  %v1301 = vadd.f32 %v1291, %v1299
  %v1302 = vtanh.pop %v1290
  %1304 = vrot.lane.b32.xlu0 %v1302, 64
  %v1305 = vpop.permute.xlu0 %1304
  %v1307 = vmul.f32 %v1273, %v1305
  %v1308 = vtanh.pop %v1301
  %1310 = vrot.lane.b32.xlu0 %v1308, 64
  %v1311 = vpop.permute.xlu0 %1310
  %v1313 = vmul.f32 %v1275, %v1311
  %1315 = vrot.lane.b32.xlu0 %v1307, 32
  %v1316 = vpop.permute.xlu0 %1315
  %1318 = vst.msk [vmem:[#allocation2 + $0x38] sm:$0xff] %vm357, %v1316
  %1320 = vrot.lane.b32.xlu0 %v1313, 64
  %v1321 = vpop.permute.xlu0 %1320
  %1323 = vst.msk [vmem:[#allocation2] sm:$0xff] %vm363, %v1321
  %v1324 = vld [vmem:[#allocation2] sm:$0xff]
  %v1325 = vld [vmem:[#allocation2 + $0x8] sm:$0xff]
  %v1326 = vld [vmem:[#allocation2 + $0x10] sm:$0xff]
  %v1327 = vld [vmem:[#allocation2 + $0x18] sm:$0xff]
  %v1328 = vld [vmem:[#allocation2 + $0x20] sm:$0xff]
  %v1329 = vld [vmem:[#allocation2 + $0x28] sm:$0xff]
  %v1330 = vld [vmem:[#allocation2 + $0x30] sm:$0xff]
  %v1331 = vld [vmem:[#allocation2 + $0x38] sm:$0xff]
  %v1332 = vld [vmem:[%s4] sm:$0xff]
  %v1333 = vld [vmem:[%s4 + $0x8] sm:$0xff]
  %v1334 = vld [vmem:[%s4 + $0x10] sm:$0xff]
  %v1335 = vld [vmem:[%s4 + $0x18] sm:$0xff]
  %v1336 = vld [vmem:[%s4 + $0x20] sm:$0xff]
  %v1337 = vld [vmem:[%s4 + $0x28] sm:$0xff]
  %v1338 = vld [vmem:[%s4 + $0x30] sm:$0xff]
  %v1339 = vld [vmem:[%s4 + $0x38] sm:$0xff]
  %v1340 = vld [vmem:[%s4 + $0x40] sm:$0xff]
  %v1341 = vld [vmem:[%s4 + $0x48] sm:$0xff]
  %v1342 = vld [vmem:[%s4 + $0x50] sm:$0xff]
  %v1343 = vld [vmem:[%s4 + $0x58] sm:$0xff]
  %v1344 = vld [vmem:[%s4 + $0x60] sm:$0xff]
  %v1345 = vld [vmem:[%s4 + $0x68] sm:$0xff]
  %v1346 = vld [vmem:[%s4 + $0x70] sm:$0xff]
  %v1347 = vld [vmem:[%s4 + $0x78] sm:$0xff]
  %v1348 = vld [vmem:[%s6] sm:$0x3]
  %v1350 = vlaneseq
  %v1351 = vshrl.u32 %v1350, 7
  %v1352 = vsub.s32 0, %v1351
  %v1353 = vrot.slane %v1348, %v1352
  %v1354 = vlaneseq
  %v1355 = vshrl.u32 %v1354, 7
  %v1356 = vsub.s32 1, %v1355
  %v1357 = vrot.slane %v1348, %v1356
  %v1361 = vsel %vm226, %v1324, 0
  %v1364 = vsel %vm226, %v1325, 0
  %v1367 = vsel %vm226, %v1326, 0
  %v1370 = vsel %vm226, %v1327, 0
  %v1373 = vsel %vm226, %v1328, 0
  %v1376 = vsel %vm226, %v1329, 0
  %v1379 = vsel %vm226, %v1330, 0
  %v1382 = vsel %vm226, %v1331, 0
  %1384 = vmatprep.subr.mxu0 0.0
  %1385 = vmatpush1.msra.mxu0 0.0
  %1386 = vmatprep.subr.mxu0 0.0
  %1387 = vmatpush1.msra.mxu0 0.0
  %1388 = vmatprep.subr.mxu0 0.0
  %1389 = vmatpush1.msra.mxu0 0.0
  %1390 = vmatprep.subr.mxu0 0.0
  %1391 = vmatpush1.msra.mxu0 0.0
  %1392 = vmatprep.subr.mxu0 0.0
  %1393 = vmatpush1.msra.mxu0 0.0
  %1394 = vmatprep.subr.mxu0 0.0
  %1395 = vmatpush1.msra.mxu0 0.0
  %1396 = vmatprep.subr.mxu0 0.0
  %1397 = vmatpush1.msra.mxu0 0.0
  %1398 = vmatprep.subr.mxu0 0.0
  %1399 = vmatpush1.msra.mxu0 0.0
  %1400 = vmatprep.subr.mxu0 %v1347
  %1401 = vmatpush1.msra.mxu0 %v1346
  %1402 = vmatprep.subr.mxu0 %v1345
  %1403 = vmatpush1.msra.mxu0 %v1344
  %1404 = vmatprep.subr.mxu0 %v1343
  %1405 = vmatpush1.msra.mxu0 %v1342
  %1406 = vmatprep.subr.mxu0 %v1341
  %1407 = vmatpush1.msra.mxu0 %v1340
  %1408 = vmatprep.subr.mxu0 %v1339
  %1409 = vmatpush1.msra.mxu0 %v1338
  %1410 = vmatprep.subr.mxu0 %v1337
  %1411 = vmatpush1.msra.mxu0 %v1336
  %1412 = vmatprep.subr.mxu0 %v1335
  %1413 = vmatpush1.msra.mxu0 %v1334
  %1414 = vmatprep.subr.mxu0 %v1333
  %1415 = vmatpush1.msra.mxu0 %v1332
  %1416 = vmatprep.subr.mxu0 0.0
  %1417 = vmatpush2.msra.mxu0 0.0
  %1418 = vmatprep.subr.mxu0 0.0
  %1419 = vmatpush2.msra.mxu0 0.0
  %1420 = vmatprep.subr.mxu0 0.0
  %1421 = vmatpush2.msra.mxu0 0.0
  %1422 = vmatprep.subr.mxu0 0.0
  %1423 = vmatpush2.msra.mxu0 0.0
  %1424 = vmatprep.subr.mxu0 0.0
  %1425 = vmatpush2.msra.mxu0 0.0
  %1426 = vmatprep.subr.mxu0 0.0
  %1427 = vmatpush2.msra.mxu0 0.0
  %1428 = vmatprep.subr.mxu0 0.0
  %1429 = vmatpush2.msra.mxu0 0.0
  %1430 = vmatprep.subr.mxu0 0.0
  %1431 = vmatpush2.msra.mxu0 0.0
  %1432 = vmatprep.subr.mxu0 0.0
  %1433 = vmatpush2.msra.mxu0 0.0
  %1434 = vmatprep.subr.mxu0 0.0
  %1435 = vmatpush2.msra.mxu0 0.0
  %1436 = vmatprep.subr.mxu0 0.0
  %1437 = vmatpush2.msra.mxu0 0.0
  %1438 = vmatprep.subr.mxu0 0.0
  %1439 = vmatpush2.msra.mxu0 0.0
  %1440 = vmatprep.subr.mxu0 0.0
  %1441 = vmatpush2.msra.mxu0 0.0
  %1442 = vmatprep.subr.mxu0 0.0
  %1443 = vmatpush2.msra.mxu0 0.0
  %1444 = vmatprep.subr.mxu0 0.0
  %1445 = vmatpush2.msra.mxu0 0.0
  %1446 = vmatprep.subr.mxu0 0.0
  %1447 = vmatpush2.msra.mxu0 0.0
  %1448 = vmatprep.mubr.f32.mxu0 0.0
  %1449 = vmatmul.mubr.f32.gmra.mxu0 %v1361
  %v1450 = vpop.f32.mrf.mxu0
  %v1451 = vadd.f32 %v1353, %v1450
  %v1452 = vpop.f32.mrf.mxu0
  %v1453 = vadd.f32 %v1357, %v1452
  %1454 = vmatprep.mubr.f32.mxu0 0.0
  %1455 = vmatmul.mubr.f32.gmra.mxu0 %v1364
  %v1456 = vpop.f32.mrf.mxu0
  %v1457 = vadd.f32 %v1353, %v1456
  %v1458 = vpop.f32.mrf.mxu0
  %v1459 = vadd.f32 %v1357, %v1458
  %1460 = vmatprep.mubr.f32.mxu0 0.0
  %1461 = vmatmul.mubr.f32.gmra.mxu0 %v1367
  %v1462 = vpop.f32.mrf.mxu0
  %v1463 = vadd.f32 %v1353, %v1462
  %v1464 = vpop.f32.mrf.mxu0
  %v1465 = vadd.f32 %v1357, %v1464
  %1466 = vmatprep.mubr.f32.mxu0 0.0
  %1467 = vmatmul.mubr.f32.gmra.mxu0 %v1370
  %v1468 = vpop.f32.mrf.mxu0
  %v1469 = vadd.f32 %v1353, %v1468
  %v1470 = vpop.f32.mrf.mxu0
  %v1471 = vadd.f32 %v1357, %v1470
  %1472 = vmatprep.mubr.f32.mxu0 0.0
  %1473 = vmatmul.mubr.f32.gmra.mxu0 %v1373
  %v1474 = vpop.f32.mrf.mxu0
  %v1475 = vadd.f32 %v1353, %v1474
  %v1476 = vpop.f32.mrf.mxu0
  %v1477 = vadd.f32 %v1357, %v1476
  %1478 = vmatprep.mubr.f32.mxu0 0.0
  %1479 = vmatmul.mubr.f32.gmra.mxu0 %v1376
  %v1480 = vpop.f32.mrf.mxu0
  %v1481 = vadd.f32 %v1353, %v1480
  %v1482 = vpop.f32.mrf.mxu0
  %v1483 = vadd.f32 %v1357, %v1482
  %1484 = vmatprep.mubr.f32.mxu0 0.0
  %1485 = vmatmul.mubr.f32.gmra.mxu0 %v1379
  %v1486 = vpop.f32.mrf.mxu0
  %v1487 = vadd.f32 %v1353, %v1486
  %v1488 = vpop.f32.mrf.mxu0
  %v1489 = vadd.f32 %v1357, %v1488
  %1490 = vmatprep.mubr.f32.mxu0 0.0
  %1491 = vmatmul.mubr.f32.gmra.mxu0 %v1382
  %v1492 = vpop.f32.mrf.mxu0
  %v1493 = vadd.f32 %v1353, %v1492
  %v1494 = vpop.f32.mrf.mxu0
  %v1495 = vadd.f32 %v1357, %v1494
  %1496 = vdwg.mxu0
  %v1497 = vld [vmem:[%s5] sm:$0xff]
  %v1498 = vld [vmem:[%s5 + $0x8] sm:$0xff]
  %v1499 = vld [vmem:[%s5 + $0x10] sm:$0xff]
  %v1500 = vld [vmem:[%s5 + $0x18] sm:$0xff]
  %v1501 = vld [vmem:[%s5 + $0x20] sm:$0xff]
  %v1502 = vld [vmem:[%s5 + $0x28] sm:$0xff]
  %v1503 = vld [vmem:[%s5 + $0x30] sm:$0xff]
  %v1504 = vld [vmem:[%s5 + $0x38] sm:$0xff]
  %v1505 = vld [vmem:[%s5 + $0x40] sm:$0xff]
  %v1506 = vld [vmem:[%s5 + $0x48] sm:$0xff]
  %v1507 = vld [vmem:[%s5 + $0x50] sm:$0xff]
  %v1508 = vld [vmem:[%s5 + $0x58] sm:$0xff]
  %v1509 = vld [vmem:[%s5 + $0x60] sm:$0xff]
  %v1510 = vld [vmem:[%s5 + $0x68] sm:$0xff]
  %v1511 = vld [vmem:[%s5 + $0x70] sm:$0xff]
  %v1512 = vld [vmem:[%s5 + $0x78] sm:$0xff]
  %1513 = vmatprep.subr.mxu0 0.0
  %1514 = vmatpush1.msra.mxu0 0.0
  %1515 = vmatprep.subr.mxu0 0.0
  %1516 = vmatpush1.msra.mxu0 0.0
  %1517 = vmatprep.subr.mxu0 0.0
  %1518 = vmatpush1.msra.mxu0 0.0
  %1519 = vmatprep.subr.mxu0 0.0
  %1520 = vmatpush1.msra.mxu0 0.0
  %1521 = vmatprep.subr.mxu0 0.0
  %1522 = vmatpush1.msra.mxu0 0.0
  %1523 = vmatprep.subr.mxu0 0.0
  %1524 = vmatpush1.msra.mxu0 0.0
  %1525 = vmatprep.subr.mxu0 0.0
  %1526 = vmatpush1.msra.mxu0 0.0
  %1527 = vmatprep.subr.mxu0 0.0
  %1528 = vmatpush1.msra.mxu0 0.0
  %1529 = vmatprep.subr.mxu0 %v1512
  %1530 = vmatpush1.msra.mxu0 %v1511
  %1531 = vmatprep.subr.mxu0 %v1510
  %1532 = vmatpush1.msra.mxu0 %v1509
  %1533 = vmatprep.subr.mxu0 %v1508
  %1534 = vmatpush1.msra.mxu0 %v1507
  %1535 = vmatprep.subr.mxu0 %v1506
  %1536 = vmatpush1.msra.mxu0 %v1505
  %1537 = vmatprep.subr.mxu0 %v1504
  %1538 = vmatpush1.msra.mxu0 %v1503
  %1539 = vmatprep.subr.mxu0 %v1502
  %1540 = vmatpush1.msra.mxu0 %v1501
  %1541 = vmatprep.subr.mxu0 %v1500
  %1542 = vmatpush1.msra.mxu0 %v1499
  %1543 = vmatprep.subr.mxu0 %v1498
  %1544 = vmatpush1.msra.mxu0 %v1497
  %1545 = vmatprep.subr.mxu0 0.0
  %1546 = vmatpush2.msra.mxu0 0.0
  %1547 = vmatprep.subr.mxu0 0.0
  %1548 = vmatpush2.msra.mxu0 0.0
  %1549 = vmatprep.subr.mxu0 0.0
  %1550 = vmatpush2.msra.mxu0 0.0
  %1551 = vmatprep.subr.mxu0 0.0
  %1552 = vmatpush2.msra.mxu0 0.0
  %1553 = vmatprep.subr.mxu0 0.0
  %1554 = vmatpush2.msra.mxu0 0.0
  %1555 = vmatprep.subr.mxu0 0.0
  %1556 = vmatpush2.msra.mxu0 0.0
  %1557 = vmatprep.subr.mxu0 0.0
  %1558 = vmatpush2.msra.mxu0 0.0
  %1559 = vmatprep.subr.mxu0 0.0
  %1560 = vmatpush2.msra.mxu0 0.0
  %1561 = vmatprep.subr.mxu0 0.0
  %1562 = vmatpush2.msra.mxu0 0.0
  %1563 = vmatprep.subr.mxu0 0.0
  %1564 = vmatpush2.msra.mxu0 0.0
  %1565 = vmatprep.subr.mxu0 0.0
  %1566 = vmatpush2.msra.mxu0 0.0
  %1567 = vmatprep.subr.mxu0 0.0
  %1568 = vmatpush2.msra.mxu0 0.0
  %1569 = vmatprep.subr.mxu0 0.0
  %1570 = vmatpush2.msra.mxu0 0.0
  %1571 = vmatprep.subr.mxu0 0.0
  %1572 = vmatpush2.msra.mxu0 0.0
  %1573 = vmatprep.subr.mxu0 0.0
  %1574 = vmatpush2.msra.mxu0 0.0
  %1575 = vmatprep.subr.mxu0 0.0
  %1576 = vmatpush2.msra.mxu0 0.0
  %1577 = vmatprep.mubr.f32.mxu0 0.0
  %1578 = vmatmul.mubr.f32.gmra.mxu0 %v228
  %v1579 = vpop.f32.mrf.mxu0
  %v1580 = vadd.f32 0.0, %v1579
  %v1581 = vpop.f32.mrf.mxu0
  %v1582 = vadd.f32 0.0, %v1581
  %1583 = vdwg.mxu0
  %v1584 = vadd.f32 %v1451, %v1580
  %v1585 = vadd.f32 %v1495, %v1582
  %v1586 = vxor.u32 %v1584, 2147483648
  %v1587 = vxor.u32 %v1585, 2147483648
  %v1588 = vmul.f32 %v1586, 1.442695
  %v1589 = vpow.pop %v1588
  %v1590 = vmul.f32 %v1587, 1.442695
  %v1591 = vpow.pop %v1590
  %v1592 = vadd.f32 %v1589, 1.0
  %v1593 = vadd.f32 %v1591, 1.0
  %v1594 = vrcp.pop %v1592
  %v1595 = vmul.f32 1.0, %v1594
  %v1596 = vrcp.pop %v1593
  %v1597 = vmul.f32 1.0, %v1596
  %v1598 = vmul.f32 %v1595, 2.0
  %v1599 = vsub.f32 %v1598, 1.0
  %v1600 = vmul.f32 %v1597, 2.0
  %v1601 = vsub.f32 %v1600, 1.0
  %v1602 = vmul.f32 %v1595, 0.0
  %1604 = vrot.lane.b32.xlu0 %v1599, 64
  %v1605 = vpop.permute.xlu0 %1604
  %v1607 = vmul.f32 %v1595, %v1605
  %1609 = vrot.lane.b32.xlu0 %v1607, 32
  %v1610 = vpop.permute.xlu0 %1609
  %v1612 = vadd.f32 %v1602, %v1610
  %v1613 = vmul.f32 %v1597, 0.0
  %1615 = vrot.lane.b32.xlu0 %v1601, 64
  %v1616 = vpop.permute.xlu0 %1615
  %v1618 = vmul.f32 %v1597, %v1616
  %1620 = vrot.lane.b32.xlu0 %v1618, 32
  %v1621 = vpop.permute.xlu0 %1620
  %v1623 = vadd.f32 %v1613, %v1621
  %v1624 = vtanh.pop %v1612
  %1626 = vrot.lane.b32.xlu0 %v1624, 64
  %v1627 = vpop.permute.xlu0 %1626
  %v1629 = vmul.f32 %v1595, %v1627
  %v1630 = vtanh.pop %v1623
  %1632 = vrot.lane.b32.xlu0 %v1630, 64
  %v1633 = vpop.permute.xlu0 %1632
  %v1635 = vmul.f32 %v1597, %v1633
  %1637 = vrot.lane.b32.xlu0 %v1629, 32
  %v1638 = vpop.permute.xlu0 %1637
  %1640 = vst.msk [vmem:[#allocation3] sm:$0xff] %vm357, %v1638
  %1642 = vrot.lane.b32.xlu0 %v1635, 64
  %v1643 = vpop.permute.xlu0 %1642
  %1645 = vst.msk [vmem:[#allocation3 + $0x38] sm:$0xff] %vm363, %v1643
  %v1646 = vsel %vm357, %v1638, %v1643
  %v1648 = vsel %vm226, %v1646, 0
  %1650 = vmatprep.subr.mxu0 0.0
  %1651 = vmatpush1.msra.mxu0 0.0
  %1652 = vmatprep.subr.mxu0 0.0
  %1653 = vmatpush1.msra.mxu0 0.0
  %1654 = vmatprep.subr.mxu0 0.0
  %1655 = vmatpush1.msra.mxu0 0.0
  %1656 = vmatprep.subr.mxu0 0.0
  %1657 = vmatpush1.msra.mxu0 0.0
  %1658 = vmatprep.subr.mxu0 0.0
  %1659 = vmatpush1.msra.mxu0 0.0
  %1660 = vmatprep.subr.mxu0 0.0
  %1661 = vmatpush1.msra.mxu0 0.0
  %1662 = vmatprep.subr.mxu0 0.0
  %1663 = vmatpush1.msra.mxu0 0.0
  %1664 = vmatprep.subr.mxu0 0.0
  %1665 = vmatpush1.msra.mxu0 0.0
  %1666 = vmatprep.subr.mxu0 %v1512
  %1667 = vmatpush1.msra.mxu0 %v1511
  %1668 = vmatprep.subr.mxu0 %v1510
  %1669 = vmatpush1.msra.mxu0 %v1509
  %1670 = vmatprep.subr.mxu0 %v1508
  %1671 = vmatpush1.msra.mxu0 %v1507
  %1672 = vmatprep.subr.mxu0 %v1506
  %1673 = vmatpush1.msra.mxu0 %v1505
  %1674 = vmatprep.subr.mxu0 %v1504
  %1675 = vmatpush1.msra.mxu0 %v1503
  %1676 = vmatprep.subr.mxu0 %v1502
  %1677 = vmatpush1.msra.mxu0 %v1501
  %1678 = vmatprep.subr.mxu0 %v1500
  %1679 = vmatpush1.msra.mxu0 %v1499
  %1680 = vmatprep.subr.mxu0 %v1498
  %1681 = vmatpush1.msra.mxu0 %v1497
  %1682 = vmatprep.subr.mxu0 0.0
  %1683 = vmatpush2.msra.mxu0 0.0
  %1684 = vmatprep.subr.mxu0 0.0
  %1685 = vmatpush2.msra.mxu0 0.0
  %1686 = vmatprep.subr.mxu0 0.0
  %1687 = vmatpush2.msra.mxu0 0.0
  %1688 = vmatprep.subr.mxu0 0.0
  %1689 = vmatpush2.msra.mxu0 0.0
  %1690 = vmatprep.subr.mxu0 0.0
  %1691 = vmatpush2.msra.mxu0 0.0
  %1692 = vmatprep.subr.mxu0 0.0
  %1693 = vmatpush2.msra.mxu0 0.0
  %1694 = vmatprep.subr.mxu0 0.0
  %1695 = vmatpush2.msra.mxu0 0.0
  %1696 = vmatprep.subr.mxu0 0.0
  %1697 = vmatpush2.msra.mxu0 0.0
  %1698 = vmatprep.subr.mxu0 0.0
  %1699 = vmatpush2.msra.mxu0 0.0
  %1700 = vmatprep.subr.mxu0 0.0
  %1701 = vmatpush2.msra.mxu0 0.0
  %1702 = vmatprep.subr.mxu0 0.0
  %1703 = vmatpush2.msra.mxu0 0.0
  %1704 = vmatprep.subr.mxu0 0.0
  %1705 = vmatpush2.msra.mxu0 0.0
  %1706 = vmatprep.subr.mxu0 0.0
  %1707 = vmatpush2.msra.mxu0 0.0
  %1708 = vmatprep.subr.mxu0 0.0
  %1709 = vmatpush2.msra.mxu0 0.0
  %1710 = vmatprep.subr.mxu0 0.0
  %1711 = vmatpush2.msra.mxu0 0.0
  %1712 = vmatprep.subr.mxu0 0.0
  %1713 = vmatpush2.msra.mxu0 0.0
  %1714 = vmatprep.mubr.f32.mxu0 0.0
  %1715 = vmatmul.mubr.f32.gmra.mxu0 %v1648
  %v1716 = vpop.f32.mrf.mxu0
  %v1717 = vadd.f32 0.0, %v1716
  %v1718 = vpop.f32.mrf.mxu0
  %v1719 = vadd.f32 0.0, %v1718
  %1720 = vdwg.mxu0
  %v1721 = vadd.f32 %v1457, %v1717
  %v1722 = vadd.f32 %v1489, %v1719
  %v1723 = vxor.u32 %v1721, 2147483648
  %v1724 = vxor.u32 %v1722, 2147483648
  %v1725 = vmul.f32 %v1723, 1.442695
  %v1726 = vpow.pop %v1725
  %v1727 = vmul.f32 %v1724, 1.442695
  %v1728 = vpow.pop %v1727
  %v1729 = vadd.f32 %v1726, 1.0
  %v1730 = vadd.f32 %v1728, 1.0
  %v1731 = vrcp.pop %v1729
  %v1732 = vmul.f32 1.0, %v1731
  %v1733 = vrcp.pop %v1730
  %v1734 = vmul.f32 1.0, %v1733
  %v1735 = vmul.f32 %v1732, 2.0
  %v1736 = vsub.f32 %v1735, 1.0
  %v1737 = vmul.f32 %v1734, 2.0
  %v1738 = vsub.f32 %v1737, 1.0
  %v1739 = vmul.f32 %v1732, %v1612
  %1741 = vrot.lane.b32.xlu0 %v1736, 64
  %v1742 = vpop.permute.xlu0 %1741
  %v1744 = vmul.f32 %v1732, %v1742
  %1746 = vrot.lane.b32.xlu0 %v1744, 32
  %v1747 = vpop.permute.xlu0 %1746
  %v1749 = vadd.f32 %v1739, %v1747
  %v1750 = vmul.f32 %v1734, %v1623
  %1752 = vrot.lane.b32.xlu0 %v1738, 64
  %v1753 = vpop.permute.xlu0 %1752
  %v1755 = vmul.f32 %v1734, %v1753
  %1757 = vrot.lane.b32.xlu0 %v1755, 32
  %v1758 = vpop.permute.xlu0 %1757
  %v1760 = vadd.f32 %v1750, %v1758
  %v1761 = vtanh.pop %v1749
  %1763 = vrot.lane.b32.xlu0 %v1761, 64
  %v1764 = vpop.permute.xlu0 %1763
  %v1766 = vmul.f32 %v1732, %v1764
  %v1767 = vtanh.pop %v1760
  %1769 = vrot.lane.b32.xlu0 %v1767, 64
  %v1770 = vpop.permute.xlu0 %1769
  %v1772 = vmul.f32 %v1734, %v1770
  %1774 = vrot.lane.b32.xlu0 %v1766, 32
  %v1775 = vpop.permute.xlu0 %1774
  %1777 = vst.msk [vmem:[#allocation3 + $0x8] sm:$0xff] %vm357, %v1775
  %1779 = vrot.lane.b32.xlu0 %v1772, 64
  %v1780 = vpop.permute.xlu0 %1779
  %1782 = vst.msk [vmem:[#allocation3 + $0x30] sm:$0xff] %vm363, %v1780
  %v1783 = vsel %vm357, %v1775, %v1780
  %v1785 = vsel %vm226, %v1783, 0
  %1787 = vmatprep.subr.mxu0 0.0
  %1788 = vmatpush1.msra.mxu0 0.0
  %1789 = vmatprep.subr.mxu0 0.0
  %1790 = vmatpush1.msra.mxu0 0.0
  %1791 = vmatprep.subr.mxu0 0.0
  %1792 = vmatpush1.msra.mxu0 0.0
  %1793 = vmatprep.subr.mxu0 0.0
  %1794 = vmatpush1.msra.mxu0 0.0
  %1795 = vmatprep.subr.mxu0 0.0
  %1796 = vmatpush1.msra.mxu0 0.0
  %1797 = vmatprep.subr.mxu0 0.0
  %1798 = vmatpush1.msra.mxu0 0.0
  %1799 = vmatprep.subr.mxu0 0.0
  %1800 = vmatpush1.msra.mxu0 0.0
  %1801 = vmatprep.subr.mxu0 0.0
  %1802 = vmatpush1.msra.mxu0 0.0
  %1803 = vmatprep.subr.mxu0 %v1512
  %1804 = vmatpush1.msra.mxu0 %v1511
  %1805 = vmatprep.subr.mxu0 %v1510
  %1806 = vmatpush1.msra.mxu0 %v1509
  %1807 = vmatprep.subr.mxu0 %v1508
  %1808 = vmatpush1.msra.mxu0 %v1507
  %1809 = vmatprep.subr.mxu0 %v1506
  %1810 = vmatpush1.msra.mxu0 %v1505
  %1811 = vmatprep.subr.mxu0 %v1504
  %1812 = vmatpush1.msra.mxu0 %v1503
  %1813 = vmatprep.subr.mxu0 %v1502
  %1814 = vmatpush1.msra.mxu0 %v1501
  %1815 = vmatprep.subr.mxu0 %v1500
  %1816 = vmatpush1.msra.mxu0 %v1499
  %1817 = vmatprep.subr.mxu0 %v1498
  %1818 = vmatpush1.msra.mxu0 %v1497
  %1819 = vmatprep.subr.mxu0 0.0
  %1820 = vmatpush2.msra.mxu0 0.0
  %1821 = vmatprep.subr.mxu0 0.0
  %1822 = vmatpush2.msra.mxu0 0.0
  %1823 = vmatprep.subr.mxu0 0.0
  %1824 = vmatpush2.msra.mxu0 0.0
  %1825 = vmatprep.subr.mxu0 0.0
  %1826 = vmatpush2.msra.mxu0 0.0
  %1827 = vmatprep.subr.mxu0 0.0
  %1828 = vmatpush2.msra.mxu0 0.0
  %1829 = vmatprep.subr.mxu0 0.0
  %1830 = vmatpush2.msra.mxu0 0.0
  %1831 = vmatprep.subr.mxu0 0.0
  %1832 = vmatpush2.msra.mxu0 0.0
  %1833 = vmatprep.subr.mxu0 0.0
  %1834 = vmatpush2.msra.mxu0 0.0
  %1835 = vmatprep.subr.mxu0 0.0
  %1836 = vmatpush2.msra.mxu0 0.0
  %1837 = vmatprep.subr.mxu0 0.0
  %1838 = vmatpush2.msra.mxu0 0.0
  %1839 = vmatprep.subr.mxu0 0.0
  %1840 = vmatpush2.msra.mxu0 0.0
  %1841 = vmatprep.subr.mxu0 0.0
  %1842 = vmatpush2.msra.mxu0 0.0
  %1843 = vmatprep.subr.mxu0 0.0
  %1844 = vmatpush2.msra.mxu0 0.0
  %1845 = vmatprep.subr.mxu0 0.0
  %1846 = vmatpush2.msra.mxu0 0.0
  %1847 = vmatprep.subr.mxu0 0.0
  %1848 = vmatpush2.msra.mxu0 0.0
  %1849 = vmatprep.subr.mxu0 0.0
  %1850 = vmatpush2.msra.mxu0 0.0
  %1851 = vmatprep.mubr.f32.mxu0 0.0
  %1852 = vmatmul.mubr.f32.gmra.mxu0 %v1785
  %v1853 = vpop.f32.mrf.mxu0
  %v1854 = vadd.f32 0.0, %v1853
  %v1855 = vpop.f32.mrf.mxu0
  %v1856 = vadd.f32 0.0, %v1855
  %1857 = vdwg.mxu0
  %v1858 = vadd.f32 %v1463, %v1854
  %v1859 = vadd.f32 %v1483, %v1856
  %v1860 = vxor.u32 %v1858, 2147483648
  %v1861 = vxor.u32 %v1859, 2147483648
  %v1862 = vmul.f32 %v1860, 1.442695
  %v1863 = vpow.pop %v1862
  %v1864 = vmul.f32 %v1861, 1.442695
  %v1865 = vpow.pop %v1864
  %v1866 = vadd.f32 %v1863, 1.0
  %v1867 = vadd.f32 %v1865, 1.0
  %v1868 = vrcp.pop %v1866
  %v1869 = vmul.f32 1.0, %v1868
  %v1870 = vrcp.pop %v1867
  %v1871 = vmul.f32 1.0, %v1870
  %v1872 = vmul.f32 %v1869, 2.0
  %v1873 = vsub.f32 %v1872, 1.0
  %v1874 = vmul.f32 %v1871, 2.0
  %v1875 = vsub.f32 %v1874, 1.0
  %v1876 = vmul.f32 %v1869, %v1749
  %1878 = vrot.lane.b32.xlu0 %v1873, 64
  %v1879 = vpop.permute.xlu0 %1878
  %v1881 = vmul.f32 %v1869, %v1879
  %1883 = vrot.lane.b32.xlu0 %v1881, 32
  %v1884 = vpop.permute.xlu0 %1883
  %v1886 = vadd.f32 %v1876, %v1884
  %v1887 = vmul.f32 %v1871, %v1760
  %1889 = vrot.lane.b32.xlu0 %v1875, 64
  %v1890 = vpop.permute.xlu0 %1889
  %v1892 = vmul.f32 %v1871, %v1890
  %1894 = vrot.lane.b32.xlu0 %v1892, 32
  %v1895 = vpop.permute.xlu0 %1894
  %v1897 = vadd.f32 %v1887, %v1895
  %v1898 = vtanh.pop %v1886
  %1900 = vrot.lane.b32.xlu0 %v1898, 64
  %v1901 = vpop.permute.xlu0 %1900
  %v1903 = vmul.f32 %v1869, %v1901
  %v1904 = vtanh.pop %v1897
  %1906 = vrot.lane.b32.xlu0 %v1904, 64
  %v1907 = vpop.permute.xlu0 %1906
  %v1909 = vmul.f32 %v1871, %v1907
  %1911 = vrot.lane.b32.xlu0 %v1903, 32
  %v1912 = vpop.permute.xlu0 %1911
  %1914 = vst.msk [vmem:[#allocation3 + $0x10] sm:$0xff] %vm357, %v1912
  %1916 = vrot.lane.b32.xlu0 %v1909, 64
  %v1917 = vpop.permute.xlu0 %1916
  %1919 = vst.msk [vmem:[#allocation3 + $0x28] sm:$0xff] %vm363, %v1917
  %v1920 = vsel %vm357, %v1912, %v1917
  %v1922 = vsel %vm226, %v1920, 0
  %1924 = vmatprep.subr.mxu0 0.0
  %1925 = vmatpush1.msra.mxu0 0.0
  %1926 = vmatprep.subr.mxu0 0.0
  %1927 = vmatpush1.msra.mxu0 0.0
  %1928 = vmatprep.subr.mxu0 0.0
  %1929 = vmatpush1.msra.mxu0 0.0
  %1930 = vmatprep.subr.mxu0 0.0
  %1931 = vmatpush1.msra.mxu0 0.0
  %1932 = vmatprep.subr.mxu0 0.0
  %1933 = vmatpush1.msra.mxu0 0.0
  %1934 = vmatprep.subr.mxu0 0.0
  %1935 = vmatpush1.msra.mxu0 0.0
  %1936 = vmatprep.subr.mxu0 0.0
  %1937 = vmatpush1.msra.mxu0 0.0
  %1938 = vmatprep.subr.mxu0 0.0
  %1939 = vmatpush1.msra.mxu0 0.0
  %1940 = vmatprep.subr.mxu0 %v1512
  %1941 = vmatpush1.msra.mxu0 %v1511
  %1942 = vmatprep.subr.mxu0 %v1510
  %1943 = vmatpush1.msra.mxu0 %v1509
  %1944 = vmatprep.subr.mxu0 %v1508
  %1945 = vmatpush1.msra.mxu0 %v1507
  %1946 = vmatprep.subr.mxu0 %v1506
  %1947 = vmatpush1.msra.mxu0 %v1505
  %1948 = vmatprep.subr.mxu0 %v1504
  %1949 = vmatpush1.msra.mxu0 %v1503
  %1950 = vmatprep.subr.mxu0 %v1502
  %1951 = vmatpush1.msra.mxu0 %v1501
  %1952 = vmatprep.subr.mxu0 %v1500
  %1953 = vmatpush1.msra.mxu0 %v1499
  %1954 = vmatprep.subr.mxu0 %v1498
  %1955 = vmatpush1.msra.mxu0 %v1497
  %1956 = vmatprep.subr.mxu0 0.0
  %1957 = vmatpush2.msra.mxu0 0.0
  %1958 = vmatprep.subr.mxu0 0.0
  %1959 = vmatpush2.msra.mxu0 0.0
  %1960 = vmatprep.subr.mxu0 0.0
  %1961 = vmatpush2.msra.mxu0 0.0
  %1962 = vmatprep.subr.mxu0 0.0
  %1963 = vmatpush2.msra.mxu0 0.0
  %1964 = vmatprep.subr.mxu0 0.0
  %1965 = vmatpush2.msra.mxu0 0.0
  %1966 = vmatprep.subr.mxu0 0.0
  %1967 = vmatpush2.msra.mxu0 0.0
  %1968 = vmatprep.subr.mxu0 0.0
  %1969 = vmatpush2.msra.mxu0 0.0
  %1970 = vmatprep.subr.mxu0 0.0
  %1971 = vmatpush2.msra.mxu0 0.0
  %1972 = vmatprep.subr.mxu0 0.0
  %1973 = vmatpush2.msra.mxu0 0.0
  %1974 = vmatprep.subr.mxu0 0.0
  %1975 = vmatpush2.msra.mxu0 0.0
  %1976 = vmatprep.subr.mxu0 0.0
  %1977 = vmatpush2.msra.mxu0 0.0
  %1978 = vmatprep.subr.mxu0 0.0
  %1979 = vmatpush2.msra.mxu0 0.0
  %1980 = vmatprep.subr.mxu0 0.0
  %1981 = vmatpush2.msra.mxu0 0.0
  %1982 = vmatprep.subr.mxu0 0.0
  %1983 = vmatpush2.msra.mxu0 0.0
  %1984 = vmatprep.subr.mxu0 0.0
  %1985 = vmatpush2.msra.mxu0 0.0
  %1986 = vmatprep.subr.mxu0 0.0
  %1987 = vmatpush2.msra.mxu0 0.0
  %1988 = vmatprep.mubr.f32.mxu0 0.0
  %1989 = vmatmul.mubr.f32.gmra.mxu0 %v1922
  %v1990 = vpop.f32.mrf.mxu0
  %v1991 = vadd.f32 0.0, %v1990
  %v1992 = vpop.f32.mrf.mxu0
  %v1993 = vadd.f32 0.0, %v1992
  %1994 = vdwg.mxu0
  %v1995 = vadd.f32 %v1469, %v1991
  %v1996 = vadd.f32 %v1477, %v1993
  %v1997 = vxor.u32 %v1995, 2147483648
  %v1998 = vxor.u32 %v1996, 2147483648
  %v1999 = vmul.f32 %v1997, 1.442695
  %v2000 = vpow.pop %v1999
  %v2001 = vmul.f32 %v1998, 1.442695
  %v2002 = vpow.pop %v2001
  %v2003 = vadd.f32 %v2000, 1.0
  %v2004 = vadd.f32 %v2002, 1.0
  %v2005 = vrcp.pop %v2003
  %v2006 = vmul.f32 1.0, %v2005
  %v2007 = vrcp.pop %v2004
  %v2008 = vmul.f32 1.0, %v2007
  %v2009 = vmul.f32 %v2006, 2.0
  %v2010 = vsub.f32 %v2009, 1.0
  %v2011 = vmul.f32 %v2008, 2.0
  %v2012 = vsub.f32 %v2011, 1.0
  %v2013 = vmul.f32 %v2006, %v1886
  %2015 = vrot.lane.b32.xlu0 %v2010, 64
  %v2016 = vpop.permute.xlu0 %2015
  %v2018 = vmul.f32 %v2006, %v2016
  %2020 = vrot.lane.b32.xlu0 %v2018, 32
  %v2021 = vpop.permute.xlu0 %2020
  %v2023 = vadd.f32 %v2013, %v2021
  %v2024 = vmul.f32 %v2008, %v1897
  %2026 = vrot.lane.b32.xlu0 %v2012, 64
  %v2027 = vpop.permute.xlu0 %2026
  %v2029 = vmul.f32 %v2008, %v2027
  %2031 = vrot.lane.b32.xlu0 %v2029, 32
  %v2032 = vpop.permute.xlu0 %2031
  %v2034 = vadd.f32 %v2024, %v2032
  %v2035 = vtanh.pop %v2023
  %2037 = vrot.lane.b32.xlu0 %v2035, 64
  %v2038 = vpop.permute.xlu0 %2037
  %v2040 = vmul.f32 %v2006, %v2038
  %v2041 = vtanh.pop %v2034
  %2043 = vrot.lane.b32.xlu0 %v2041, 64
  %v2044 = vpop.permute.xlu0 %2043
  %v2046 = vmul.f32 %v2008, %v2044
  %2048 = vrot.lane.b32.xlu0 %v2040, 32
  %v2049 = vpop.permute.xlu0 %2048
  %2051 = vst.msk [vmem:[#allocation3 + $0x18] sm:$0xff] %vm357, %v2049
  %2053 = vrot.lane.b32.xlu0 %v2046, 64
  %v2054 = vpop.permute.xlu0 %2053
  %2056 = vst.msk [vmem:[#allocation3 + $0x20] sm:$0xff] %vm363, %v2054
  %v2057 = vsel %vm357, %v2049, %v2054
  %v2059 = vsel %vm226, %v2057, 0
  %2061 = vmatprep.subr.mxu0 0.0
  %2062 = vmatpush1.msra.mxu0 0.0
  %2063 = vmatprep.subr.mxu0 0.0
  %2064 = vmatpush1.msra.mxu0 0.0
  %2065 = vmatprep.subr.mxu0 0.0
  %2066 = vmatpush1.msra.mxu0 0.0
  %2067 = vmatprep.subr.mxu0 0.0
  %2068 = vmatpush1.msra.mxu0 0.0
  %2069 = vmatprep.subr.mxu0 0.0
  %2070 = vmatpush1.msra.mxu0 0.0
  %2071 = vmatprep.subr.mxu0 0.0
  %2072 = vmatpush1.msra.mxu0 0.0
  %2073 = vmatprep.subr.mxu0 0.0
  %2074 = vmatpush1.msra.mxu0 0.0
  %2075 = vmatprep.subr.mxu0 0.0
  %2076 = vmatpush1.msra.mxu0 0.0
  %2077 = vmatprep.subr.mxu0 %v1512
  %2078 = vmatpush1.msra.mxu0 %v1511
  %2079 = vmatprep.subr.mxu0 %v1510
  %2080 = vmatpush1.msra.mxu0 %v1509
  %2081 = vmatprep.subr.mxu0 %v1508
  %2082 = vmatpush1.msra.mxu0 %v1507
  %2083 = vmatprep.subr.mxu0 %v1506
  %2084 = vmatpush1.msra.mxu0 %v1505
  %2085 = vmatprep.subr.mxu0 %v1504
  %2086 = vmatpush1.msra.mxu0 %v1503
  %2087 = vmatprep.subr.mxu0 %v1502
  %2088 = vmatpush1.msra.mxu0 %v1501
  %2089 = vmatprep.subr.mxu0 %v1500
  %2090 = vmatpush1.msra.mxu0 %v1499
  %2091 = vmatprep.subr.mxu0 %v1498
  %2092 = vmatpush1.msra.mxu0 %v1497
  %2093 = vmatprep.subr.mxu0 0.0
  %2094 = vmatpush2.msra.mxu0 0.0
  %2095 = vmatprep.subr.mxu0 0.0
  %2096 = vmatpush2.msra.mxu0 0.0
  %2097 = vmatprep.subr.mxu0 0.0
  %2098 = vmatpush2.msra.mxu0 0.0
  %2099 = vmatprep.subr.mxu0 0.0
  %2100 = vmatpush2.msra.mxu0 0.0
  %2101 = vmatprep.subr.mxu0 0.0
  %2102 = vmatpush2.msra.mxu0 0.0
  %2103 = vmatprep.subr.mxu0 0.0
  %2104 = vmatpush2.msra.mxu0 0.0
  %2105 = vmatprep.subr.mxu0 0.0
  %2106 = vmatpush2.msra.mxu0 0.0
  %2107 = vmatprep.subr.mxu0 0.0
  %2108 = vmatpush2.msra.mxu0 0.0
  %2109 = vmatprep.subr.mxu0 0.0
  %2110 = vmatpush2.msra.mxu0 0.0
  %2111 = vmatprep.subr.mxu0 0.0
  %2112 = vmatpush2.msra.mxu0 0.0
  %2113 = vmatprep.subr.mxu0 0.0
  %2114 = vmatpush2.msra.mxu0 0.0
  %2115 = vmatprep.subr.mxu0 0.0
  %2116 = vmatpush2.msra.mxu0 0.0
  %2117 = vmatprep.subr.mxu0 0.0
  %2118 = vmatpush2.msra.mxu0 0.0
  %2119 = vmatprep.subr.mxu0 0.0
  %2120 = vmatpush2.msra.mxu0 0.0
  %2121 = vmatprep.subr.mxu0 0.0
  %2122 = vmatpush2.msra.mxu0 0.0
  %2123 = vmatprep.subr.mxu0 0.0
  %2124 = vmatpush2.msra.mxu0 0.0
  %2125 = vmatprep.mubr.f32.mxu0 0.0
  %2126 = vmatmul.mubr.f32.gmra.mxu0 %v2059
  %v2127 = vpop.f32.mrf.mxu0
  %v2128 = vadd.f32 0.0, %v2127
  %v2129 = vpop.f32.mrf.mxu0
  %v2130 = vadd.f32 0.0, %v2129
  %2131 = vdwg.mxu0
  %v2132 = vadd.f32 %v1475, %v2128
  %v2133 = vadd.f32 %v1471, %v2130
  %v2134 = vxor.u32 %v2132, 2147483648
  %v2135 = vxor.u32 %v2133, 2147483648
  %v2136 = vmul.f32 %v2134, 1.442695
  %v2137 = vpow.pop %v2136
  %v2138 = vmul.f32 %v2135, 1.442695
  %v2139 = vpow.pop %v2138
  %v2140 = vadd.f32 %v2137, 1.0
  %v2141 = vadd.f32 %v2139, 1.0
  %v2142 = vrcp.pop %v2140
  %v2143 = vmul.f32 1.0, %v2142
  %v2144 = vrcp.pop %v2141
  %v2145 = vmul.f32 1.0, %v2144
  %v2146 = vmul.f32 %v2143, 2.0
  %v2147 = vsub.f32 %v2146, 1.0
  %v2148 = vmul.f32 %v2145, 2.0
  %v2149 = vsub.f32 %v2148, 1.0
  %v2150 = vmul.f32 %v2143, %v2023
  %2152 = vrot.lane.b32.xlu0 %v2147, 64
  %v2153 = vpop.permute.xlu0 %2152
  %v2155 = vmul.f32 %v2143, %v2153
  %2157 = vrot.lane.b32.xlu0 %v2155, 32
  %v2158 = vpop.permute.xlu0 %2157
  %v2160 = vadd.f32 %v2150, %v2158
  %v2161 = vmul.f32 %v2145, %v2034
  %2163 = vrot.lane.b32.xlu0 %v2149, 64
  %v2164 = vpop.permute.xlu0 %2163
  %v2166 = vmul.f32 %v2145, %v2164
  %2168 = vrot.lane.b32.xlu0 %v2166, 32
  %v2169 = vpop.permute.xlu0 %2168
  %v2171 = vadd.f32 %v2161, %v2169
  %v2172 = vtanh.pop %v2160
  %2174 = vrot.lane.b32.xlu0 %v2172, 64
  %v2175 = vpop.permute.xlu0 %2174
  %v2177 = vmul.f32 %v2143, %v2175
  %v2178 = vtanh.pop %v2171
  %2180 = vrot.lane.b32.xlu0 %v2178, 64
  %v2181 = vpop.permute.xlu0 %2180
  %v2183 = vmul.f32 %v2145, %v2181
  %2185 = vrot.lane.b32.xlu0 %v2177, 32
  %v2186 = vpop.permute.xlu0 %2185
  %2188 = vst.msk [vmem:[#allocation3 + $0x20] sm:$0xff] %vm357, %v2186
  %2190 = vrot.lane.b32.xlu0 %v2183, 64
  %v2191 = vpop.permute.xlu0 %2190
  %2193 = vst.msk [vmem:[#allocation3 + $0x18] sm:$0xff] %vm363, %v2191
  %v2194 = vsel %vm357, %v2186, %v2191
  %v2196 = vsel %vm226, %v2194, 0
  %2198 = vmatprep.subr.mxu0 0.0
  %2199 = vmatpush1.msra.mxu0 0.0
  %2200 = vmatprep.subr.mxu0 0.0
  %2201 = vmatpush1.msra.mxu0 0.0
  %2202 = vmatprep.subr.mxu0 0.0
  %2203 = vmatpush1.msra.mxu0 0.0
  %2204 = vmatprep.subr.mxu0 0.0
  %2205 = vmatpush1.msra.mxu0 0.0
  %2206 = vmatprep.subr.mxu0 0.0
  %2207 = vmatpush1.msra.mxu0 0.0
  %2208 = vmatprep.subr.mxu0 0.0
  %2209 = vmatpush1.msra.mxu0 0.0
  %2210 = vmatprep.subr.mxu0 0.0
  %2211 = vmatpush1.msra.mxu0 0.0
  %2212 = vmatprep.subr.mxu0 0.0
  %2213 = vmatpush1.msra.mxu0 0.0
  %2214 = vmatprep.subr.mxu0 %v1512
  %2215 = vmatpush1.msra.mxu0 %v1511
  %2216 = vmatprep.subr.mxu0 %v1510
  %2217 = vmatpush1.msra.mxu0 %v1509
  %2218 = vmatprep.subr.mxu0 %v1508
  %2219 = vmatpush1.msra.mxu0 %v1507
  %2220 = vmatprep.subr.mxu0 %v1506
  %2221 = vmatpush1.msra.mxu0 %v1505
  %2222 = vmatprep.subr.mxu0 %v1504
  %2223 = vmatpush1.msra.mxu0 %v1503
  %2224 = vmatprep.subr.mxu0 %v1502
  %2225 = vmatpush1.msra.mxu0 %v1501
  %2226 = vmatprep.subr.mxu0 %v1500
  %2227 = vmatpush1.msra.mxu0 %v1499
  %2228 = vmatprep.subr.mxu0 %v1498
  %2229 = vmatpush1.msra.mxu0 %v1497
  %2230 = vmatprep.subr.mxu0 0.0
  %2231 = vmatpush2.msra.mxu0 0.0
  %2232 = vmatprep.subr.mxu0 0.0
  %2233 = vmatpush2.msra.mxu0 0.0
  %2234 = vmatprep.subr.mxu0 0.0
  %2235 = vmatpush2.msra.mxu0 0.0
  %2236 = vmatprep.subr.mxu0 0.0
  %2237 = vmatpush2.msra.mxu0 0.0
  %2238 = vmatprep.subr.mxu0 0.0
  %2239 = vmatpush2.msra.mxu0 0.0
  %2240 = vmatprep.subr.mxu0 0.0
  %2241 = vmatpush2.msra.mxu0 0.0
  %2242 = vmatprep.subr.mxu0 0.0
  %2243 = vmatpush2.msra.mxu0 0.0
  %2244 = vmatprep.subr.mxu0 0.0
  %2245 = vmatpush2.msra.mxu0 0.0
  %2246 = vmatprep.subr.mxu0 0.0
  %2247 = vmatpush2.msra.mxu0 0.0
  %2248 = vmatprep.subr.mxu0 0.0
  %2249 = vmatpush2.msra.mxu0 0.0
  %2250 = vmatprep.subr.mxu0 0.0
  %2251 = vmatpush2.msra.mxu0 0.0
  %2252 = vmatprep.subr.mxu0 0.0
  %2253 = vmatpush2.msra.mxu0 0.0
  %2254 = vmatprep.subr.mxu0 0.0
  %2255 = vmatpush2.msra.mxu0 0.0
  %2256 = vmatprep.subr.mxu0 0.0
  %2257 = vmatpush2.msra.mxu0 0.0
  %2258 = vmatprep.subr.mxu0 0.0
  %2259 = vmatpush2.msra.mxu0 0.0
  %2260 = vmatprep.subr.mxu0 0.0
  %2261 = vmatpush2.msra.mxu0 0.0
  %2262 = vmatprep.mubr.f32.mxu0 0.0
  %2263 = vmatmul.mubr.f32.gmra.mxu0 %v2196
  %v2264 = vpop.f32.mrf.mxu0
  %v2265 = vadd.f32 0.0, %v2264
  %v2266 = vpop.f32.mrf.mxu0
  %v2267 = vadd.f32 0.0, %v2266
  %2268 = vdwg.mxu0
  %v2269 = vadd.f32 %v1481, %v2265
  %v2270 = vadd.f32 %v1465, %v2267
  %v2271 = vxor.u32 %v2269, 2147483648
  %v2272 = vxor.u32 %v2270, 2147483648
  %v2273 = vmul.f32 %v2271, 1.442695
  %v2274 = vpow.pop %v2273
  %v2275 = vmul.f32 %v2272, 1.442695
  %v2276 = vpow.pop %v2275
  %v2277 = vadd.f32 %v2274, 1.0
  %v2278 = vadd.f32 %v2276, 1.0
  %v2279 = vrcp.pop %v2277
  %v2280 = vmul.f32 1.0, %v2279
  %v2281 = vrcp.pop %v2278
  %v2282 = vmul.f32 1.0, %v2281
  %v2283 = vmul.f32 %v2280, 2.0
  %v2284 = vsub.f32 %v2283, 1.0
  %v2285 = vmul.f32 %v2282, 2.0
  %v2286 = vsub.f32 %v2285, 1.0
  %v2287 = vmul.f32 %v2280, %v2160
  %2289 = vrot.lane.b32.xlu0 %v2284, 64
  %v2290 = vpop.permute.xlu0 %2289
  %v2292 = vmul.f32 %v2280, %v2290
  %2294 = vrot.lane.b32.xlu0 %v2292, 32
  %v2295 = vpop.permute.xlu0 %2294
  %v2297 = vadd.f32 %v2287, %v2295
  %v2298 = vmul.f32 %v2282, %v2171
  %2300 = vrot.lane.b32.xlu0 %v2286, 64
  %v2301 = vpop.permute.xlu0 %2300
  %v2303 = vmul.f32 %v2282, %v2301
  %2305 = vrot.lane.b32.xlu0 %v2303, 32
  %v2306 = vpop.permute.xlu0 %2305
  %v2308 = vadd.f32 %v2298, %v2306
  %v2309 = vtanh.pop %v2297
  %2311 = vrot.lane.b32.xlu0 %v2309, 64
  %v2312 = vpop.permute.xlu0 %2311
  %v2314 = vmul.f32 %v2280, %v2312
  %v2315 = vtanh.pop %v2308
  %2317 = vrot.lane.b32.xlu0 %v2315, 64
  %v2318 = vpop.permute.xlu0 %2317
  %v2320 = vmul.f32 %v2282, %v2318
  %2322 = vrot.lane.b32.xlu0 %v2314, 32
  %v2323 = vpop.permute.xlu0 %2322
  %2325 = vst.msk [vmem:[#allocation3 + $0x28] sm:$0xff] %vm357, %v2323
  %2327 = vrot.lane.b32.xlu0 %v2320, 64
  %v2328 = vpop.permute.xlu0 %2327
  %2330 = vst.msk [vmem:[#allocation3 + $0x10] sm:$0xff] %vm363, %v2328
  %v2331 = vsel %vm357, %v2323, %v2328
  %v2333 = vsel %vm226, %v2331, 0
  %2335 = vmatprep.subr.mxu0 0.0
  %2336 = vmatpush1.msra.mxu0 0.0
  %2337 = vmatprep.subr.mxu0 0.0
  %2338 = vmatpush1.msra.mxu0 0.0
  %2339 = vmatprep.subr.mxu0 0.0
  %2340 = vmatpush1.msra.mxu0 0.0
  %2341 = vmatprep.subr.mxu0 0.0
  %2342 = vmatpush1.msra.mxu0 0.0
  %2343 = vmatprep.subr.mxu0 0.0
  %2344 = vmatpush1.msra.mxu0 0.0
  %2345 = vmatprep.subr.mxu0 0.0
  %2346 = vmatpush1.msra.mxu0 0.0
  %2347 = vmatprep.subr.mxu0 0.0
  %2348 = vmatpush1.msra.mxu0 0.0
  %2349 = vmatprep.subr.mxu0 0.0
  %2350 = vmatpush1.msra.mxu0 0.0
  %2351 = vmatprep.subr.mxu0 %v1512
  %2352 = vmatpush1.msra.mxu0 %v1511
  %2353 = vmatprep.subr.mxu0 %v1510
  %2354 = vmatpush1.msra.mxu0 %v1509
  %2355 = vmatprep.subr.mxu0 %v1508
  %2356 = vmatpush1.msra.mxu0 %v1507
  %2357 = vmatprep.subr.mxu0 %v1506
  %2358 = vmatpush1.msra.mxu0 %v1505
  %2359 = vmatprep.subr.mxu0 %v1504
  %2360 = vmatpush1.msra.mxu0 %v1503
  %2361 = vmatprep.subr.mxu0 %v1502
  %2362 = vmatpush1.msra.mxu0 %v1501
  %2363 = vmatprep.subr.mxu0 %v1500
  %2364 = vmatpush1.msra.mxu0 %v1499
  %2365 = vmatprep.subr.mxu0 %v1498
  %2366 = vmatpush1.msra.mxu0 %v1497
  %2367 = vmatprep.subr.mxu0 0.0
  %2368 = vmatpush2.msra.mxu0 0.0
  %2369 = vmatprep.subr.mxu0 0.0
  %2370 = vmatpush2.msra.mxu0 0.0
  %2371 = vmatprep.subr.mxu0 0.0
  %2372 = vmatpush2.msra.mxu0 0.0
  %2373 = vmatprep.subr.mxu0 0.0
  %2374 = vmatpush2.msra.mxu0 0.0
  %2375 = vmatprep.subr.mxu0 0.0
  %2376 = vmatpush2.msra.mxu0 0.0
  %2377 = vmatprep.subr.mxu0 0.0
  %2378 = vmatpush2.msra.mxu0 0.0
  %2379 = vmatprep.subr.mxu0 0.0
  %2380 = vmatpush2.msra.mxu0 0.0
  %2381 = vmatprep.subr.mxu0 0.0
  %2382 = vmatpush2.msra.mxu0 0.0
  %2383 = vmatprep.subr.mxu0 0.0
  %2384 = vmatpush2.msra.mxu0 0.0
  %2385 = vmatprep.subr.mxu0 0.0
  %2386 = vmatpush2.msra.mxu0 0.0
  %2387 = vmatprep.subr.mxu0 0.0
  %2388 = vmatpush2.msra.mxu0 0.0
  %2389 = vmatprep.subr.mxu0 0.0
  %2390 = vmatpush2.msra.mxu0 0.0
  %2391 = vmatprep.subr.mxu0 0.0
  %2392 = vmatpush2.msra.mxu0 0.0
  %2393 = vmatprep.subr.mxu0 0.0
  %2394 = vmatpush2.msra.mxu0 0.0
  %2395 = vmatprep.subr.mxu0 0.0
  %2396 = vmatpush2.msra.mxu0 0.0
  %2397 = vmatprep.subr.mxu0 0.0
  %2398 = vmatpush2.msra.mxu0 0.0
  %2399 = vmatprep.mubr.f32.mxu0 0.0
  %2400 = vmatmul.mubr.f32.gmra.mxu0 %v2333
  %v2401 = vpop.f32.mrf.mxu0
  %v2402 = vadd.f32 0.0, %v2401
  %v2403 = vpop.f32.mrf.mxu0
  %v2404 = vadd.f32 0.0, %v2403
  %2405 = vdwg.mxu0
  %v2406 = vadd.f32 %v1487, %v2402
  %v2407 = vadd.f32 %v1459, %v2404
  %v2408 = vxor.u32 %v2406, 2147483648
  %v2409 = vxor.u32 %v2407, 2147483648
  %v2410 = vmul.f32 %v2408, 1.442695
  %v2411 = vpow.pop %v2410
  %v2412 = vmul.f32 %v2409, 1.442695
  %v2413 = vpow.pop %v2412
  %v2414 = vadd.f32 %v2411, 1.0
  %v2415 = vadd.f32 %v2413, 1.0
  %v2416 = vrcp.pop %v2414
  %v2417 = vmul.f32 1.0, %v2416
  %v2418 = vrcp.pop %v2415
  %v2419 = vmul.f32 1.0, %v2418
  %v2420 = vmul.f32 %v2417, 2.0
  %v2421 = vsub.f32 %v2420, 1.0
  %v2422 = vmul.f32 %v2419, 2.0
  %v2423 = vsub.f32 %v2422, 1.0
  %v2424 = vmul.f32 %v2417, %v2297
  %2426 = vrot.lane.b32.xlu0 %v2421, 64
  %v2427 = vpop.permute.xlu0 %2426
  %v2429 = vmul.f32 %v2417, %v2427
  %2431 = vrot.lane.b32.xlu0 %v2429, 32
  %v2432 = vpop.permute.xlu0 %2431
  %v2434 = vadd.f32 %v2424, %v2432
  %v2435 = vmul.f32 %v2419, %v2308
  %2437 = vrot.lane.b32.xlu0 %v2423, 64
  %v2438 = vpop.permute.xlu0 %2437
  %v2440 = vmul.f32 %v2419, %v2438
  %2442 = vrot.lane.b32.xlu0 %v2440, 32
  %v2443 = vpop.permute.xlu0 %2442
  %v2445 = vadd.f32 %v2435, %v2443
  %v2446 = vtanh.pop %v2434
  %2448 = vrot.lane.b32.xlu0 %v2446, 64
  %v2449 = vpop.permute.xlu0 %2448
  %v2451 = vmul.f32 %v2417, %v2449
  %v2452 = vtanh.pop %v2445
  %2454 = vrot.lane.b32.xlu0 %v2452, 64
  %v2455 = vpop.permute.xlu0 %2454
  %v2457 = vmul.f32 %v2419, %v2455
  %2459 = vrot.lane.b32.xlu0 %v2451, 32
  %v2460 = vpop.permute.xlu0 %2459
  %2462 = vst.msk [vmem:[#allocation3 + $0x30] sm:$0xff] %vm357, %v2460
  %2464 = vrot.lane.b32.xlu0 %v2457, 64
  %v2465 = vpop.permute.xlu0 %2464
  %2467 = vst.msk [vmem:[#allocation3 + $0x8] sm:$0xff] %vm363, %v2465
  %v2468 = vsel %vm357, %v2460, %v2465
  %v2470 = vsel %vm226, %v2468, 0
  %2472 = vmatprep.subr.mxu0 0.0
  %2473 = vmatpush1.msra.mxu0 0.0
  %2474 = vmatprep.subr.mxu0 0.0
  %2475 = vmatpush1.msra.mxu0 0.0
  %2476 = vmatprep.subr.mxu0 0.0
  %2477 = vmatpush1.msra.mxu0 0.0
  %2478 = vmatprep.subr.mxu0 0.0
  %2479 = vmatpush1.msra.mxu0 0.0
  %2480 = vmatprep.subr.mxu0 0.0
  %2481 = vmatpush1.msra.mxu0 0.0
  %2482 = vmatprep.subr.mxu0 0.0
  %2483 = vmatpush1.msra.mxu0 0.0
  %2484 = vmatprep.subr.mxu0 0.0
  %2485 = vmatpush1.msra.mxu0 0.0
  %2486 = vmatprep.subr.mxu0 0.0
  %2487 = vmatpush1.msra.mxu0 0.0
  %2488 = vmatprep.subr.mxu0 %v1512
  %2489 = vmatpush1.msra.mxu0 %v1511
  %2490 = vmatprep.subr.mxu0 %v1510
  %2491 = vmatpush1.msra.mxu0 %v1509
  %2492 = vmatprep.subr.mxu0 %v1508
  %2493 = vmatpush1.msra.mxu0 %v1507
  %2494 = vmatprep.subr.mxu0 %v1506
  %2495 = vmatpush1.msra.mxu0 %v1505
  %2496 = vmatprep.subr.mxu0 %v1504
  %2497 = vmatpush1.msra.mxu0 %v1503
  %2498 = vmatprep.subr.mxu0 %v1502
  %2499 = vmatpush1.msra.mxu0 %v1501
  %2500 = vmatprep.subr.mxu0 %v1500
  %2501 = vmatpush1.msra.mxu0 %v1499
  %2502 = vmatprep.subr.mxu0 %v1498
  %2503 = vmatpush1.msra.mxu0 %v1497
  %2504 = vmatprep.subr.mxu0 0.0
  %2505 = vmatpush2.msra.mxu0 0.0
  %2506 = vmatprep.subr.mxu0 0.0
  %2507 = vmatpush2.msra.mxu0 0.0
  %2508 = vmatprep.subr.mxu0 0.0
  %2509 = vmatpush2.msra.mxu0 0.0
  %2510 = vmatprep.subr.mxu0 0.0
  %2511 = vmatpush2.msra.mxu0 0.0
  %2512 = vmatprep.subr.mxu0 0.0
  %2513 = vmatpush2.msra.mxu0 0.0
  %2514 = vmatprep.subr.mxu0 0.0
  %2515 = vmatpush2.msra.mxu0 0.0
  %2516 = vmatprep.subr.mxu0 0.0
  %2517 = vmatpush2.msra.mxu0 0.0
  %2518 = vmatprep.subr.mxu0 0.0
  %2519 = vmatpush2.msra.mxu0 0.0
  %2520 = vmatprep.subr.mxu0 0.0
  %2521 = vmatpush2.msra.mxu0 0.0
  %2522 = vmatprep.subr.mxu0 0.0
  %2523 = vmatpush2.msra.mxu0 0.0
  %2524 = vmatprep.subr.mxu0 0.0
  %2525 = vmatpush2.msra.mxu0 0.0
  %2526 = vmatprep.subr.mxu0 0.0
  %2527 = vmatpush2.msra.mxu0 0.0
  %2528 = vmatprep.subr.mxu0 0.0
  %2529 = vmatpush2.msra.mxu0 0.0
  %2530 = vmatprep.subr.mxu0 0.0
  %2531 = vmatpush2.msra.mxu0 0.0
  %2532 = vmatprep.subr.mxu0 0.0
  %2533 = vmatpush2.msra.mxu0 0.0
  %2534 = vmatprep.subr.mxu0 0.0
  %2535 = vmatpush2.msra.mxu0 0.0
  %2536 = vmatprep.mubr.f32.mxu0 0.0
  %2537 = vmatmul.mubr.f32.gmra.mxu0 %v2470
  %v2538 = vpop.f32.mrf.mxu0
  %v2539 = vadd.f32 0.0, %v2538
  %v2540 = vpop.f32.mrf.mxu0
  %v2541 = vadd.f32 0.0, %v2540
  %2542 = vdwg.mxu0
  %v2543 = vadd.f32 %v1493, %v2539
  %v2544 = vadd.f32 %v1453, %v2541
  %v2545 = vxor.u32 %v2543, 2147483648
  %v2546 = vxor.u32 %v2544, 2147483648
  %v2547 = vmul.f32 %v2545, 1.442695
  %v2548 = vpow.pop %v2547
  %v2549 = vmul.f32 %v2546, 1.442695
  %v2550 = vpow.pop %v2549
  %v2551 = vadd.f32 %v2548, 1.0
  %v2552 = vadd.f32 %v2550, 1.0
  %v2553 = vrcp.pop %v2551
  %v2554 = vmul.f32 1.0, %v2553
  %v2555 = vrcp.pop %v2552
  %v2556 = vmul.f32 1.0, %v2555
  %v2557 = vmul.f32 %v2554, 2.0
  %v2558 = vsub.f32 %v2557, 1.0
  %v2559 = vmul.f32 %v2556, 2.0
  %v2560 = vsub.f32 %v2559, 1.0
  %v2561 = vmul.f32 %v2554, %v2434
  %2563 = vrot.lane.b32.xlu0 %v2558, 64
  %v2564 = vpop.permute.xlu0 %2563
  %v2566 = vmul.f32 %v2554, %v2564
  %2568 = vrot.lane.b32.xlu0 %v2566, 32
  %v2569 = vpop.permute.xlu0 %2568
  %v2571 = vadd.f32 %v2561, %v2569
  %v2572 = vmul.f32 %v2556, %v2445
  %2574 = vrot.lane.b32.xlu0 %v2560, 64
  %v2575 = vpop.permute.xlu0 %2574
  %v2577 = vmul.f32 %v2556, %v2575
  %2579 = vrot.lane.b32.xlu0 %v2577, 32
  %v2580 = vpop.permute.xlu0 %2579
  %v2582 = vadd.f32 %v2572, %v2580
  %v2583 = vtanh.pop %v2571
  %2585 = vrot.lane.b32.xlu0 %v2583, 64
  %v2586 = vpop.permute.xlu0 %2585
  %v2588 = vmul.f32 %v2554, %v2586
  %v2589 = vtanh.pop %v2582
  %2591 = vrot.lane.b32.xlu0 %v2589, 64
  %v2592 = vpop.permute.xlu0 %2591
  %v2594 = vmul.f32 %v2556, %v2592
  %2596 = vrot.lane.b32.xlu0 %v2588, 32
  %v2597 = vpop.permute.xlu0 %2596
  %2599 = vst.msk [vmem:[#allocation3 + $0x38] sm:$0xff] %vm357, %v2597
  %2601 = vrot.lane.b32.xlu0 %v2594, 64
  %v2602 = vpop.permute.xlu0 %2601
  %2604 = vst.msk [vmem:[#allocation3] sm:$0xff] %vm363, %v2602
  %v2605 = vld [vmem:[%s8] sm:$0x1]
  %v2606 = vld [vmem:[#allocation3] sm:$0xff]
  %v2607 = vld [vmem:[%s7] sm:$0xff]
  %v2608 = vld [vmem:[%s7 + $0x8] sm:$0xff]
  %v2609 = vld [vmem:[%s7 + $0x10] sm:$0xff]
  %v2610 = vld [vmem:[%s7 + $0x18] sm:$0xff]
  %v2611 = vld [vmem:[%s7 + $0x20] sm:$0xff]
  %v2612 = vld [vmem:[%s7 + $0x28] sm:$0xff]
  %v2613 = vld [vmem:[%s7 + $0x30] sm:$0xff]
  %v2614 = vld [vmem:[%s7 + $0x38] sm:$0xff]
  %v2616 = vsel %vm226, %v2606, 0
  %2618 = vmatprep.subr.mxu0 0.0
  %2619 = vmatpush1.msra.mxu0 0.0
  %2620 = vmatprep.subr.mxu0 0.0
  %2621 = vmatpush1.msra.mxu0 0.0
  %2622 = vmatprep.subr.mxu0 0.0
  %2623 = vmatpush1.msra.mxu0 0.0
  %2624 = vmatprep.subr.mxu0 0.0
  %2625 = vmatpush1.msra.mxu0 0.0
  %2626 = vmatprep.subr.mxu0 0.0
  %2627 = vmatpush1.msra.mxu0 0.0
  %2628 = vmatprep.subr.mxu0 0.0
  %2629 = vmatpush1.msra.mxu0 0.0
  %2630 = vmatprep.subr.mxu0 0.0
  %2631 = vmatpush1.msra.mxu0 0.0
  %2632 = vmatprep.subr.mxu0 0.0
  %2633 = vmatpush1.msra.mxu0 0.0
  %2634 = vmatprep.subr.mxu0 0.0
  %2635 = vmatpush1.msra.mxu0 %v2614
  %2636 = vmatprep.subr.mxu0 0.0
  %2637 = vmatpush1.msra.mxu0 %v2613
  %2638 = vmatprep.subr.mxu0 0.0
  %2639 = vmatpush1.msra.mxu0 %v2612
  %2640 = vmatprep.subr.mxu0 0.0
  %2641 = vmatpush1.msra.mxu0 %v2611
  %2642 = vmatprep.subr.mxu0 0.0
  %2643 = vmatpush1.msra.mxu0 %v2610
  %2644 = vmatprep.subr.mxu0 0.0
  %2645 = vmatpush1.msra.mxu0 %v2609
  %2646 = vmatprep.subr.mxu0 0.0
  %2647 = vmatpush1.msra.mxu0 %v2608
  %2648 = vmatprep.subr.mxu0 0.0
  %2649 = vmatpush1.msra.mxu0 %v2607
  %2650 = vmatprep.subr.mxu0 0.0
  %2651 = vmatpush2.msra.mxu0 0.0
  %2652 = vmatprep.subr.mxu0 0.0
  %2653 = vmatpush2.msra.mxu0 0.0
  %2654 = vmatprep.subr.mxu0 0.0
  %2655 = vmatpush2.msra.mxu0 0.0
  %2656 = vmatprep.subr.mxu0 0.0
  %2657 = vmatpush2.msra.mxu0 0.0
  %2658 = vmatprep.subr.mxu0 0.0
  %2659 = vmatpush2.msra.mxu0 0.0
  %2660 = vmatprep.subr.mxu0 0.0
  %2661 = vmatpush2.msra.mxu0 0.0
  %2662 = vmatprep.subr.mxu0 0.0
  %2663 = vmatpush2.msra.mxu0 0.0
  %2664 = vmatprep.subr.mxu0 0.0
  %2665 = vmatpush2.msra.mxu0 0.0
  %2666 = vmatprep.subr.mxu0 0.0
  %2667 = vmatpush2.msra.mxu0 0.0
  %2668 = vmatprep.subr.mxu0 0.0
  %2669 = vmatpush2.msra.mxu0 0.0
  %2670 = vmatprep.subr.mxu0 0.0
  %2671 = vmatpush2.msra.mxu0 0.0
  %2672 = vmatprep.subr.mxu0 0.0
  %2673 = vmatpush2.msra.mxu0 0.0
  %2674 = vmatprep.subr.mxu0 0.0
  %2675 = vmatpush2.msra.mxu0 0.0
  %2676 = vmatprep.subr.mxu0 0.0
  %2677 = vmatpush2.msra.mxu0 0.0
  %2678 = vmatprep.subr.mxu0 0.0
  %2679 = vmatpush2.msra.mxu0 0.0
  %2680 = vmatprep.subr.mxu0 0.0
  %2681 = vmatpush2.msra.mxu0 0.0
  %2682 = vmatprep.mubr.f32.mxu0 0.0
  %2683 = vmatmul.mubr.f32.gmra.mxu0 %v2616
  %v2684 = vpop.f32.mrf.mxu0
  %v2685 = vadd.f32 0.0, %v2684
  %v2686 = vpop.f32.mrf.mxu0
  %2687 = vdwg.mxu0
  %v2689 = vlaneseq
  %v2690 = vshrl.u32 %v2689, 7
  %v2691 = vsub.s32 0, %v2690
  %v2692 = vrot.slane %v2605, %v2691
  %v2694 = vadd.f32 %v2692, %v2685
  %v2695 = vld [vmem:[#allocation3 + $0x8] sm:$0xff]
  %s2696 = scalar_lea.vmem %s7, 64
  %v2697 = vld [vmem:[%s2696] sm:$0xff]
  %v2698 = vld [vmem:[%s2696 + $0x8] sm:$0xff]
  %v2699 = vld [vmem:[%s2696 + $0x10] sm:$0xff]
  %v2700 = vld [vmem:[%s2696 + $0x18] sm:$0xff]
  %v2701 = vld [vmem:[%s2696 + $0x20] sm:$0xff]
  %v2702 = vld [vmem:[%s2696 + $0x28] sm:$0xff]
  %v2703 = vld [vmem:[%s2696 + $0x30] sm:$0xff]
  %v2704 = vld [vmem:[%s2696 + $0x38] sm:$0xff]
  %v2706 = vsel %vm226, %v2695, 0
  %2708 = vmatprep.subr.mxu0 0.0
  %2709 = vmatpush1.msra.mxu0 0.0
  %2710 = vmatprep.subr.mxu0 0.0
  %2711 = vmatpush1.msra.mxu0 0.0
  %2712 = vmatprep.subr.mxu0 0.0
  %2713 = vmatpush1.msra.mxu0 0.0
  %2714 = vmatprep.subr.mxu0 0.0
  %2715 = vmatpush1.msra.mxu0 0.0
  %2716 = vmatprep.subr.mxu0 0.0
  %2717 = vmatpush1.msra.mxu0 0.0
  %2718 = vmatprep.subr.mxu0 0.0
  %2719 = vmatpush1.msra.mxu0 0.0
  %2720 = vmatprep.subr.mxu0 0.0
  %2721 = vmatpush1.msra.mxu0 0.0
  %2722 = vmatprep.subr.mxu0 0.0
  %2723 = vmatpush1.msra.mxu0 0.0
  %2724 = vmatprep.subr.mxu0 0.0
  %2725 = vmatpush1.msra.mxu0 %v2704
  %2726 = vmatprep.subr.mxu0 0.0
  %2727 = vmatpush1.msra.mxu0 %v2703
  %2728 = vmatprep.subr.mxu0 0.0
  %2729 = vmatpush1.msra.mxu0 %v2702
  %2730 = vmatprep.subr.mxu0 0.0
  %2731 = vmatpush1.msra.mxu0 %v2701
  %2732 = vmatprep.subr.mxu0 0.0
  %2733 = vmatpush1.msra.mxu0 %v2700
  %2734 = vmatprep.subr.mxu0 0.0
  %2735 = vmatpush1.msra.mxu0 %v2699
  %2736 = vmatprep.subr.mxu0 0.0
  %2737 = vmatpush1.msra.mxu0 %v2698
  %2738 = vmatprep.subr.mxu0 0.0
  %2739 = vmatpush1.msra.mxu0 %v2697
  %2740 = vmatprep.subr.mxu0 0.0
  %2741 = vmatpush2.msra.mxu0 0.0
  %2742 = vmatprep.subr.mxu0 0.0
  %2743 = vmatpush2.msra.mxu0 0.0
  %2744 = vmatprep.subr.mxu0 0.0
  %2745 = vmatpush2.msra.mxu0 0.0
  %2746 = vmatprep.subr.mxu0 0.0
  %2747 = vmatpush2.msra.mxu0 0.0
  %2748 = vmatprep.subr.mxu0 0.0
  %2749 = vmatpush2.msra.mxu0 0.0
  %2750 = vmatprep.subr.mxu0 0.0
  %2751 = vmatpush2.msra.mxu0 0.0
  %2752 = vmatprep.subr.mxu0 0.0
  %2753 = vmatpush2.msra.mxu0 0.0
  %2754 = vmatprep.subr.mxu0 0.0
  %2755 = vmatpush2.msra.mxu0 0.0
  %2756 = vmatprep.subr.mxu0 0.0
  %2757 = vmatpush2.msra.mxu0 0.0
  %2758 = vmatprep.subr.mxu0 0.0
  %2759 = vmatpush2.msra.mxu0 0.0
  %2760 = vmatprep.subr.mxu0 0.0
  %2761 = vmatpush2.msra.mxu0 0.0
  %2762 = vmatprep.subr.mxu0 0.0
  %2763 = vmatpush2.msra.mxu0 0.0
  %2764 = vmatprep.subr.mxu0 0.0
  %2765 = vmatpush2.msra.mxu0 0.0
  %2766 = vmatprep.subr.mxu0 0.0
  %2767 = vmatpush2.msra.mxu0 0.0
  %2768 = vmatprep.subr.mxu0 0.0
  %2769 = vmatpush2.msra.mxu0 0.0
  %2770 = vmatprep.subr.mxu0 0.0
  %2771 = vmatpush2.msra.mxu0 0.0
  %2772 = vmatprep.mubr.f32.mxu0 0.0
  %2773 = vmatmul.mubr.f32.gmra.mxu0 %v2706
  %v2774 = vpop.f32.mrf.mxu0
  %v2775 = vadd.f32 0.0, %v2774
  %v2776 = vpop.f32.mrf.mxu0
  %2777 = vdwg.mxu0
  %v2778 = vadd.f32 %v2694, %v2775
  %v2779 = vld [vmem:[#allocation3 + $0x10] sm:$0xff]
  %s2780 = scalar_lea.vmem %s7, 128
  %v2781 = vld [vmem:[%s2780] sm:$0xff]
  %v2782 = vld [vmem:[%s2780 + $0x8] sm:$0xff]
  %v2783 = vld [vmem:[%s2780 + $0x10] sm:$0xff]
  %v2784 = vld [vmem:[%s2780 + $0x18] sm:$0xff]
  %v2785 = vld [vmem:[%s2780 + $0x20] sm:$0xff]
  %v2786 = vld [vmem:[%s2780 + $0x28] sm:$0xff]
  %v2787 = vld [vmem:[%s2780 + $0x30] sm:$0xff]
  %v2788 = vld [vmem:[%s2780 + $0x38] sm:$0xff]
  %v2790 = vsel %vm226, %v2779, 0
  %2792 = vmatprep.subr.mxu0 0.0
  %2793 = vmatpush1.msra.mxu0 0.0
  %2794 = vmatprep.subr.mxu0 0.0
  %2795 = vmatpush1.msra.mxu0 0.0
  %2796 = vmatprep.subr.mxu0 0.0
  %2797 = vmatpush1.msra.mxu0 0.0
  %2798 = vmatprep.subr.mxu0 0.0
  %2799 = vmatpush1.msra.mxu0 0.0
  %2800 = vmatprep.subr.mxu0 0.0
  %2801 = vmatpush1.msra.mxu0 0.0
  %2802 = vmatprep.subr.mxu0 0.0
  %2803 = vmatpush1.msra.mxu0 0.0
  %2804 = vmatprep.subr.mxu0 0.0
  %2805 = vmatpush1.msra.mxu0 0.0
  %2806 = vmatprep.subr.mxu0 0.0
  %2807 = vmatpush1.msra.mxu0 0.0
  %2808 = vmatprep.subr.mxu0 0.0
  %2809 = vmatpush1.msra.mxu0 %v2788
  %2810 = vmatprep.subr.mxu0 0.0
  %2811 = vmatpush1.msra.mxu0 %v2787
  %2812 = vmatprep.subr.mxu0 0.0
  %2813 = vmatpush1.msra.mxu0 %v2786
  %2814 = vmatprep.subr.mxu0 0.0
  %2815 = vmatpush1.msra.mxu0 %v2785
  %2816 = vmatprep.subr.mxu0 0.0
  %2817 = vmatpush1.msra.mxu0 %v2784
  %2818 = vmatprep.subr.mxu0 0.0
  %2819 = vmatpush1.msra.mxu0 %v2783
  %2820 = vmatprep.subr.mxu0 0.0
  %2821 = vmatpush1.msra.mxu0 %v2782
  %2822 = vmatprep.subr.mxu0 0.0
  %2823 = vmatpush1.msra.mxu0 %v2781
  %2824 = vmatprep.subr.mxu0 0.0
  %2825 = vmatpush2.msra.mxu0 0.0
  %2826 = vmatprep.subr.mxu0 0.0
  %2827 = vmatpush2.msra.mxu0 0.0
  %2828 = vmatprep.subr.mxu0 0.0
  %2829 = vmatpush2.msra.mxu0 0.0
  %2830 = vmatprep.subr.mxu0 0.0
  %2831 = vmatpush2.msra.mxu0 0.0
  %2832 = vmatprep.subr.mxu0 0.0
  %2833 = vmatpush2.msra.mxu0 0.0
  %2834 = vmatprep.subr.mxu0 0.0
  %2835 = vmatpush2.msra.mxu0 0.0
  %2836 = vmatprep.subr.mxu0 0.0
  %2837 = vmatpush2.msra.mxu0 0.0
  %2838 = vmatprep.subr.mxu0 0.0
  %2839 = vmatpush2.msra.mxu0 0.0
  %2840 = vmatprep.subr.mxu0 0.0
  %2841 = vmatpush2.msra.mxu0 0.0
  %2842 = vmatprep.subr.mxu0 0.0
  %2843 = vmatpush2.msra.mxu0 0.0
  %2844 = vmatprep.subr.mxu0 0.0
  %2845 = vmatpush2.msra.mxu0 0.0
  %2846 = vmatprep.subr.mxu0 0.0
  %2847 = vmatpush2.msra.mxu0 0.0
  %2848 = vmatprep.subr.mxu0 0.0
  %2849 = vmatpush2.msra.mxu0 0.0
  %2850 = vmatprep.subr.mxu0 0.0
  %2851 = vmatpush2.msra.mxu0 0.0
  %2852 = vmatprep.subr.mxu0 0.0
  %2853 = vmatpush2.msra.mxu0 0.0
  %2854 = vmatprep.subr.mxu0 0.0
  %2855 = vmatpush2.msra.mxu0 0.0
  %2856 = vmatprep.mubr.f32.mxu0 0.0
  %2857 = vmatmul.mubr.f32.gmra.mxu0 %v2790
  %v2858 = vpop.f32.mrf.mxu0
  %v2859 = vadd.f32 0.0, %v2858
  %v2860 = vpop.f32.mrf.mxu0
  %2861 = vdwg.mxu0
  %v2862 = vadd.f32 %v2778, %v2859
  %v2863 = vld [vmem:[#allocation3 + $0x18] sm:$0xff]
  %s2864 = scalar_lea.vmem %s7, 192
  %v2865 = vld [vmem:[%s2864] sm:$0xff]
  %v2866 = vld [vmem:[%s2864 + $0x8] sm:$0xff]
  %v2867 = vld [vmem:[%s2864 + $0x10] sm:$0xff]
  %v2868 = vld [vmem:[%s2864 + $0x18] sm:$0xff]
  %v2869 = vld [vmem:[%s2864 + $0x20] sm:$0xff]
  %v2870 = vld [vmem:[%s2864 + $0x28] sm:$0xff]
  %v2871 = vld [vmem:[%s2864 + $0x30] sm:$0xff]
  %v2872 = vld [vmem:[%s2864 + $0x38] sm:$0xff]
  %v2874 = vsel %vm226, %v2863, 0
  %2876 = vmatprep.subr.mxu0 0.0
  %2877 = vmatpush1.msra.mxu0 0.0
  %2878 = vmatprep.subr.mxu0 0.0
  %2879 = vmatpush1.msra.mxu0 0.0
  %2880 = vmatprep.subr.mxu0 0.0
  %2881 = vmatpush1.msra.mxu0 0.0
  %2882 = vmatprep.subr.mxu0 0.0
  %2883 = vmatpush1.msra.mxu0 0.0
  %2884 = vmatprep.subr.mxu0 0.0
  %2885 = vmatpush1.msra.mxu0 0.0
  %2886 = vmatprep.subr.mxu0 0.0
  %2887 = vmatpush1.msra.mxu0 0.0
  %2888 = vmatprep.subr.mxu0 0.0
  %2889 = vmatpush1.msra.mxu0 0.0
  %2890 = vmatprep.subr.mxu0 0.0
  %2891 = vmatpush1.msra.mxu0 0.0
  %2892 = vmatprep.subr.mxu0 0.0
  %2893 = vmatpush1.msra.mxu0 %v2872
  %2894 = vmatprep.subr.mxu0 0.0
  %2895 = vmatpush1.msra.mxu0 %v2871
  %2896 = vmatprep.subr.mxu0 0.0
  %2897 = vmatpush1.msra.mxu0 %v2870
  %2898 = vmatprep.subr.mxu0 0.0
  %2899 = vmatpush1.msra.mxu0 %v2869
  %2900 = vmatprep.subr.mxu0 0.0
  %2901 = vmatpush1.msra.mxu0 %v2868
  %2902 = vmatprep.subr.mxu0 0.0
  %2903 = vmatpush1.msra.mxu0 %v2867
  %2904 = vmatprep.subr.mxu0 0.0
  %2905 = vmatpush1.msra.mxu0 %v2866
  %2906 = vmatprep.subr.mxu0 0.0
  %2907 = vmatpush1.msra.mxu0 %v2865
  %2908 = vmatprep.subr.mxu0 0.0
  %2909 = vmatpush2.msra.mxu0 0.0
  %2910 = vmatprep.subr.mxu0 0.0
  %2911 = vmatpush2.msra.mxu0 0.0
  %2912 = vmatprep.subr.mxu0 0.0
  %2913 = vmatpush2.msra.mxu0 0.0
  %2914 = vmatprep.subr.mxu0 0.0
  %2915 = vmatpush2.msra.mxu0 0.0
  %2916 = vmatprep.subr.mxu0 0.0
  %2917 = vmatpush2.msra.mxu0 0.0
  %2918 = vmatprep.subr.mxu0 0.0
  %2919 = vmatpush2.msra.mxu0 0.0
  %2920 = vmatprep.subr.mxu0 0.0
  %2921 = vmatpush2.msra.mxu0 0.0
  %2922 = vmatprep.subr.mxu0 0.0
  %2923 = vmatpush2.msra.mxu0 0.0
  %2924 = vmatprep.subr.mxu0 0.0
  %2925 = vmatpush2.msra.mxu0 0.0
  %2926 = vmatprep.subr.mxu0 0.0
  %2927 = vmatpush2.msra.mxu0 0.0
  %2928 = vmatprep.subr.mxu0 0.0
  %2929 = vmatpush2.msra.mxu0 0.0
  %2930 = vmatprep.subr.mxu0 0.0
  %2931 = vmatpush2.msra.mxu0 0.0
  %2932 = vmatprep.subr.mxu0 0.0
  %2933 = vmatpush2.msra.mxu0 0.0
  %2934 = vmatprep.subr.mxu0 0.0
  %2935 = vmatpush2.msra.mxu0 0.0
  %2936 = vmatprep.subr.mxu0 0.0
  %2937 = vmatpush2.msra.mxu0 0.0
  %2938 = vmatprep.subr.mxu0 0.0
  %2939 = vmatpush2.msra.mxu0 0.0
  %2940 = vmatprep.mubr.f32.mxu0 0.0
  %2941 = vmatmul.mubr.f32.gmra.mxu0 %v2874
  %v2942 = vpop.f32.mrf.mxu0
  %v2943 = vadd.f32 0.0, %v2942
  %v2944 = vpop.f32.mrf.mxu0
  %2945 = vdwg.mxu0
  %v2946 = vadd.f32 %v2862, %v2943
  %v2947 = vld [vmem:[#allocation3 + $0x20] sm:$0xff]
  %s2948 = scalar_lea.vmem %s7, 256
  %v2949 = vld [vmem:[%s2948] sm:$0xff]
  %v2950 = vld [vmem:[%s2948 + $0x8] sm:$0xff]
  %v2951 = vld [vmem:[%s2948 + $0x10] sm:$0xff]
  %v2952 = vld [vmem:[%s2948 + $0x18] sm:$0xff]
  %v2953 = vld [vmem:[%s2948 + $0x20] sm:$0xff]
  %v2954 = vld [vmem:[%s2948 + $0x28] sm:$0xff]
  %v2955 = vld [vmem:[%s2948 + $0x30] sm:$0xff]
  %v2956 = vld [vmem:[%s2948 + $0x38] sm:$0xff]
  %v2958 = vsel %vm226, %v2947, 0
  %2960 = vmatprep.subr.mxu0 0.0
  %2961 = vmatpush1.msra.mxu0 0.0
  %2962 = vmatprep.subr.mxu0 0.0
  %2963 = vmatpush1.msra.mxu0 0.0
  %2964 = vmatprep.subr.mxu0 0.0
  %2965 = vmatpush1.msra.mxu0 0.0
  %2966 = vmatprep.subr.mxu0 0.0
  %2967 = vmatpush1.msra.mxu0 0.0
  %2968 = vmatprep.subr.mxu0 0.0
  %2969 = vmatpush1.msra.mxu0 0.0
  %2970 = vmatprep.subr.mxu0 0.0
  %2971 = vmatpush1.msra.mxu0 0.0
  %2972 = vmatprep.subr.mxu0 0.0
  %2973 = vmatpush1.msra.mxu0 0.0
  %2974 = vmatprep.subr.mxu0 0.0
  %2975 = vmatpush1.msra.mxu0 0.0
  %2976 = vmatprep.subr.mxu0 0.0
  %2977 = vmatpush1.msra.mxu0 %v2956
  %2978 = vmatprep.subr.mxu0 0.0
  %2979 = vmatpush1.msra.mxu0 %v2955
  %2980 = vmatprep.subr.mxu0 0.0
  %2981 = vmatpush1.msra.mxu0 %v2954
  %2982 = vmatprep.subr.mxu0 0.0
  %2983 = vmatpush1.msra.mxu0 %v2953
  %2984 = vmatprep.subr.mxu0 0.0
  %2985 = vmatpush1.msra.mxu0 %v2952
  %2986 = vmatprep.subr.mxu0 0.0
  %2987 = vmatpush1.msra.mxu0 %v2951
  %2988 = vmatprep.subr.mxu0 0.0
  %2989 = vmatpush1.msra.mxu0 %v2950
  %2990 = vmatprep.subr.mxu0 0.0
  %2991 = vmatpush1.msra.mxu0 %v2949
  %2992 = vmatprep.subr.mxu0 0.0
  %2993 = vmatpush2.msra.mxu0 0.0
  %2994 = vmatprep.subr.mxu0 0.0
  %2995 = vmatpush2.msra.mxu0 0.0
  %2996 = vmatprep.subr.mxu0 0.0
  %2997 = vmatpush2.msra.mxu0 0.0
  %2998 = vmatprep.subr.mxu0 0.0
  %2999 = vmatpush2.msra.mxu0 0.0
  %3000 = vmatprep.subr.mxu0 0.0
  %3001 = vmatpush2.msra.mxu0 0.0
  %3002 = vmatprep.subr.mxu0 0.0
  %3003 = vmatpush2.msra.mxu0 0.0
  %3004 = vmatprep.subr.mxu0 0.0
  %3005 = vmatpush2.msra.mxu0 0.0
  %3006 = vmatprep.subr.mxu0 0.0
  %3007 = vmatpush2.msra.mxu0 0.0
  %3008 = vmatprep.subr.mxu0 0.0
  %3009 = vmatpush2.msra.mxu0 0.0
  %3010 = vmatprep.subr.mxu0 0.0
  %3011 = vmatpush2.msra.mxu0 0.0
  %3012 = vmatprep.subr.mxu0 0.0
  %3013 = vmatpush2.msra.mxu0 0.0
  %3014 = vmatprep.subr.mxu0 0.0
  %3015 = vmatpush2.msra.mxu0 0.0
  %3016 = vmatprep.subr.mxu0 0.0
  %3017 = vmatpush2.msra.mxu0 0.0
  %3018 = vmatprep.subr.mxu0 0.0
  %3019 = vmatpush2.msra.mxu0 0.0
  %3020 = vmatprep.subr.mxu0 0.0
  %3021 = vmatpush2.msra.mxu0 0.0
  %3022 = vmatprep.subr.mxu0 0.0
  %3023 = vmatpush2.msra.mxu0 0.0
  %3024 = vmatprep.mubr.f32.mxu0 0.0
  %3025 = vmatmul.mubr.f32.gmra.mxu0 %v2958
  %v3026 = vpop.f32.mrf.mxu0
  %v3027 = vadd.f32 0.0, %v3026
  %v3028 = vpop.f32.mrf.mxu0
  %3029 = vdwg.mxu0
  %v3030 = vadd.f32 %v2946, %v3027
  %v3031 = vld [vmem:[#allocation3 + $0x28] sm:$0xff]
  %s3032 = scalar_lea.vmem %s7, 320
  %v3033 = vld [vmem:[%s3032] sm:$0xff]
  %v3034 = vld [vmem:[%s3032 + $0x8] sm:$0xff]
  %v3035 = vld [vmem:[%s3032 + $0x10] sm:$0xff]
  %v3036 = vld [vmem:[%s3032 + $0x18] sm:$0xff]
  %v3037 = vld [vmem:[%s3032 + $0x20] sm:$0xff]
  %v3038 = vld [vmem:[%s3032 + $0x28] sm:$0xff]
  %v3039 = vld [vmem:[%s3032 + $0x30] sm:$0xff]
  %v3040 = vld [vmem:[%s3032 + $0x38] sm:$0xff]
  %v3042 = vsel %vm226, %v3031, 0
  %3044 = vmatprep.subr.mxu0 0.0
  %3045 = vmatpush1.msra.mxu0 0.0
  %3046 = vmatprep.subr.mxu0 0.0
  %3047 = vmatpush1.msra.mxu0 0.0
  %3048 = vmatprep.subr.mxu0 0.0
  %3049 = vmatpush1.msra.mxu0 0.0
  %3050 = vmatprep.subr.mxu0 0.0
  %3051 = vmatpush1.msra.mxu0 0.0
  %3052 = vmatprep.subr.mxu0 0.0
  %3053 = vmatpush1.msra.mxu0 0.0
  %3054 = vmatprep.subr.mxu0 0.0
  %3055 = vmatpush1.msra.mxu0 0.0
  %3056 = vmatprep.subr.mxu0 0.0
  %3057 = vmatpush1.msra.mxu0 0.0
  %3058 = vmatprep.subr.mxu0 0.0
  %3059 = vmatpush1.msra.mxu0 0.0
  %3060 = vmatprep.subr.mxu0 0.0
  %3061 = vmatpush1.msra.mxu0 %v3040
  %3062 = vmatprep.subr.mxu0 0.0
  %3063 = vmatpush1.msra.mxu0 %v3039
  %3064 = vmatprep.subr.mxu0 0.0
  %3065 = vmatpush1.msra.mxu0 %v3038
  %3066 = vmatprep.subr.mxu0 0.0
  %3067 = vmatpush1.msra.mxu0 %v3037
  %3068 = vmatprep.subr.mxu0 0.0
  %3069 = vmatpush1.msra.mxu0 %v3036
  %3070 = vmatprep.subr.mxu0 0.0
  %3071 = vmatpush1.msra.mxu0 %v3035
  %3072 = vmatprep.subr.mxu0 0.0
  %3073 = vmatpush1.msra.mxu0 %v3034
  %3074 = vmatprep.subr.mxu0 0.0
  %3075 = vmatpush1.msra.mxu0 %v3033
  %3076 = vmatprep.subr.mxu0 0.0
  %3077 = vmatpush2.msra.mxu0 0.0
  %3078 = vmatprep.subr.mxu0 0.0
  %3079 = vmatpush2.msra.mxu0 0.0
  %3080 = vmatprep.subr.mxu0 0.0
  %3081 = vmatpush2.msra.mxu0 0.0
  %3082 = vmatprep.subr.mxu0 0.0
  %3083 = vmatpush2.msra.mxu0 0.0
  %3084 = vmatprep.subr.mxu0 0.0
  %3085 = vmatpush2.msra.mxu0 0.0
  %3086 = vmatprep.subr.mxu0 0.0
  %3087 = vmatpush2.msra.mxu0 0.0
  %3088 = vmatprep.subr.mxu0 0.0
  %3089 = vmatpush2.msra.mxu0 0.0
  %3090 = vmatprep.subr.mxu0 0.0
  %3091 = vmatpush2.msra.mxu0 0.0
  %3092 = vmatprep.subr.mxu0 0.0
  %3093 = vmatpush2.msra.mxu0 0.0
  %3094 = vmatprep.subr.mxu0 0.0
  %3095 = vmatpush2.msra.mxu0 0.0
  %3096 = vmatprep.subr.mxu0 0.0
  %3097 = vmatpush2.msra.mxu0 0.0
  %3098 = vmatprep.subr.mxu0 0.0
  %3099 = vmatpush2.msra.mxu0 0.0
  %3100 = vmatprep.subr.mxu0 0.0
  %3101 = vmatpush2.msra.mxu0 0.0
  %3102 = vmatprep.subr.mxu0 0.0
  %3103 = vmatpush2.msra.mxu0 0.0
  %3104 = vmatprep.subr.mxu0 0.0
  %3105 = vmatpush2.msra.mxu0 0.0
  %3106 = vmatprep.subr.mxu0 0.0
  %3107 = vmatpush2.msra.mxu0 0.0
  %3108 = vmatprep.mubr.f32.mxu0 0.0
  %3109 = vmatmul.mubr.f32.gmra.mxu0 %v3042
  %v3110 = vpop.f32.mrf.mxu0
  %v3111 = vadd.f32 0.0, %v3110
  %v3112 = vpop.f32.mrf.mxu0
  %3113 = vdwg.mxu0
  %v3114 = vadd.f32 %v3030, %v3111
  %v3115 = vld [vmem:[#allocation3 + $0x30] sm:$0xff]
  %s3116 = scalar_lea.vmem %s7, 384
  %v3117 = vld [vmem:[%s3116] sm:$0xff]
  %v3118 = vld [vmem:[%s3116 + $0x8] sm:$0xff]
  %v3119 = vld [vmem:[%s3116 + $0x10] sm:$0xff]
  %v3120 = vld [vmem:[%s3116 + $0x18] sm:$0xff]
  %v3121 = vld [vmem:[%s3116 + $0x20] sm:$0xff]
  %v3122 = vld [vmem:[%s3116 + $0x28] sm:$0xff]
  %v3123 = vld [vmem:[%s3116 + $0x30] sm:$0xff]
  %v3124 = vld [vmem:[%s3116 + $0x38] sm:$0xff]
  %v3126 = vsel %vm226, %v3115, 0
  %3128 = vmatprep.subr.mxu0 0.0
  %3129 = vmatpush1.msra.mxu0 0.0
  %3130 = vmatprep.subr.mxu0 0.0
  %3131 = vmatpush1.msra.mxu0 0.0
  %3132 = vmatprep.subr.mxu0 0.0
  %3133 = vmatpush1.msra.mxu0 0.0
  %3134 = vmatprep.subr.mxu0 0.0
  %3135 = vmatpush1.msra.mxu0 0.0
  %3136 = vmatprep.subr.mxu0 0.0
  %3137 = vmatpush1.msra.mxu0 0.0
  %3138 = vmatprep.subr.mxu0 0.0
  %3139 = vmatpush1.msra.mxu0 0.0
  %3140 = vmatprep.subr.mxu0 0.0
  %3141 = vmatpush1.msra.mxu0 0.0
  %3142 = vmatprep.subr.mxu0 0.0
  %3143 = vmatpush1.msra.mxu0 0.0
  %3144 = vmatprep.subr.mxu0 0.0
  %3145 = vmatpush1.msra.mxu0 %v3124
  %3146 = vmatprep.subr.mxu0 0.0
  %3147 = vmatpush1.msra.mxu0 %v3123
  %3148 = vmatprep.subr.mxu0 0.0
  %3149 = vmatpush1.msra.mxu0 %v3122
  %3150 = vmatprep.subr.mxu0 0.0
  %3151 = vmatpush1.msra.mxu0 %v3121
  %3152 = vmatprep.subr.mxu0 0.0
  %3153 = vmatpush1.msra.mxu0 %v3120
  %3154 = vmatprep.subr.mxu0 0.0
  %3155 = vmatpush1.msra.mxu0 %v3119
  %3156 = vmatprep.subr.mxu0 0.0
  %3157 = vmatpush1.msra.mxu0 %v3118
  %3158 = vmatprep.subr.mxu0 0.0
  %3159 = vmatpush1.msra.mxu0 %v3117
  %3160 = vmatprep.subr.mxu0 0.0
  %3161 = vmatpush2.msra.mxu0 0.0
  %3162 = vmatprep.subr.mxu0 0.0
  %3163 = vmatpush2.msra.mxu0 0.0
  %3164 = vmatprep.subr.mxu0 0.0
  %3165 = vmatpush2.msra.mxu0 0.0
  %3166 = vmatprep.subr.mxu0 0.0
  %3167 = vmatpush2.msra.mxu0 0.0
  %3168 = vmatprep.subr.mxu0 0.0
  %3169 = vmatpush2.msra.mxu0 0.0
  %3170 = vmatprep.subr.mxu0 0.0
  %3171 = vmatpush2.msra.mxu0 0.0
  %3172 = vmatprep.subr.mxu0 0.0
  %3173 = vmatpush2.msra.mxu0 0.0
  %3174 = vmatprep.subr.mxu0 0.0
  %3175 = vmatpush2.msra.mxu0 0.0
  %3176 = vmatprep.subr.mxu0 0.0
  %3177 = vmatpush2.msra.mxu0 0.0
  %3178 = vmatprep.subr.mxu0 0.0
  %3179 = vmatpush2.msra.mxu0 0.0
  %3180 = vmatprep.subr.mxu0 0.0
  %3181 = vmatpush2.msra.mxu0 0.0
  %3182 = vmatprep.subr.mxu0 0.0
  %3183 = vmatpush2.msra.mxu0 0.0
  %3184 = vmatprep.subr.mxu0 0.0
  %3185 = vmatpush2.msra.mxu0 0.0
  %3186 = vmatprep.subr.mxu0 0.0
  %3187 = vmatpush2.msra.mxu0 0.0
  %3188 = vmatprep.subr.mxu0 0.0
  %3189 = vmatpush2.msra.mxu0 0.0
  %3190 = vmatprep.subr.mxu0 0.0
  %3191 = vmatpush2.msra.mxu0 0.0
  %3192 = vmatprep.mubr.f32.mxu0 0.0
  %3193 = vmatmul.mubr.f32.gmra.mxu0 %v3126
  %v3194 = vpop.f32.mrf.mxu0
  %v3195 = vadd.f32 0.0, %v3194
  %v3196 = vpop.f32.mrf.mxu0
  %3197 = vdwg.mxu0
  %v3198 = vadd.f32 %v3114, %v3195
  %v3199 = vld [vmem:[#allocation3 + $0x38] sm:$0xff]
  %s3200 = scalar_lea.vmem %s7, 448
  %v3201 = vld [vmem:[%s3200] sm:$0xff]
  %v3202 = vld [vmem:[%s3200 + $0x8] sm:$0xff]
  %v3203 = vld [vmem:[%s3200 + $0x10] sm:$0xff]
  %v3204 = vld [vmem:[%s3200 + $0x18] sm:$0xff]
  %v3205 = vld [vmem:[%s3200 + $0x20] sm:$0xff]
  %v3206 = vld [vmem:[%s3200 + $0x28] sm:$0xff]
  %v3207 = vld [vmem:[%s3200 + $0x30] sm:$0xff]
  %v3208 = vld [vmem:[%s3200 + $0x38] sm:$0xff]
  %v3210 = vsel %vm226, %v3199, 0
  %3212 = vmatprep.subr.mxu0 0.0
  %3213 = vmatpush1.msra.mxu0 0.0
  %3214 = vmatprep.subr.mxu0 0.0
  %3215 = vmatpush1.msra.mxu0 0.0
  %3216 = vmatprep.subr.mxu0 0.0
  %3217 = vmatpush1.msra.mxu0 0.0
  %3218 = vmatprep.subr.mxu0 0.0
  %3219 = vmatpush1.msra.mxu0 0.0
  %3220 = vmatprep.subr.mxu0 0.0
  %3221 = vmatpush1.msra.mxu0 0.0
  %3222 = vmatprep.subr.mxu0 0.0
  %3223 = vmatpush1.msra.mxu0 0.0
  %3224 = vmatprep.subr.mxu0 0.0
  %3225 = vmatpush1.msra.mxu0 0.0
  %3226 = vmatprep.subr.mxu0 0.0
  %3227 = vmatpush1.msra.mxu0 0.0
  %3228 = vmatprep.subr.mxu0 0.0
  %3229 = vmatpush1.msra.mxu0 %v3208
  %3230 = vmatprep.subr.mxu0 0.0
  %3231 = vmatpush1.msra.mxu0 %v3207
  %3232 = vmatprep.subr.mxu0 0.0
  %3233 = vmatpush1.msra.mxu0 %v3206
  %3234 = vmatprep.subr.mxu0 0.0
  %3235 = vmatpush1.msra.mxu0 %v3205
  %3236 = vmatprep.subr.mxu0 0.0
  %3237 = vmatpush1.msra.mxu0 %v3204
  %3238 = vmatprep.subr.mxu0 0.0
  %3239 = vmatpush1.msra.mxu0 %v3203
  %3240 = vmatprep.subr.mxu0 0.0
  %3241 = vmatpush1.msra.mxu0 %v3202
  %3242 = vmatprep.subr.mxu0 0.0
  %3243 = vmatpush1.msra.mxu0 %v3201
  %3244 = vmatprep.subr.mxu0 0.0
  %3245 = vmatpush2.msra.mxu0 0.0
  %3246 = vmatprep.subr.mxu0 0.0
  %3247 = vmatpush2.msra.mxu0 0.0
  %3248 = vmatprep.subr.mxu0 0.0
  %3249 = vmatpush2.msra.mxu0 0.0
  %3250 = vmatprep.subr.mxu0 0.0
  %3251 = vmatpush2.msra.mxu0 0.0
  %3252 = vmatprep.subr.mxu0 0.0
  %3253 = vmatpush2.msra.mxu0 0.0
  %3254 = vmatprep.subr.mxu0 0.0
  %3255 = vmatpush2.msra.mxu0 0.0
  %3256 = vmatprep.subr.mxu0 0.0
  %3257 = vmatpush2.msra.mxu0 0.0
  %3258 = vmatprep.subr.mxu0 0.0
  %3259 = vmatpush2.msra.mxu0 0.0
  %3260 = vmatprep.subr.mxu0 0.0
  %3261 = vmatpush2.msra.mxu0 0.0
  %3262 = vmatprep.subr.mxu0 0.0
  %3263 = vmatpush2.msra.mxu0 0.0
  %3264 = vmatprep.subr.mxu0 0.0
  %3265 = vmatpush2.msra.mxu0 0.0
  %3266 = vmatprep.subr.mxu0 0.0
  %3267 = vmatpush2.msra.mxu0 0.0
  %3268 = vmatprep.subr.mxu0 0.0
  %3269 = vmatpush2.msra.mxu0 0.0
  %3270 = vmatprep.subr.mxu0 0.0
  %3271 = vmatpush2.msra.mxu0 0.0
  %3272 = vmatprep.subr.mxu0 0.0
  %3273 = vmatpush2.msra.mxu0 0.0
  %3274 = vmatprep.subr.mxu0 0.0
  %3275 = vmatpush2.msra.mxu0 0.0
  %3276 = vmatprep.mubr.f32.mxu0 0.0
  %3277 = vmatmul.mubr.f32.gmra.mxu0 %v3210
  %v3278 = vpop.f32.mrf.mxu0
  %v3279 = vadd.f32 0.0, %v3278
  %v3280 = vpop.f32.mrf.mxu0
  %3281 = vdwg.mxu0
  %v3282 = vadd.f32 %v3198, %v3279
  %v3283 = vmax.f32 %v3282, 0.0
  %v3284 = vld [vmem:[%s9] sm:$0xff]
  %v3285 = vld [vmem:[%s9 + $0x8] sm:$0xff]
  %v3286 = vld [vmem:[%s9 + $0x10] sm:$0xff]
  %v3287 = vld [vmem:[%s9 + $0x18] sm:$0xff]
  %v3288 = vld [vmem:[%s10] sm:$0x1]
  %v3290 = vlaneseq
  %v3291 = vshrl.u32 %v3290, 7
  %v3292 = vsub.s32 0, %v3291
  %v3293 = vrot.slane %v3288, %v3292
  %v3296 = vsel %vm357, %v3283, 0
  %3298 = vmatprep.subr.mxu0 0.0
  %3299 = vmatpush1.msra.mxu0 0.0
  %3300 = vmatprep.subr.mxu0 0.0
  %3301 = vmatpush1.msra.mxu0 0.0
  %3302 = vmatprep.subr.mxu0 0.0
  %3303 = vmatpush1.msra.mxu0 0.0
  %3304 = vmatprep.subr.mxu0 0.0
  %3305 = vmatpush1.msra.mxu0 0.0
  %3306 = vmatprep.subr.mxu0 0.0
  %3307 = vmatpush1.msra.mxu0 0.0
  %3308 = vmatprep.subr.mxu0 0.0
  %3309 = vmatpush1.msra.mxu0 0.0
  %3310 = vmatprep.subr.mxu0 0.0
  %3311 = vmatpush1.msra.mxu0 0.0
  %3312 = vmatprep.subr.mxu0 0.0
  %3313 = vmatpush1.msra.mxu0 0.0
  %3314 = vmatprep.subr.mxu0 0.0
  %3315 = vmatpush1.msra.mxu0 0.0
  %3316 = vmatprep.subr.mxu0 0.0
  %3317 = vmatpush1.msra.mxu0 0.0
  %3318 = vmatprep.subr.mxu0 0.0
  %3319 = vmatpush1.msra.mxu0 0.0
  %3320 = vmatprep.subr.mxu0 0.0
  %3321 = vmatpush1.msra.mxu0 0.0
  %3322 = vmatprep.subr.mxu0 0.0
  %3323 = vmatpush1.msra.mxu0 %v3287
  %3324 = vmatprep.subr.mxu0 0.0
  %3325 = vmatpush1.msra.mxu0 %v3286
  %3326 = vmatprep.subr.mxu0 0.0
  %3327 = vmatpush1.msra.mxu0 %v3285
  %3328 = vmatprep.subr.mxu0 0.0
  %3329 = vmatpush1.msra.mxu0 %v3284
  %3330 = vmatprep.subr.mxu0 0.0
  %3331 = vmatpush2.msra.mxu0 0.0
  %3332 = vmatprep.subr.mxu0 0.0
  %3333 = vmatpush2.msra.mxu0 0.0
  %3334 = vmatprep.subr.mxu0 0.0
  %3335 = vmatpush2.msra.mxu0 0.0
  %3336 = vmatprep.subr.mxu0 0.0
  %3337 = vmatpush2.msra.mxu0 0.0
  %3338 = vmatprep.subr.mxu0 0.0
  %3339 = vmatpush2.msra.mxu0 0.0
  %3340 = vmatprep.subr.mxu0 0.0
  %3341 = vmatpush2.msra.mxu0 0.0
  %3342 = vmatprep.subr.mxu0 0.0
  %3343 = vmatpush2.msra.mxu0 0.0
  %3344 = vmatprep.subr.mxu0 0.0
  %3345 = vmatpush2.msra.mxu0 0.0
  %3346 = vmatprep.subr.mxu0 0.0
  %3347 = vmatpush2.msra.mxu0 0.0
  %3348 = vmatprep.subr.mxu0 0.0
  %3349 = vmatpush2.msra.mxu0 0.0
  %3350 = vmatprep.subr.mxu0 0.0
  %3351 = vmatpush2.msra.mxu0 0.0
  %3352 = vmatprep.subr.mxu0 0.0
  %3353 = vmatpush2.msra.mxu0 0.0
  %3354 = vmatprep.subr.mxu0 0.0
  %3355 = vmatpush2.msra.mxu0 0.0
  %3356 = vmatprep.subr.mxu0 0.0
  %3357 = vmatpush2.msra.mxu0 0.0
  %3358 = vmatprep.subr.mxu0 0.0
  %3359 = vmatpush2.msra.mxu0 0.0
  %3360 = vmatprep.subr.mxu0 0.0
  %3361 = vmatpush2.msra.mxu0 0.0
  %3362 = vmatprep.mubr.f32.mxu0 0.0
  %3363 = vmatmul.mubr.f32.gmra.mxu0 %v3296
  %v3364 = vpop.f32.mrf.mxu0
  %v3365 = vadd.f32 %v3293, %v3364
  %v3366 = vpop.f32.mrf.mxu0
  %3367 = vdwg.mxu0
  %v3368 = vmax.f32 %v3365, 0.0
  %v3369 = vld [vmem:[%s11] sm:$0xff]
  %v3370 = vld [vmem:[%s11 + $0x8] sm:$0xff]
  %v3371 = vld [vmem:[%s12] sm:$0x1]
  %v3373 = vlaneseq
  %v3374 = vshrl.u32 %v3373, 7
  %v3375 = vsub.s32 0, %v3374
  %v3376 = vrot.slane %v3371, %v3375
  %vm3378 = vcmask 130048
  %v3380 = vsel %vm3378, %v3368, 0
  %3382 = vmatprep.subr.mxu0 0.0
  %3383 = vmatpush1.msra.mxu0 0.0
  %3384 = vmatprep.subr.mxu0 0.0
  %3385 = vmatpush1.msra.mxu0 0.0
  %3386 = vmatprep.subr.mxu0 0.0
  %3387 = vmatpush1.msra.mxu0 0.0
  %3388 = vmatprep.subr.mxu0 0.0
  %3389 = vmatpush1.msra.mxu0 0.0
  %3390 = vmatprep.subr.mxu0 0.0
  %3391 = vmatpush1.msra.mxu0 0.0
  %3392 = vmatprep.subr.mxu0 0.0
  %3393 = vmatpush1.msra.mxu0 0.0
  %3394 = vmatprep.subr.mxu0 0.0
  %3395 = vmatpush1.msra.mxu0 0.0
  %3396 = vmatprep.subr.mxu0 0.0
  %3397 = vmatpush1.msra.mxu0 0.0
  %3398 = vmatprep.subr.mxu0 0.0
  %3399 = vmatpush1.msra.mxu0 0.0
  %3400 = vmatprep.subr.mxu0 0.0
  %3401 = vmatpush1.msra.mxu0 0.0
  %3402 = vmatprep.subr.mxu0 0.0
  %3403 = vmatpush1.msra.mxu0 0.0
  %3404 = vmatprep.subr.mxu0 0.0
  %3405 = vmatpush1.msra.mxu0 0.0
  %3406 = vmatprep.subr.mxu0 0.0
  %3407 = vmatpush1.msra.mxu0 0.0
  %3408 = vmatprep.subr.mxu0 0.0
  %3409 = vmatpush1.msra.mxu0 0.0
  %3410 = vmatprep.subr.mxu0 0.0
  %3411 = vmatpush1.msra.mxu0 %v3370
  %3412 = vmatprep.subr.mxu0 0.0
  %3413 = vmatpush1.msra.mxu0 %v3369
  %3414 = vmatprep.subr.mxu0 0.0
  %3415 = vmatpush2.msra.mxu0 0.0
  %3416 = vmatprep.subr.mxu0 0.0
  %3417 = vmatpush2.msra.mxu0 0.0
  %3418 = vmatprep.subr.mxu0 0.0
  %3419 = vmatpush2.msra.mxu0 0.0
  %3420 = vmatprep.subr.mxu0 0.0
  %3421 = vmatpush2.msra.mxu0 0.0
  %3422 = vmatprep.subr.mxu0 0.0
  %3423 = vmatpush2.msra.mxu0 0.0
  %3424 = vmatprep.subr.mxu0 0.0
  %3425 = vmatpush2.msra.mxu0 0.0
  %3426 = vmatprep.subr.mxu0 0.0
  %3427 = vmatpush2.msra.mxu0 0.0
  %3428 = vmatprep.subr.mxu0 0.0
  %3429 = vmatpush2.msra.mxu0 0.0
  %3430 = vmatprep.subr.mxu0 0.0
  %3431 = vmatpush2.msra.mxu0 0.0
  %3432 = vmatprep.subr.mxu0 0.0
  %3433 = vmatpush2.msra.mxu0 0.0
  %3434 = vmatprep.subr.mxu0 0.0
  %3435 = vmatpush2.msra.mxu0 0.0
  %3436 = vmatprep.subr.mxu0 0.0
  %3437 = vmatpush2.msra.mxu0 0.0
  %3438 = vmatprep.subr.mxu0 0.0
  %3439 = vmatpush2.msra.mxu0 0.0
  %3440 = vmatprep.subr.mxu0 0.0
  %3441 = vmatpush2.msra.mxu0 0.0
  %3442 = vmatprep.subr.mxu0 0.0
  %3443 = vmatpush2.msra.mxu0 0.0
  %3444 = vmatprep.subr.mxu0 0.0
  %3445 = vmatpush2.msra.mxu0 0.0
  %3446 = vmatprep.mubr.f32.mxu0 0.0
  %3447 = vmatmul.mubr.f32.gmra.mxu0 %v3380
  %v3448 = vpop.f32.mrf.mxu0
  %v3449 = vadd.f32 %v3376, %v3448
  %v3450 = vpop.f32.mrf.mxu0
  %3451 = vdwg.mxu0
  %vm3452 = vcmask 15360
  %3453 = vst.msk [vmem:[%s13] sm:$0xff] %vm3452, %v3449
  // Predicated region
  $region54: #{introspective_lstm_forward.1} parent=0 // pred_check
    _
  $region55: #{introspective_lstm_forward.1} parent=0 // pred_check_branch
    %3455 = sbr.rel (0) target = $region57
  $region56: #{introspective_lstm_forward.1} parent=0 // pred_region
    _
  $region57: #{introspective_lstm_forward.1} parent=0 // pred_fallthru
    _
  // Predicated region
  $region58: #{introspective_lstm_forward.1} parent=0 // pred_check
    _
  $region59: #{introspective_lstm_forward.1} parent=0 // pred_check_branch
    %3457 = sbr.rel (0) target = $region61
  $region60: #{introspective_lstm_forward.1} parent=0 // pred_region
    _
  $region61: #{introspective_lstm_forward.1} parent=0 // pred_fallthru
    _

</llo_original>
